<compile_context>
chip_gen: v7x
topology: tpu7x:2x2x1
jax: 0.10.0
libtpu: 0.0.40
codegen_flags: <defaults>
</compile_context>

<pallas_src>
import functools

import jax
import jax.numpy as jnp
from jax import lax
from jax.experimental import pallas as pl
from jax.experimental.pallas import tpu as pltpu

# ---------------- configuration (small synthetic shapes) --------------------
EMB_DIM = 32          # embedding dimension per table
VOCAB = 64            # num_embeddings per table
LANES = 128           # TPU lane width
PACK = LANES // EMB_DIM   # sequence positions packed per 128-lane output row
BLK = 512             # output rows per grid step  -> BLK*PACK = 2048 ids/step

EMB_KEYS = ("item_id", "action_type")       # keys that get embedding lookups
PAYLOAD_KEYS = ("timestamp",)               # dense payload features (passthrough)

assert LANES % EMB_DIM == 0, "EMB_DIM must divide 128 for the lane-dense packing"


# ---------------- Pallas embedding-gather kernel -----------------------------
def _emb_gather_kernel(ids_ref, table_ref, out_ref):
    """One-hot MXU gather of BLK*PACK embedding rows per grid step.

    ids_ref   : [BLK, PACK] int32 in VMEM. Invalid / padded ids are -1, which
                produce an all-zero one-hot row and hence a zero output row
                (the jagged mask is fused here).
    table_ref : [V_pad, D] stacked embedding table resident in VMEM (bf16).
    out_ref   : [BLK, PACK*D] lane-dense packed output tile (last dim == 128).
    """
    blk, pack = ids_ref.shape
    v_pad, _ = table_ref.shape
    ids = ids_ref[...]
    table = table_ref[...]
    col = lax.broadcasted_iota(jnp.int32, (blk, v_pad), 1)
    parts = []
    for p in range(pack):                     # static unroll (PACK == 4)
        onehot = (ids[:, p:p + 1] == col).astype(table.dtype)   # [BLK, V_pad]
        parts.append(jnp.dot(onehot, table,
                             preferred_element_type=jnp.float32))  # [BLK, D]
    out_ref[...] = jnp.concatenate(parts, axis=-1).astype(out_ref.dtype)


def embedding_lookup(ids_flat: jax.Array, table: jax.Array) -> jax.Array:
    """Embedding gather: ids_flat [N] int32 (-1 => zero row), table [V, D] -> [N, D]."""
    n = ids_flat.shape[0]
    v, d = table.shape
    step = BLK * PACK
    n_pad = -(-n // step) * step
    v_pad = -(-v // 128) * 128                      # MXU-friendly contraction dim
    ids_p = jnp.pad(ids_flat.astype(jnp.int32), (0, n_pad - n), constant_values=-1)
    ids2d = ids_p.reshape(n_pad // PACK, PACK)
    table_p = jnp.pad(table, ((0, v_pad - v), (0, 0)))

    out = pl.pallas_call(
        _emb_gather_kernel,
        out_shape=jax.ShapeDtypeStruct((n_pad // PACK, PACK * d), table.dtype),
        grid_spec=pl.GridSpec(
            grid=(n_pad // step,),
            in_specs=[pl.BlockSpec((BLK, PACK), lambda i: (i, 0)),
                      pl.BlockSpec((v_pad, d), lambda i: (0, 0))],   # whole table
            out_specs=pl.BlockSpec((BLK, PACK * d), lambda i: (i, 0)),
        ),
        compiler_params=pltpu.CompilerParams(
            dimension_semantics=("parallel",)),     # disjoint tiles -> v7x 2 TCs
    )(ids2d, table_p)
    return out.reshape(n_pad, d)[:n]


# ---------------- jagged concat (uih ++ candidates), padded dense -----------
def concat_jagged(uih: jax.Array, cand: jax.Array,
                  uih_len: jax.Array, cand_len: jax.Array):
    """Concatenate padded jagged sequences per sample.

    uih  : [B, MU], cand : [B, MC] (same dtype)
    Returns combined [B, MU+MC] and validity mask [B, MU+MC] (bool).
    """
    b, mu = uih.shape
    mc = cand.shape[1]
    total = mu + mc
    pos = jnp.broadcast_to(jnp.arange(total)[None, :], (b, total))
    ul = uih_len[:, None]
    cl = cand_len[:, None]
    in_uih = pos < ul
    in_cand = (pos >= ul) & (pos < ul + cl)
    uih_idx = jnp.clip(pos, 0, mu - 1)
    cand_idx = jnp.clip(pos - ul, 0, mc - 1)
    uih_g = jnp.take_along_axis(uih, uih_idx, axis=1)
    cand_g = jnp.take_along_axis(cand, cand_idx, axis=1)
    zero = jnp.zeros((), dtype=uih.dtype)
    combined = jnp.where(in_uih, uih_g, jnp.where(in_cand, cand_g, zero))
    return combined, in_uih | in_cand


# ---------------- fused preprocess (jit'ed) ----------------------------------
def hstu_preprocess(big_table, uih_ids, cand_ids, uih_payload, cand_payload,
                    uih_len, cand_len, *, key_offsets):
    """Jagged-concat + fused-mask embedding gather for all keys in one call."""
    b = uih_len.shape[0]
    mu = next(iter(uih_ids.values())).shape[1]
    mc = next(iter(cand_ids.values())).shape[1]
    total = mu + mc
    d = big_table.shape[1]

    all_ids = []
    for ki, k in enumerate(EMB_KEYS):
        combined, mask = concat_jagged(uih_ids[k], cand_ids[k], uih_len, cand_len)
        # per-key row offset into the stacked table; invalid positions -> -1
        ids_off = jnp.where(mask, combined.astype(jnp.int32) + key_offsets[ki], -1)
        all_ids.append(ids_off.reshape(-1))
    flat_ids = jnp.concatenate(all_ids, axis=0)          # [n_keys * B * total]

    emb_all = embedding_lookup(flat_ids, big_table)      # one pallas_call
    emb_all = emb_all.reshape(len(EMB_KEYS), b, total, d)
    seq_embeddings = {k: emb_all[ki] for ki, k in enumerate(EMB_KEYS)}

    payload_features = {}
    for k in PAYLOAD_KEYS:
        combined_p, mask = concat_jagged(uih_payload[k], cand_payload[k],
                                         uih_len, cand_len)
        payload_features[k] = jnp.where(mask, combined_p,
                                        jnp.zeros((), combined_p.dtype))
    return seq_embeddings, payload_features


# ---------------- module-equivalent wrapper ----------------------------------
class HSTUSparseInferenceModuleJAX:
    """JAX/Pallas equivalent of HSTUSparseInferenceModule.forward()."""

    def __init__(self, key=jax.random.PRNGKey(0)):
        # deterministic synthetic embedding tables (one per embedding key),
        # stored in bf16 and stacked into one table with per-key row offsets.
        self.tables = {}
        parts, offsets, rows = [], [], 0
        for i, k in enumerate(EMB_KEYS):
            sub = jax.random.fold_in(key, i)
            t = (jax.random.normal(sub, (VOCAB, EMB_DIM), jnp.float32)
                 * 0.02).astype(jnp.bfloat16)
            self.tables[k] = t
            parts.append(t)
            offsets.append(rows)
            rows += VOCAB
        self.big_table = jnp.concatenate(parts, axis=0)   # [n_keys*V, D]
        # TODO(synk): for production-scale vocabs the table cannot be
        # VMEM-resident; switch to a manual make_async_copy row-DMA gather with
        # the table left in HBM (memory_space=pl.ANY).
        self._forward = jax.jit(
            functools.partial(hstu_preprocess, key_offsets=tuple(offsets)))

    def __call__(self, uih_features, candidates_features):
        """
        uih_features / candidates_features:
          dict with:
            'ids'     : {key: [B, max_len] int32}  (padded jagged id values)
            'payload' : {key: [B, max_len] float32}
            'lengths' : [B] int32                  (per-sample valid lengths)
        """
        uih_len = uih_features["lengths"]
        num_candidates = candidates_features["lengths"]
        # Static padded lengths: no device->host sync, jit-safe.
        max_uih_len = next(iter(uih_features["ids"].values())).shape[1]
        max_num_candidates = next(iter(candidates_features["ids"].values())).shape[1]

        seq_embeddings, payload_features = self._forward(
            self.big_table,
            uih_features["ids"], candidates_features["ids"],
            uih_features["payload"], candidates_features["payload"],
            uih_len, num_candidates)

        # TODO(synk): DlrmHSTU.preprocess also applies feature-specific
        # contextualization / dedup inside the EmbeddingCollection; only the
        # jagged-concat + embedding-gather hot path is reproduced here.
        return (seq_embeddings, payload_features, max_uih_len, uih_len,
                max_num_candidates, num_candidates)


# ---------------- demo -------------------------------------------------------
if __name__ == "__main__":
    key = jax.random.PRNGKey(0)
    B, MAX_UIH, MAX_CAND = 2, 8, 4

    k_ids, k_pay, k_cids, k_cpay = jax.random.split(jax.random.fold_in(key, 100), 4)

    uih_features = {
        "ids": {
            k: jax.random.randint(jax.random.fold_in(k_ids, i),
                                  (B, MAX_UIH), 0, VOCAB, jnp.int32)
            for i, k in enumerate(EMB_KEYS)
        },
        "payload": {
            k: jax.random.uniform(jax.random.fold_in(k_pay, i),
                                  (B, MAX_UIH), jnp.float32)
            for i, k in enumerate(PAYLOAD_KEYS)
        },
        "lengths": jnp.array([8, 5], dtype=jnp.int32),
    }
    candidates_features = {
        "ids": {
            k: jax.random.randint(jax.random.fold_in(k_cids, i),
                                  (B, MAX_CAND), 0, VOCAB, jnp.int32)
            for i, k in enumerate(EMB_KEYS)
        },
        "payload": {
            k: jax.random.uniform(jax.random.fold_in(k_cpay, i),
                                  (B, MAX_CAND), jnp.float32)
            for i, k in enumerate(PAYLOAD_KEYS)
        },
        "lengths": jnp.array([4, 3], dtype=jnp.int32),
    }

    module = HSTUSparseInferenceModuleJAX()
    (seq_embeddings, payload_features, max_uih_len, uih_seq_lengths,
     max_num_candidates, num_candidates) = module(uih_features,
                                                  candidates_features)

    # block on all device results
    jax.block_until_ready(seq_embeddings)
    jax.block_until_ready(payload_features)
    jax.block_until_ready(uih_seq_lengths)
    jax.block_until_ready(num_candidates)

    # sanity: compare Pallas gather against pure-JAX reference for every key
    total = MAX_UIH + MAX_CAND
    for k in EMB_KEYS:
        combined_ids, mask = concat_jagged(uih_features["ids"][k],
                                           candidates_features["ids"][k],
                                           uih_seq_lengths, num_candidates)
        ref = jnp.take(module.tables[k], combined_ids.reshape(-1), axis=0)
        ref = ref.reshape(B, total, EMB_DIM).astype(jnp.float32)
        ref = ref * mask[..., None].astype(jnp.float32)
        got = seq_embeddings[k].astype(jnp.float32)
        assert got.shape == (B, total, EMB_DIM)
        assert jnp.allclose(got, ref, atol=1e-6), f"gather mismatch for {k}"

    for k in PAYLOAD_KEYS:
        combined_p, mask = concat_jagged(uih_features["payload"][k],
                                         candidates_features["payload"][k],
                                         uih_seq_lengths, num_candidates)
        ref_p = combined_p * mask.astype(combined_p.dtype)
        assert jnp.allclose(payload_features[k], ref_p, atol=1e-6), \
            f"payload mismatch for {k}"

    assert max_uih_len == MAX_UIH and max_num_candidates == MAX_CAND
    print("KERNEL_OK")
</pallas_src>

<mosaic_0001>
module attributes {stable_mosaic.version = 11 : i64} {
  func.func @_emb_gather_kernel(%arg0: i32, %arg1: memref<512x4xi32, #tpu.memory_space<vmem>>, %arg2: memref<128x32xbf16, #tpu.memory_space<vmem>>, %arg3: memref<512x128xbf16, #tpu.memory_space<vmem>>) attributes {dimension_semantics = [#tpu.dimension_semantics<parallel>], iteration_bounds = array<i64: 1>, scalar_prefetch = 0 : i64, scratch_operands = 0 : i64, tpu.core_type = #tpu.core_type<tc>, window_params = [{transform_indices = @transform_0, window_bounds = array<i64: 512, 4>}, {pipeline_mode = #tpu.pipeline_mode<synchronous>, transform_indices = @transform_1, window_bounds = array<i64: 128, 32>}, {transform_indices = @transform_2, window_bounds = array<i64: 512, 128>}]} {
    %c0 = arith.constant 0 : index
    %c0_0 = arith.constant 0 : index
    %0 = vector.load %arg1[%c0, %c0_0] : memref<512x4xi32, #tpu.memory_space<vmem>>, vector<512x4xi32>
    %c0_1 = arith.constant 0 : index
    %c0_2 = arith.constant 0 : index
    %1 = vector.load %arg2[%c0_1, %c0_2] : memref<128x32xbf16, #tpu.memory_space<vmem>>, vector<128x32xbf16>
    %2 = tpu.iota {dimensions = array<i32: 1>} : vector<512x128xi32>
    %3 = vector.extract_strided_slice %0 {offsets = [0, 0], sizes = [512, 1], strides = [1, 1]} : vector<512x4xi32> to vector<512x1xi32>
    %4 = vector.broadcast %3 : vector<512x1xi32> to vector<512x128xi32>
    %5 = arith.cmpi eq, %4, %2 : vector<512x128xi32>
    %6 = arith.extui %5 : vector<512x128xi1> to vector<512x128xi32>
    %7 = arith.sitofp %6 : vector<512x128xi32> to vector<512x128xf32>
    %8 = arith.truncf %7 : vector<512x128xf32> to vector<512x128xbf16>
    %cst = arith.constant dense<0.000000e+00> : vector<512x32xf32>
    %9 = tpu.matmul %8, %1, %cst {dimension_numbers = #tpu.dot_dimension_numbers<[1], [0], [0], [1], [0, 0, 1, 1], [], []>} : vector<512x128xbf16>, vector<128x32xbf16>, vector<512x32xf32> -> vector<512x32xf32>
    %10 = vector.extract_strided_slice %0 {offsets = [0, 1], sizes = [512, 1], strides = [1, 1]} : vector<512x4xi32> to vector<512x1xi32>
    %11 = vector.broadcast %10 : vector<512x1xi32> to vector<512x128xi32>
    %12 = arith.cmpi eq, %11, %2 : vector<512x128xi32>
    %13 = arith.extui %12 : vector<512x128xi1> to vector<512x128xi32>
    %14 = arith.sitofp %13 : vector<512x128xi32> to vector<512x128xf32>
    %15 = arith.truncf %14 : vector<512x128xf32> to vector<512x128xbf16>
    %cst_3 = arith.constant dense<0.000000e+00> : vector<512x32xf32>
    %16 = tpu.matmul %15, %1, %cst_3 {dimension_numbers = #tpu.dot_dimension_numbers<[1], [0], [0], [1], [0, 0, 1, 1], [], []>} : vector<512x128xbf16>, vector<128x32xbf16>, vector<512x32xf32> -> vector<512x32xf32>
    %17 = vector.extract_strided_slice %0 {offsets = [0, 2], sizes = [512, 1], strides = [1, 1]} : vector<512x4xi32> to vector<512x1xi32>
    %18 = vector.broadcast %17 : vector<512x1xi32> to vector<512x128xi32>
    %19 = arith.cmpi eq, %18, %2 : vector<512x128xi32>
    %20 = arith.extui %19 : vector<512x128xi1> to vector<512x128xi32>
    %21 = arith.sitofp %20 : vector<512x128xi32> to vector<512x128xf32>
    %22 = arith.truncf %21 : vector<512x128xf32> to vector<512x128xbf16>
    %cst_4 = arith.constant dense<0.000000e+00> : vector<512x32xf32>
    %23 = tpu.matmul %22, %1, %cst_4 {dimension_numbers = #tpu.dot_dimension_numbers<[1], [0], [0], [1], [0, 0, 1, 1], [], []>} : vector<512x128xbf16>, vector<128x32xbf16>, vector<512x32xf32> -> vector<512x32xf32>
    %24 = vector.extract_strided_slice %0 {offsets = [0, 3], sizes = [512, 1], strides = [1, 1]} : vector<512x4xi32> to vector<512x1xi32>
    %25 = vector.broadcast %24 : vector<512x1xi32> to vector<512x128xi32>
    %26 = arith.cmpi eq, %25, %2 : vector<512x128xi32>
    %27 = arith.extui %26 : vector<512x128xi1> to vector<512x128xi32>
    %28 = arith.sitofp %27 : vector<512x128xi32> to vector<512x128xf32>
    %29 = arith.truncf %28 : vector<512x128xf32> to vector<512x128xbf16>
    %cst_5 = arith.constant dense<0.000000e+00> : vector<512x32xf32>
    %30 = tpu.matmul %29, %1, %cst_5 {dimension_numbers = #tpu.dot_dimension_numbers<[1], [0], [0], [1], [0, 0, 1, 1], [], []>} : vector<512x128xbf16>, vector<128x32xbf16>, vector<512x32xf32> -> vector<512x32xf32>
    %31 = tpu.concatenate %9, %16, %23, %30 in 1 : vector<512x32xf32>, vector<512x32xf32>, vector<512x32xf32>, vector<512x32xf32> -> vector<512x128xf32>
    %32 = arith.truncf %31 : vector<512x128xf32> to vector<512x128xbf16>
    %c0_6 = arith.constant 0 : index
    %c0_7 = arith.constant 0 : index
    %33 = vector.load %arg3[%c0_6, %c0_7] : memref<512x128xbf16, #tpu.memory_space<vmem>>, vector<512x128xbf16>
    tpu.vector_store %arg3[%c0_6, %c0_7], %32 {strides = array<i32>} : memref<512x128xbf16, #tpu.memory_space<vmem>>, vector<512x128xbf16>,
    return
  }
  func.func @transform_0(%arg0: i32) -> (i32, i32) {
    %c0_i32 = arith.constant 0 : i32
    %c0_i32_0 = arith.constant 0 : i32
    return %arg0, %c0_i32 : i32, i32
  }
  func.func @transform_1(%arg0: i32) -> (i32, i32) {
    %c0_i32 = arith.constant 0 : i32
    %c0_i32_0 = arith.constant 0 : i32
    %c0_i32_1 = arith.constant 0 : i32
    return %c0_i32, %c0_i32_0 : i32, i32
  }
  func.func @transform_2(%arg0: i32) -> (i32, i32) {
    %c0_i32 = arith.constant 0 : i32
    %c0_i32_0 = arith.constant 0 : i32
    return %arg0, %c0_i32 : i32, i32
  }
}

</mosaic_0001>

<llo_original>
// kernel: squeeze.2
$region0: #{squeeze.2}
  %s0 = inlined_call_operand.vmem [shape: bf16[6,128], index: 0, kind: input, shape index: {}]
  %s1 = inlined_call_operand.vmem [shape: bf16[2,12,32], index: 1, kind: output, shape index: {}]
  $region1: #{squeeze.2} parent=0
    #allocation0 [shape = 'u8[16384]{0}', space=vmem, size = 0x4000, scoped, tag = 'scoped mem for output reshape']
    #allocation1 [shape = 'u8[4096]{0}', space=vmem, size = 0x1000, scoped, tag = 'scoped mem for input reshape']
    %s3 = smul.u32 4, 2
    %s4 = sshllo.u32 0, %s3
    %s5 = sshrl.u32 %s4, 1
    %s6 = sor.u32 %s4, %s5
    %s7 = sand.u32 %s6, 85
    %s8 = sshrl.u32 %s7, 1
    %s9 = sor.u32 %s7, %s8
    %s10 = sand.u32 51, %s9
    %s11 = sshrl.u32 %s10, 2
    %s12 = sor.u32 %s10, %s11
    %s13 = sand.u32 15, %s12
    %v14 = vld [vmem:[%s0] sm:%s13]
    %v15 = vunpack.c.l.bf16 %v14
    %v16 = vunpack.c.h.bf16 %v14
    %17 = vst [vmem:[#allocation1] sm:%s4] %v15
    %v18 = vld [vmem:[#allocation1] sm:$0x3f]
    %vm19 = vcmask 261120
    %20 = vst.msk [vmem:[#allocation0] ss:$4 sm:$0x7] %vm19, %v18
    %s21 = scalar_lea.vmem [#allocation0], 4
    %22 = vst.msk [vmem:[%s21] ss:$4 sm:$0x38] %vm19, %v18
    %v23 = vld [vmem:[#allocation1] sm:$0x3f]
    %24 = vrot.lane.b32.xlu0 %v23, 96
    %v25 = vpop.permute.xlu0 %24
    %vm26 = vcmask 261120
    %s27 = scalar_lea.vmem [#allocation0], 1
    %28 = vst.msk [vmem:[%s27] ss:$4 sm:$0x7] %vm26, %v25
    %s29 = scalar_lea.vmem [#allocation0], 5
    %30 = vst.msk [vmem:[%s29] ss:$4 sm:$0x38] %vm26, %v25
    %v31 = vld [vmem:[#allocation1] sm:$0x3f]
    %32 = vrot.lane.b32.xlu0 %v31, 64
    %v33 = vpop.permute.xlu0 %32
    %vm34 = vcmask 261120
    %s35 = scalar_lea.vmem [#allocation0], 2
    %36 = vst.msk [vmem:[%s35] ss:$4 sm:$0x7] %vm34, %v33
    %s37 = scalar_lea.vmem [#allocation0], 6
    %38 = vst.msk [vmem:[%s37] ss:$4 sm:$0x38] %vm34, %v33
    %v39 = vld [vmem:[#allocation1] sm:$0x3f]
    %40 = vrot.lane.b32.xlu0 %v39, 32
    %v41 = vpop.permute.xlu0 %40
    %vm42 = vcmask 261120
    %s43 = scalar_lea.vmem [#allocation0], 3
    %44 = vst.msk [vmem:[%s43] ss:$4 sm:$0x7] %vm42, %v41
    %s45 = scalar_lea.vmem [#allocation0], 7
    %46 = vst.msk [vmem:[%s45] ss:$4 sm:$0x38] %vm42, %v41
    %s48 = smul.u32 4, 2
    %s49 = sshllo.u32 0, %s48
    %s50 = sshrl.u32 %s48, 1
    %v51 = vld [vmem:[#allocation0] sm:%s49]
    %v52 = vpack.c.bf16 0.0, %v51
    %s53 = sshllo.u32 0, %s50
    %54 = vst [vmem:[%s1] sm:%s53] %v52
    %s55 = scalar_lea.vmem [#allocation0], 8
    %v56 = vld [vmem:[%s55] sm:%s49]
    %v57 = vpack.c.bf16 0.0, %v56
    %s58 = sshllo.u32 0, %s50
    %s59 = scalar_lea.vmem %s1, 4
    %60 = vst [vmem:[%s59] sm:%s58] %v57
    %s61 = scalar_lea.vmem [#allocation0], 16
    %v62 = vld [vmem:[%s61] sm:%s49]
    %v63 = vpack.c.bf16 0.0, %v62
    %s64 = sshllo.u32 0, %s50
    %s65 = smul.addr 4, 2
    %s66 = scalar_lea.vmem %s1, %s65
    %67 = vst [vmem:[%s66] sm:%s64] %v63
    %s68 = scalar_lea.vmem [#allocation0], 24
    %v69 = vld [vmem:[%s68] sm:%s49]
    %v70 = vpack.c.bf16 0.0, %v69
    %s71 = sshllo.u32 0, %s50
    %s72 = smul.addr 4, 3
    %s73 = scalar_lea.vmem %s1, %s72
    %74 = vst [vmem:[%s73] sm:%s71] %v70

// kernel: hstu_preprocess.1
$region0: #{hstu_preprocess.1}
  #allocation0 [shape = 'u32[]', space=smem, size = 0x4, offset = 0x4, fixed_abs, tag = 'smem constant byte address 0x4 - core index']
  #allocation1 [shape = 'u32[144,128]{1,0:T(1,128)}', space=vmem, size = 0x12000, scoped, tag = 'internal scratch']
  %s0 = inlined_call_operand.vmem [shape: s32[512,4], index: 0, kind: input, shape index: {}]
  %s1 = inlined_call_operand.vmem [shape: bf16[128,32], index: 1, kind: input, shape index: {}]
  %s2 = inlined_call_operand.vmem [shape: bf16[512,128], index: 2, kind: output, shape index: {}]
  %s3 = sld [smem:[#allocation0]]
  $region18: #{hstu_preprocess.1} parent=0
    _
  %s5 = ssub.s32 1, %s3
  %s6 = scalar_select 0, %s5, %s3
  // Predicated region
  $region2: #{hstu_preprocess.1} parent=0 // pred_check
    _
  $region3: #{hstu_preprocess.1} parent=0 // pred_check_branch
    %8 = sbr.rel (0) target = $region5
  $region4: #{hstu_preprocess.1} parent=0 // pred_region
    _
  $region5: #{hstu_preprocess.1} parent=0 // pred_fallthru
    _
  // Predicated region
  $region6: #{hstu_preprocess.1} parent=0 // pred_check
    _
  $region7: #{hstu_preprocess.1} parent=0 // pred_check_branch
    %10 = sbr.rel (0) target = $region9
  $region8: #{hstu_preprocess.1} parent=0 // pred_region
    _
  $region9: #{hstu_preprocess.1} parent=0 // pred_fallthru
    _
  %v12 = vld [vmem:[%s0] sm:$0xff]
  %v13 = vld [vmem:[%s0 + $0x8] sm:$0xff]
  %v14 = vld [vmem:[%s0 + $0x10] sm:$0xff]
  %v15 = vld [vmem:[%s0 + $0x18] sm:$0xff]
  %v16 = vld [vmem:[%s0 + $0x20] sm:$0xff]
  %v17 = vld [vmem:[%s0 + $0x28] sm:$0xff]
  %v18 = vld [vmem:[%s0 + $0x30] sm:$0xff]
  %v19 = vld [vmem:[%s0 + $0x38] sm:$0xff]
  %v20 = vld [vmem:[%s0 + $0x40] sm:$0xff]
  %v21 = vld [vmem:[%s0 + $0x48] sm:$0xff]
  %v22 = vld [vmem:[%s0 + $0x50] sm:$0xff]
  %v23 = vld [vmem:[%s0 + $0x58] sm:$0xff]
  %v24 = vld [vmem:[%s0 + $0x60] sm:$0xff]
  %v25 = vld [vmem:[%s0 + $0x68] sm:$0xff]
  %v26 = vld [vmem:[%s0 + $0x70] sm:$0xff]
  %v27 = vld [vmem:[%s0 + $0x78] sm:$0xff]
  %v28 = vld [vmem:[%s0 + $0x80] sm:$0xff]
  %v29 = vld [vmem:[%s0 + $0x88] sm:$0xff]
  %v30 = vld [vmem:[%s0 + $0x90] sm:$0xff]
  %v31 = vld [vmem:[%s0 + $0x98] sm:$0xff]
  %v32 = vld [vmem:[%s0 + $0xa0] sm:$0xff]
  %v33 = vld [vmem:[%s0 + $0xa8] sm:$0xff]
  %v34 = vld [vmem:[%s0 + $0xb0] sm:$0xff]
  %v35 = vld [vmem:[%s0 + $0xb8] sm:$0xff]
  %v36 = vld [vmem:[%s0 + $0xc0] sm:$0xff]
  %v37 = vld [vmem:[%s0 + $0xc8] sm:$0xff]
  %v38 = vld [vmem:[%s0 + $0xd0] sm:$0xff]
  %v39 = vld [vmem:[%s0 + $0xd8] sm:$0xff]
  %v40 = vld [vmem:[%s0 + $0xe0] sm:$0xff]
  %v41 = vld [vmem:[%s0 + $0xe8] sm:$0xff]
  %v42 = vld [vmem:[%s0 + $0xf0] sm:$0xff]
  %v43 = vld [vmem:[%s0 + $0xf8] sm:$0xff]
  %v44 = vld [vmem:[%s0 + $0x100] sm:$0xff]
  %v45 = vld [vmem:[%s0 + $0x108] sm:$0xff]
  %v46 = vld [vmem:[%s0 + $0x110] sm:$0xff]
  %v47 = vld [vmem:[%s0 + $0x118] sm:$0xff]
  %v48 = vld [vmem:[%s0 + $0x120] sm:$0xff]
  %v49 = vld [vmem:[%s0 + $0x128] sm:$0xff]
  %v50 = vld [vmem:[%s0 + $0x130] sm:$0xff]
  %v51 = vld [vmem:[%s0 + $0x138] sm:$0xff]
  %v52 = vld [vmem:[%s0 + $0x140] sm:$0xff]
  %v53 = vld [vmem:[%s0 + $0x148] sm:$0xff]
  %v54 = vld [vmem:[%s0 + $0x150] sm:$0xff]
  %v55 = vld [vmem:[%s0 + $0x158] sm:$0xff]
  %v56 = vld [vmem:[%s0 + $0x160] sm:$0xff]
  %v57 = vld [vmem:[%s0 + $0x168] sm:$0xff]
  %v58 = vld [vmem:[%s0 + $0x170] sm:$0xff]
  %v59 = vld [vmem:[%s0 + $0x178] sm:$0xff]
  %v60 = vld [vmem:[%s0 + $0x180] sm:$0xff]
  %v61 = vld [vmem:[%s0 + $0x188] sm:$0xff]
  %v62 = vld [vmem:[%s0 + $0x190] sm:$0xff]
  %v63 = vld [vmem:[%s0 + $0x198] sm:$0xff]
  %v64 = vld [vmem:[%s0 + $0x1a0] sm:$0xff]
  %v65 = vld [vmem:[%s0 + $0x1a8] sm:$0xff]
  %v66 = vld [vmem:[%s0 + $0x1b0] sm:$0xff]
  %v67 = vld [vmem:[%s0 + $0x1b8] sm:$0xff]
  %v68 = vld [vmem:[%s0 + $0x1c0] sm:$0xff]
  %v69 = vld [vmem:[%s0 + $0x1c8] sm:$0xff]
  %v70 = vld [vmem:[%s0 + $0x1d0] sm:$0xff]
  %v71 = vld [vmem:[%s0 + $0x1d8] sm:$0xff]
  %v72 = vld [vmem:[%s0 + $0x1e0] sm:$0xff]
  %v73 = vld [vmem:[%s0 + $0x1e8] sm:$0xff]
  %v74 = vld [vmem:[%s0 + $0x1f0] sm:$0xff]
  %v75 = vld [vmem:[%s0 + $0x1f8] sm:$0xff]
  %v76 = vld [vmem:[%s1] sm:$0xf]
  %v77 = vld [vmem:[%s1 + $0x4] sm:$0xf]
  %v78 = vld [vmem:[%s1 + $0x8] sm:$0xf]
  %v79 = vld [vmem:[%s1 + $0xc] sm:$0xf]
  %v80 = vld [vmem:[%s1 + $0x10] sm:$0xf]
  %v81 = vld [vmem:[%s1 + $0x14] sm:$0xf]
  %v82 = vld [vmem:[%s1 + $0x18] sm:$0xf]
  %v83 = vld [vmem:[%s1 + $0x1c] sm:$0xf]
  %v84 = vld [vmem:[%s1 + $0x20] sm:$0xf]
  %v85 = vld [vmem:[%s1 + $0x24] sm:$0xf]
  %v86 = vld [vmem:[%s1 + $0x28] sm:$0xf]
  %v87 = vld [vmem:[%s1 + $0x2c] sm:$0xf]
  %v88 = vld [vmem:[%s1 + $0x30] sm:$0xf]
  %v89 = vld [vmem:[%s1 + $0x34] sm:$0xf]
  %v90 = vld [vmem:[%s1 + $0x38] sm:$0xf]
  %v91 = vld [vmem:[%s1 + $0x3c] sm:$0xf]
  %v92 = vlaneseq
  %v93 = vand.u32 %v92, 127
  %94 = vset.pattern.permute.xlu0 0
  %95 = vperm.xlu0 %94, %v12
  %v96 = vpop.permute.xlu0 %95
  %97 = vset.pattern.permute.xlu0 0
  %98 = vperm.xlu0 %97, %v13
  %v99 = vpop.permute.xlu0 %98
  %100 = vset.pattern.permute.xlu0 0
  %101 = vperm.xlu0 %100, %v14
  %v102 = vpop.permute.xlu0 %101
  %103 = vset.pattern.permute.xlu0 0
  %104 = vperm.xlu0 %103, %v15
  %v105 = vpop.permute.xlu0 %104
  %106 = vset.pattern.permute.xlu0 0
  %107 = vperm.xlu0 %106, %v16
  %v108 = vpop.permute.xlu0 %107
  %109 = vset.pattern.permute.xlu0 0
  %110 = vperm.xlu0 %109, %v17
  %v111 = vpop.permute.xlu0 %110
  %112 = vset.pattern.permute.xlu0 0
  %113 = vperm.xlu0 %112, %v18
  %v114 = vpop.permute.xlu0 %113
  %115 = vset.pattern.permute.xlu0 0
  %116 = vperm.xlu0 %115, %v19
  %v117 = vpop.permute.xlu0 %116
  %118 = vset.pattern.permute.xlu0 0
  %119 = vperm.xlu0 %118, %v20
  %v120 = vpop.permute.xlu0 %119
  %121 = vset.pattern.permute.xlu0 0
  %122 = vperm.xlu0 %121, %v21
  %v123 = vpop.permute.xlu0 %122
  %124 = vset.pattern.permute.xlu0 0
  %125 = vperm.xlu0 %124, %v22
  %v126 = vpop.permute.xlu0 %125
  %127 = vset.pattern.permute.xlu0 0
  %128 = vperm.xlu0 %127, %v23
  %v129 = vpop.permute.xlu0 %128
  %130 = vset.pattern.permute.xlu0 0
  %131 = vperm.xlu0 %130, %v24
  %v132 = vpop.permute.xlu0 %131
  %133 = vset.pattern.permute.xlu0 0
  %134 = vperm.xlu0 %133, %v25
  %v135 = vpop.permute.xlu0 %134
  %136 = vset.pattern.permute.xlu0 0
  %137 = vperm.xlu0 %136, %v26
  %v138 = vpop.permute.xlu0 %137
  %139 = vset.pattern.permute.xlu0 0
  %140 = vperm.xlu0 %139, %v27
  %v141 = vpop.permute.xlu0 %140
  %142 = vset.pattern.permute.xlu0 0
  %143 = vperm.xlu0 %142, %v28
  %v144 = vpop.permute.xlu0 %143
  %145 = vset.pattern.permute.xlu0 0
  %146 = vperm.xlu0 %145, %v29
  %v147 = vpop.permute.xlu0 %146
  %148 = vset.pattern.permute.xlu0 0
  %149 = vperm.xlu0 %148, %v30
  %v150 = vpop.permute.xlu0 %149
  %151 = vset.pattern.permute.xlu0 0
  %152 = vperm.xlu0 %151, %v31
  %v153 = vpop.permute.xlu0 %152
  %154 = vset.pattern.permute.xlu0 0
  %155 = vperm.xlu0 %154, %v32
  %v156 = vpop.permute.xlu0 %155
  %157 = vset.pattern.permute.xlu0 0
  %158 = vperm.xlu0 %157, %v33
  %v159 = vpop.permute.xlu0 %158
  %160 = vset.pattern.permute.xlu0 0
  %161 = vperm.xlu0 %160, %v34
  %v162 = vpop.permute.xlu0 %161
  %163 = vset.pattern.permute.xlu0 0
  %164 = vperm.xlu0 %163, %v35
  %v165 = vpop.permute.xlu0 %164
  %166 = vset.pattern.permute.xlu0 0
  %167 = vperm.xlu0 %166, %v36
  %v168 = vpop.permute.xlu0 %167
  %169 = vset.pattern.permute.xlu0 0
  %170 = vperm.xlu0 %169, %v37
  %v171 = vpop.permute.xlu0 %170
  %172 = vset.pattern.permute.xlu0 0
  %173 = vperm.xlu0 %172, %v38
  %v174 = vpop.permute.xlu0 %173
  %175 = vset.pattern.permute.xlu0 0
  %176 = vperm.xlu0 %175, %v39
  %v177 = vpop.permute.xlu0 %176
  %178 = vset.pattern.permute.xlu0 0
  %179 = vperm.xlu0 %178, %v40
  %v180 = vpop.permute.xlu0 %179
  %181 = vset.pattern.permute.xlu0 0
  %182 = vperm.xlu0 %181, %v41
  %v183 = vpop.permute.xlu0 %182
  %184 = vset.pattern.permute.xlu0 0
  %185 = vperm.xlu0 %184, %v42
  %v186 = vpop.permute.xlu0 %185
  %187 = vset.pattern.permute.xlu0 0
  %188 = vperm.xlu0 %187, %v43
  %v189 = vpop.permute.xlu0 %188
  %190 = vset.pattern.permute.xlu0 0
  %191 = vperm.xlu0 %190, %v44
  %v192 = vpop.permute.xlu0 %191
  %193 = vset.pattern.permute.xlu0 0
  %194 = vperm.xlu0 %193, %v45
  %v195 = vpop.permute.xlu0 %194
  %196 = vset.pattern.permute.xlu0 0
  %197 = vperm.xlu0 %196, %v46
  %v198 = vpop.permute.xlu0 %197
  %199 = vset.pattern.permute.xlu0 0
  %200 = vperm.xlu0 %199, %v47
  %v201 = vpop.permute.xlu0 %200
  %202 = vset.pattern.permute.xlu0 0
  %203 = vperm.xlu0 %202, %v48
  %v204 = vpop.permute.xlu0 %203
  %205 = vset.pattern.permute.xlu0 0
  %206 = vperm.xlu0 %205, %v49
  %v207 = vpop.permute.xlu0 %206
  %208 = vset.pattern.permute.xlu0 0
  %209 = vperm.xlu0 %208, %v50
  %v210 = vpop.permute.xlu0 %209
  %211 = vset.pattern.permute.xlu0 0
  %212 = vperm.xlu0 %211, %v51
  %v213 = vpop.permute.xlu0 %212
  %214 = vset.pattern.permute.xlu0 0
  %215 = vperm.xlu0 %214, %v52
  %v216 = vpop.permute.xlu0 %215
  %217 = vset.pattern.permute.xlu0 0
  %218 = vperm.xlu0 %217, %v53
  %v219 = vpop.permute.xlu0 %218
  %220 = vset.pattern.permute.xlu0 0
  %221 = vperm.xlu0 %220, %v54
  %v222 = vpop.permute.xlu0 %221
  %223 = vset.pattern.permute.xlu0 0
  %224 = vperm.xlu0 %223, %v55
  %v225 = vpop.permute.xlu0 %224
  %226 = vset.pattern.permute.xlu0 0
  %227 = vperm.xlu0 %226, %v56
  %v228 = vpop.permute.xlu0 %227
  %229 = vset.pattern.permute.xlu0 0
  %230 = vperm.xlu0 %229, %v57
  %v231 = vpop.permute.xlu0 %230
  %232 = vset.pattern.permute.xlu0 0
  %233 = vperm.xlu0 %232, %v58
  %v234 = vpop.permute.xlu0 %233
  %235 = vset.pattern.permute.xlu0 0
  %236 = vperm.xlu0 %235, %v59
  %v237 = vpop.permute.xlu0 %236
  %238 = vset.pattern.permute.xlu0 0
  %239 = vperm.xlu0 %238, %v60
  %v240 = vpop.permute.xlu0 %239
  %241 = vset.pattern.permute.xlu0 0
  %242 = vperm.xlu0 %241, %v61
  %v243 = vpop.permute.xlu0 %242
  %244 = vset.pattern.permute.xlu0 0
  %245 = vperm.xlu0 %244, %v62
  %v246 = vpop.permute.xlu0 %245
  %247 = vset.pattern.permute.xlu0 0
  %248 = vperm.xlu0 %247, %v63
  %v249 = vpop.permute.xlu0 %248
  %250 = vset.pattern.permute.xlu0 0
  %251 = vperm.xlu0 %250, %v64
  %v252 = vpop.permute.xlu0 %251
  %253 = vset.pattern.permute.xlu0 0
  %254 = vperm.xlu0 %253, %v65
  %v255 = vpop.permute.xlu0 %254
  %256 = vset.pattern.permute.xlu0 0
  %257 = vperm.xlu0 %256, %v66
  %v258 = vpop.permute.xlu0 %257
  %259 = vset.pattern.permute.xlu0 0
  %260 = vperm.xlu0 %259, %v67
  %v261 = vpop.permute.xlu0 %260
  %262 = vset.pattern.permute.xlu0 0
  %263 = vperm.xlu0 %262, %v68
  %v264 = vpop.permute.xlu0 %263
  %265 = vset.pattern.permute.xlu0 0
  %266 = vperm.xlu0 %265, %v69
  %v267 = vpop.permute.xlu0 %266
  %268 = vset.pattern.permute.xlu0 0
  %269 = vperm.xlu0 %268, %v70
  %v270 = vpop.permute.xlu0 %269
  %271 = vset.pattern.permute.xlu0 0
  %272 = vperm.xlu0 %271, %v71
  %v273 = vpop.permute.xlu0 %272
  %274 = vset.pattern.permute.xlu0 0
  %275 = vperm.xlu0 %274, %v72
  %v276 = vpop.permute.xlu0 %275
  %277 = vset.pattern.permute.xlu0 0
  %278 = vperm.xlu0 %277, %v73
  %v279 = vpop.permute.xlu0 %278
  %280 = vset.pattern.permute.xlu0 0
  %281 = vperm.xlu0 %280, %v74
  %v282 = vpop.permute.xlu0 %281
  %283 = vset.pattern.permute.xlu0 0
  %284 = vperm.xlu0 %283, %v75
  %v285 = vpop.permute.xlu0 %284
  %vm286 = vcmp.eq.s32.totalorder %v96, %v93
  %vm287 = vcmp.eq.s32.totalorder %v99, %v93
  %vm288 = vcmp.eq.s32.totalorder %v102, %v93
  %vm289 = vcmp.eq.s32.totalorder %v105, %v93
  %vm290 = vcmp.eq.s32.totalorder %v108, %v93
  %vm291 = vcmp.eq.s32.totalorder %v111, %v93
  %vm292 = vcmp.eq.s32.totalorder %v114, %v93
  %vm293 = vcmp.eq.s32.totalorder %v117, %v93
  %vm294 = vcmp.eq.s32.totalorder %v120, %v93
  %vm295 = vcmp.eq.s32.totalorder %v123, %v93
  %vm296 = vcmp.eq.s32.totalorder %v126, %v93
  %vm297 = vcmp.eq.s32.totalorder %v129, %v93
  %vm298 = vcmp.eq.s32.totalorder %v132, %v93
  %vm299 = vcmp.eq.s32.totalorder %v135, %v93
  %vm300 = vcmp.eq.s32.totalorder %v138, %v93
  %vm301 = vcmp.eq.s32.totalorder %v141, %v93
  %vm302 = vcmp.eq.s32.totalorder %v144, %v93
  %vm303 = vcmp.eq.s32.totalorder %v147, %v93
  %vm304 = vcmp.eq.s32.totalorder %v150, %v93
  %vm305 = vcmp.eq.s32.totalorder %v153, %v93
  %vm306 = vcmp.eq.s32.totalorder %v156, %v93
  %vm307 = vcmp.eq.s32.totalorder %v159, %v93
  %vm308 = vcmp.eq.s32.totalorder %v162, %v93
  %vm309 = vcmp.eq.s32.totalorder %v165, %v93
  %vm310 = vcmp.eq.s32.totalorder %v168, %v93
  %vm311 = vcmp.eq.s32.totalorder %v171, %v93
  %vm312 = vcmp.eq.s32.totalorder %v174, %v93
  %vm313 = vcmp.eq.s32.totalorder %v177, %v93
  %vm314 = vcmp.eq.s32.totalorder %v180, %v93
  %vm315 = vcmp.eq.s32.totalorder %v183, %v93
  %vm316 = vcmp.eq.s32.totalorder %v186, %v93
  %vm317 = vcmp.eq.s32.totalorder %v189, %v93
  %vm318 = vcmp.eq.s32.totalorder %v192, %v93
  %vm319 = vcmp.eq.s32.totalorder %v195, %v93
  %vm320 = vcmp.eq.s32.totalorder %v198, %v93
  %vm321 = vcmp.eq.s32.totalorder %v201, %v93
  %vm322 = vcmp.eq.s32.totalorder %v204, %v93
  %vm323 = vcmp.eq.s32.totalorder %v207, %v93
  %vm324 = vcmp.eq.s32.totalorder %v210, %v93
  %vm325 = vcmp.eq.s32.totalorder %v213, %v93
  %vm326 = vcmp.eq.s32.totalorder %v216, %v93
  %vm327 = vcmp.eq.s32.totalorder %v219, %v93
  %vm328 = vcmp.eq.s32.totalorder %v222, %v93
  %vm329 = vcmp.eq.s32.totalorder %v225, %v93
  %vm330 = vcmp.eq.s32.totalorder %v228, %v93
  %vm331 = vcmp.eq.s32.totalorder %v231, %v93
  %vm332 = vcmp.eq.s32.totalorder %v234, %v93
  %vm333 = vcmp.eq.s32.totalorder %v237, %v93
  %vm334 = vcmp.eq.s32.totalorder %v240, %v93
  %vm335 = vcmp.eq.s32.totalorder %v243, %v93
  %vm336 = vcmp.eq.s32.totalorder %v246, %v93
  %vm337 = vcmp.eq.s32.totalorder %v249, %v93
  %vm338 = vcmp.eq.s32.totalorder %v252, %v93
  %vm339 = vcmp.eq.s32.totalorder %v255, %v93
  %vm340 = vcmp.eq.s32.totalorder %v258, %v93
  %vm341 = vcmp.eq.s32.totalorder %v261, %v93
  %vm342 = vcmp.eq.s32.totalorder %v264, %v93
  %vm343 = vcmp.eq.s32.totalorder %v267, %v93
  %vm344 = vcmp.eq.s32.totalorder %v270, %v93
  %vm345 = vcmp.eq.s32.totalorder %v273, %v93
  %vm346 = vcmp.eq.s32.totalorder %v276, %v93
  %vm347 = vcmp.eq.s32.totalorder %v279, %v93
  %vm348 = vcmp.eq.s32.totalorder %v282, %v93
  %vm349 = vcmp.eq.s32.totalorder %v285, %v93
  %v350 = vsel %vm286, 1, 0
  %v351 = vsel %vm287, 1, 0
  %v352 = vsel %vm288, 1, 0
  %v353 = vsel %vm289, 1, 0
  %v354 = vsel %vm290, 1, 0
  %v355 = vsel %vm291, 1, 0
  %v356 = vsel %vm292, 1, 0
  %v357 = vsel %vm293, 1, 0
  %v358 = vsel %vm294, 1, 0
  %v359 = vsel %vm295, 1, 0
  %v360 = vsel %vm296, 1, 0
  %v361 = vsel %vm297, 1, 0
  %v362 = vsel %vm298, 1, 0
  %v363 = vsel %vm299, 1, 0
  %v364 = vsel %vm300, 1, 0
  %v365 = vsel %vm301, 1, 0
  %v366 = vsel %vm302, 1, 0
  %v367 = vsel %vm303, 1, 0
  %v368 = vsel %vm304, 1, 0
  %v369 = vsel %vm305, 1, 0
  %v370 = vsel %vm306, 1, 0
  %v371 = vsel %vm307, 1, 0
  %v372 = vsel %vm308, 1, 0
  %v373 = vsel %vm309, 1, 0
  %v374 = vsel %vm310, 1, 0
  %v375 = vsel %vm311, 1, 0
  %v376 = vsel %vm312, 1, 0
  %v377 = vsel %vm313, 1, 0
  %v378 = vsel %vm314, 1, 0
  %v379 = vsel %vm315, 1, 0
  %v380 = vsel %vm316, 1, 0
  %v381 = vsel %vm317, 1, 0
  %v382 = vsel %vm318, 1, 0
  %v383 = vsel %vm319, 1, 0
  %v384 = vsel %vm320, 1, 0
  %v385 = vsel %vm321, 1, 0
  %v386 = vsel %vm322, 1, 0
  %v387 = vsel %vm323, 1, 0
  %v388 = vsel %vm324, 1, 0
  %v389 = vsel %vm325, 1, 0
  %v390 = vsel %vm326, 1, 0
  %v391 = vsel %vm327, 1, 0
  %v392 = vsel %vm328, 1, 0
  %v393 = vsel %vm329, 1, 0
  %v394 = vsel %vm330, 1, 0
  %v395 = vsel %vm331, 1, 0
  %v396 = vsel %vm332, 1, 0
  %v397 = vsel %vm333, 1, 0
  %v398 = vsel %vm334, 1, 0
  %v399 = vsel %vm335, 1, 0
  %v400 = vsel %vm336, 1, 0
  %v401 = vsel %vm337, 1, 0
  %v402 = vsel %vm338, 1, 0
  %v403 = vsel %vm339, 1, 0
  %v404 = vsel %vm340, 1, 0
  %v405 = vsel %vm341, 1, 0
  %v406 = vsel %vm342, 1, 0
  %v407 = vsel %vm343, 1, 0
  %v408 = vsel %vm344, 1, 0
  %v409 = vsel %vm345, 1, 0
  %v410 = vsel %vm346, 1, 0
  %v411 = vsel %vm347, 1, 0
  %v412 = vsel %vm348, 1, 0
  %v413 = vsel %vm349, 1, 0
  %v414 = vcvt.s32.f32 %v350
  %v415 = vcvt.s32.f32 %v351
  %v416 = vcvt.s32.f32 %v352
  %v417 = vcvt.s32.f32 %v353
  %v418 = vcvt.s32.f32 %v354
  %v419 = vcvt.s32.f32 %v355
  %v420 = vcvt.s32.f32 %v356
  %v421 = vcvt.s32.f32 %v357
  %v422 = vcvt.s32.f32 %v358
  %v423 = vcvt.s32.f32 %v359
  %v424 = vcvt.s32.f32 %v360
  %v425 = vcvt.s32.f32 %v361
  %v426 = vcvt.s32.f32 %v362
  %v427 = vcvt.s32.f32 %v363
  %v428 = vcvt.s32.f32 %v364
  %v429 = vcvt.s32.f32 %v365
  %v430 = vcvt.s32.f32 %v366
  %v431 = vcvt.s32.f32 %v367
  %v432 = vcvt.s32.f32 %v368
  %v433 = vcvt.s32.f32 %v369
  %v434 = vcvt.s32.f32 %v370
  %v435 = vcvt.s32.f32 %v371
  %v436 = vcvt.s32.f32 %v372
  %v437 = vcvt.s32.f32 %v373
  %v438 = vcvt.s32.f32 %v374
  %v439 = vcvt.s32.f32 %v375
  %v440 = vcvt.s32.f32 %v376
  %v441 = vcvt.s32.f32 %v377
  %v442 = vcvt.s32.f32 %v378
  %v443 = vcvt.s32.f32 %v379
  %v444 = vcvt.s32.f32 %v380
  %v445 = vcvt.s32.f32 %v381
  %v446 = vcvt.s32.f32 %v382
  %v447 = vcvt.s32.f32 %v383
  %v448 = vcvt.s32.f32 %v384
  %v449 = vcvt.s32.f32 %v385
  %v450 = vcvt.s32.f32 %v386
  %v451 = vcvt.s32.f32 %v387
  %v452 = vcvt.s32.f32 %v388
  %v453 = vcvt.s32.f32 %v389
  %v454 = vcvt.s32.f32 %v390
  %v455 = vcvt.s32.f32 %v391
  %v456 = vcvt.s32.f32 %v392
  %v457 = vcvt.s32.f32 %v393
  %v458 = vcvt.s32.f32 %v394
  %v459 = vcvt.s32.f32 %v395
  %v460 = vcvt.s32.f32 %v396
  %v461 = vcvt.s32.f32 %v397
  %v462 = vcvt.s32.f32 %v398
  %v463 = vcvt.s32.f32 %v399
  %v464 = vcvt.s32.f32 %v400
  %v465 = vcvt.s32.f32 %v401
  %v466 = vcvt.s32.f32 %v402
  %v467 = vcvt.s32.f32 %v403
  %v468 = vcvt.s32.f32 %v404
  %v469 = vcvt.s32.f32 %v405
  %v470 = vcvt.s32.f32 %v406
  %v471 = vcvt.s32.f32 %v407
  %v472 = vcvt.s32.f32 %v408
  %v473 = vcvt.s32.f32 %v409
  %v474 = vcvt.s32.f32 %v410
  %v475 = vcvt.s32.f32 %v411
  %v476 = vcvt.s32.f32 %v412
  %v477 = vcvt.s32.f32 %v413
  %v478 = vpack.c.bf16 %v415, %v414
  %v479 = vpack.c.bf16 %v417, %v416
  %v480 = vpack.c.bf16 %v419, %v418
  %v481 = vpack.c.bf16 %v421, %v420
  %v482 = vpack.c.bf16 %v423, %v422
  %v483 = vpack.c.bf16 %v425, %v424
  %v484 = vpack.c.bf16 %v427, %v426
  %v485 = vpack.c.bf16 %v429, %v428
  %v486 = vpack.c.bf16 %v431, %v430
  %v487 = vpack.c.bf16 %v433, %v432
  %v488 = vpack.c.bf16 %v435, %v434
  %v489 = vpack.c.bf16 %v437, %v436
  %v490 = vpack.c.bf16 %v439, %v438
  %v491 = vpack.c.bf16 %v441, %v440
  %v492 = vpack.c.bf16 %v443, %v442
  %v493 = vpack.c.bf16 %v445, %v444
  %v494 = vpack.c.bf16 %v447, %v446
  %v495 = vpack.c.bf16 %v449, %v448
  %v496 = vpack.c.bf16 %v451, %v450
  %v497 = vpack.c.bf16 %v453, %v452
  %v498 = vpack.c.bf16 %v455, %v454
  %v499 = vpack.c.bf16 %v457, %v456
  %v500 = vpack.c.bf16 %v459, %v458
  %v501 = vpack.c.bf16 %v461, %v460
  %v502 = vpack.c.bf16 %v463, %v462
  %v503 = vpack.c.bf16 %v465, %v464
  %v504 = vpack.c.bf16 %v467, %v466
  %v505 = vpack.c.bf16 %v469, %v468
  %v506 = vpack.c.bf16 %v471, %v470
  %v507 = vpack.c.bf16 %v473, %v472
  %v508 = vpack.c.bf16 %v475, %v474
  %v509 = vpack.c.bf16 %v477, %v476
  %v526 = vunpack.c.l.b16 %v76
  %v527 = vunpack.c.l.b16 %v77
  %v528 = vunpack.c.l.b16 %v78
  %v529 = vunpack.c.l.b16 %v79
  %v530 = vunpack.c.l.b16 %v80
  %v531 = vunpack.c.l.b16 %v81
  %v532 = vunpack.c.l.b16 %v82
  %v533 = vunpack.c.l.b16 %v83
  %v534 = vunpack.c.l.b16 %v84
  %v535 = vunpack.c.l.b16 %v85
  %v536 = vunpack.c.l.b16 %v86
  %v537 = vunpack.c.l.b16 %v87
  %v538 = vunpack.c.l.b16 %v88
  %v539 = vunpack.c.l.b16 %v89
  %v540 = vunpack.c.l.b16 %v90
  %v541 = vunpack.c.l.b16 %v91
  %v542 = vpack.c.b16 %v527, %v526
  %v543 = vpack.c.b16 %v529, %v528
  %v544 = vpack.c.b16 %v531, %v530
  %v545 = vpack.c.b16 %v533, %v532
  %v546 = vpack.c.b16 %v535, %v534
  %v547 = vpack.c.b16 %v537, %v536
  %v548 = vpack.c.b16 %v539, %v538
  %v549 = vpack.c.b16 %v541, %v540
  %558 = vmatprep.subr.bf16.mxu0 0
  %559 = vmatpush1.bf16.msra.mxu0 %v542
  %560 = vmatprep.subr.bf16.mxu0 0
  %561 = vmatpush1.bf16.msra.mxu0 %v543
  %562 = vmatprep.subr.bf16.mxu0 0
  %563 = vmatpush1.bf16.msra.mxu0 %v544
  %564 = vmatprep.subr.bf16.mxu0 0
  %565 = vmatpush1.bf16.msra.mxu0 %v545
  %566 = vmatprep.subr.bf16.mxu0 0
  %567 = vmatpush1.bf16.msra.mxu0 %v546
  %568 = vmatprep.subr.bf16.mxu0 0
  %569 = vmatpush1.bf16.msra.mxu0 %v547
  %570 = vmatprep.subr.bf16.mxu0 0
  %571 = vmatpush1.bf16.msra.mxu0 %v548
  %572 = vmatprep.subr.bf16.mxu0 0
  %573 = vmatpush1.bf16.msra.mxu0 %v549
  %574 = vmatprep.subr.bf16.mxu0 0
  %575 = vmatpush1.bf16.msra.mxu0 0
  %576 = vmatprep.subr.bf16.mxu0 0
  %577 = vmatpush1.bf16.msra.mxu0 0
  %578 = vmatprep.subr.bf16.mxu0 0
  %579 = vmatpush1.bf16.msra.mxu0 0
  %580 = vmatprep.subr.bf16.mxu0 0
  %581 = vmatpush1.bf16.msra.mxu0 0
  %582 = vmatprep.subr.bf16.mxu0 0
  %583 = vmatpush1.bf16.msra.mxu0 0
  %584 = vmatprep.subr.bf16.mxu0 0
  %585 = vmatpush1.bf16.msra.mxu0 0
  %586 = vmatprep.subr.bf16.mxu0 0
  %587 = vmatpush1.bf16.msra.mxu0 0
  %588 = vmatprep.subr.bf16.mxu0 0
  %589 = vmatpush1.bf16.msra.mxu0 0
  %590 = vmatprep.mubr.bf16.mxu0 0
  %591 = vmatmul.mubr.bf16.gmra.mrb[0].mxu0 %v478
  %v592 = vpop.f32.mrb[0].mxu0
  %v593 = vadd.f32 0.0, %v592
  %v594 = vpop.f32.mrb[0].mxu0
  %v595 = vpop.f32.mrb[0].mxu0
  %v596 = vadd.f32 0.0, %v595
  %v597 = vpop.f32.mrb[0].mxu0
  %598 = vmatprep.mubr.bf16.mxu0 0
  %599 = vmatmul.mubr.bf16.gmra.mrb[0].mxu0 %v479
  %v600 = vpop.f32.mrb[0].mxu0
  %v601 = vadd.f32 0.0, %v600
  %v602 = vpop.f32.mrb[0].mxu0
  %v603 = vpop.f32.mrb[0].mxu0
  %v604 = vadd.f32 0.0, %v603
  %v605 = vpop.f32.mrb[0].mxu0
  %606 = vmatprep.mubr.bf16.mxu0 0
  %607 = vmatmul.mubr.bf16.gmra.mrb[0].mxu0 %v480
  %v608 = vpop.f32.mrb[0].mxu0
  %v609 = vadd.f32 0.0, %v608
  %v610 = vpop.f32.mrb[0].mxu0
  %v611 = vpop.f32.mrb[0].mxu0
  %v612 = vadd.f32 0.0, %v611
  %v613 = vpop.f32.mrb[0].mxu0
  %614 = vmatprep.mubr.bf16.mxu0 0
  %615 = vmatmul.mubr.bf16.gmra.mrb[0].mxu0 %v481
  %v616 = vpop.f32.mrb[0].mxu0
  %v617 = vadd.f32 0.0, %v616
  %v618 = vpop.f32.mrb[0].mxu0
  %v619 = vpop.f32.mrb[0].mxu0
  %v620 = vadd.f32 0.0, %v619
  %v621 = vpop.f32.mrb[0].mxu0
  %622 = vmatprep.mubr.bf16.mxu0 0
  %623 = vmatmul.mubr.bf16.gmra.mrb[0].mxu0 %v482
  %v624 = vpop.f32.mrb[0].mxu0
  %v625 = vadd.f32 0.0, %v624
  %v626 = vpop.f32.mrb[0].mxu0
  %v627 = vpop.f32.mrb[0].mxu0
  %v628 = vadd.f32 0.0, %v627
  %v629 = vpop.f32.mrb[0].mxu0
  %630 = vmatprep.mubr.bf16.mxu0 0
  %631 = vmatmul.mubr.bf16.gmra.mrb[0].mxu0 %v483
  %v632 = vpop.f32.mrb[0].mxu0
  %v633 = vadd.f32 0.0, %v632
  %v634 = vpop.f32.mrb[0].mxu0
  %v635 = vpop.f32.mrb[0].mxu0
  %v636 = vadd.f32 0.0, %v635
  %v637 = vpop.f32.mrb[0].mxu0
  %638 = vmatprep.mubr.bf16.mxu0 0
  %639 = vmatmul.mubr.bf16.gmra.mrb[0].mxu0 %v484
  %v640 = vpop.f32.mrb[0].mxu0
  %v641 = vadd.f32 0.0, %v640
  %v642 = vpop.f32.mrb[0].mxu0
  %v643 = vpop.f32.mrb[0].mxu0
  %v644 = vadd.f32 0.0, %v643
  %v645 = vpop.f32.mrb[0].mxu0
  %646 = vmatprep.mubr.bf16.mxu0 0
  %647 = vmatmul.mubr.bf16.gmra.mrb[0].mxu0 %v485
  %v648 = vpop.f32.mrb[0].mxu0
  %v649 = vadd.f32 0.0, %v648
  %v650 = vpop.f32.mrb[0].mxu0
  %v651 = vpop.f32.mrb[0].mxu0
  %v652 = vadd.f32 0.0, %v651
  %v653 = vpop.f32.mrb[0].mxu0
  %654 = vmatprep.mubr.bf16.mxu0 0
  %655 = vmatmul.mubr.bf16.gmra.mrb[0].mxu0 %v486
  %v656 = vpop.f32.mrb[0].mxu0
  %v657 = vadd.f32 0.0, %v656
  %v658 = vpop.f32.mrb[0].mxu0
  %v659 = vpop.f32.mrb[0].mxu0
  %v660 = vadd.f32 0.0, %v659
  %v661 = vpop.f32.mrb[0].mxu0
  %662 = vmatprep.mubr.bf16.mxu0 0
  %663 = vmatmul.mubr.bf16.gmra.mrb[0].mxu0 %v487
  %v664 = vpop.f32.mrb[0].mxu0
  %v665 = vadd.f32 0.0, %v664
  %v666 = vpop.f32.mrb[0].mxu0
  %v667 = vpop.f32.mrb[0].mxu0
  %v668 = vadd.f32 0.0, %v667
  %v669 = vpop.f32.mrb[0].mxu0
  %670 = vmatprep.mubr.bf16.mxu0 0
  %671 = vmatmul.mubr.bf16.gmra.mrb[0].mxu0 %v488
  %v672 = vpop.f32.mrb[0].mxu0
  %v673 = vadd.f32 0.0, %v672
  %v674 = vpop.f32.mrb[0].mxu0
  %v675 = vpop.f32.mrb[0].mxu0
  %v676 = vadd.f32 0.0, %v675
  %v677 = vpop.f32.mrb[0].mxu0
  %678 = vmatprep.mubr.bf16.mxu0 0
  %679 = vmatmul.mubr.bf16.gmra.mrb[0].mxu0 %v489
  %v680 = vpop.f32.mrb[0].mxu0
  %v681 = vadd.f32 0.0, %v680
  %v682 = vpop.f32.mrb[0].mxu0
  %v683 = vpop.f32.mrb[0].mxu0
  %v684 = vadd.f32 0.0, %v683
  %v685 = vpop.f32.mrb[0].mxu0
  %686 = vmatprep.mubr.bf16.mxu0 0
  %687 = vmatmul.mubr.bf16.gmra.mrb[0].mxu0 %v490
  %v688 = vpop.f32.mrb[0].mxu0
  %v689 = vadd.f32 0.0, %v688
  %v690 = vpop.f32.mrb[0].mxu0
  %v691 = vpop.f32.mrb[0].mxu0
  %v692 = vadd.f32 0.0, %v691
  %v693 = vpop.f32.mrb[0].mxu0
  %694 = vmatprep.mubr.bf16.mxu0 0
  %695 = vmatmul.mubr.bf16.gmra.mrb[0].mxu0 %v491
  %v696 = vpop.f32.mrb[0].mxu0
  %v697 = vadd.f32 0.0, %v696
  %v698 = vpop.f32.mrb[0].mxu0
  %v699 = vpop.f32.mrb[0].mxu0
  %v700 = vadd.f32 0.0, %v699
  %v701 = vpop.f32.mrb[0].mxu0
  %702 = vmatprep.mubr.bf16.mxu0 0
  %703 = vmatmul.mubr.bf16.gmra.mrb[0].mxu0 %v492
  %v704 = vpop.f32.mrb[0].mxu0
  %v705 = vadd.f32 0.0, %v704
  %v706 = vpop.f32.mrb[0].mxu0
  %v707 = vpop.f32.mrb[0].mxu0
  %v708 = vadd.f32 0.0, %v707
  %v709 = vpop.f32.mrb[0].mxu0
  %710 = vmatprep.mubr.bf16.mxu0 0
  %711 = vmatmul.mubr.bf16.gmra.mrb[0].mxu0 %v493
  %v712 = vpop.f32.mrb[0].mxu0
  %v713 = vadd.f32 0.0, %v712
  %v714 = vpop.f32.mrb[0].mxu0
  %v715 = vpop.f32.mrb[0].mxu0
  %v716 = vadd.f32 0.0, %v715
  %v717 = vpop.f32.mrb[0].mxu0
  %718 = vmatprep.mubr.bf16.mxu0 0
  %719 = vmatmul.mubr.bf16.gmra.mrb[0].mxu0 %v494
  %v720 = vpop.f32.mrb[0].mxu0
  %v721 = vadd.f32 0.0, %v720
  %v722 = vpop.f32.mrb[0].mxu0
  %v723 = vpop.f32.mrb[0].mxu0
  %v724 = vadd.f32 0.0, %v723
  %v725 = vpop.f32.mrb[0].mxu0
  %726 = vmatprep.mubr.bf16.mxu0 0
  %727 = vmatmul.mubr.bf16.gmra.mrb[0].mxu0 %v495
  %v728 = vpop.f32.mrb[0].mxu0
  %v729 = vadd.f32 0.0, %v728
  %v730 = vpop.f32.mrb[0].mxu0
  %v731 = vpop.f32.mrb[0].mxu0
  %v732 = vadd.f32 0.0, %v731
  %v733 = vpop.f32.mrb[0].mxu0
  %734 = vmatprep.mubr.bf16.mxu0 0
  %735 = vmatmul.mubr.bf16.gmra.mrb[0].mxu0 %v496
  %v736 = vpop.f32.mrb[0].mxu0
  %v737 = vadd.f32 0.0, %v736
  %v738 = vpop.f32.mrb[0].mxu0
  %v739 = vpop.f32.mrb[0].mxu0
  %v740 = vadd.f32 0.0, %v739
  %v741 = vpop.f32.mrb[0].mxu0
  %742 = vmatprep.mubr.bf16.mxu0 0
  %743 = vmatmul.mubr.bf16.gmra.mrb[0].mxu0 %v497
  %v744 = vpop.f32.mrb[0].mxu0
  %v745 = vadd.f32 0.0, %v744
  %v746 = vpop.f32.mrb[0].mxu0
  %v747 = vpop.f32.mrb[0].mxu0
  %v748 = vadd.f32 0.0, %v747
  %v749 = vpop.f32.mrb[0].mxu0
  %750 = vmatprep.mubr.bf16.mxu0 0
  %751 = vmatmul.mubr.bf16.gmra.mrb[0].mxu0 %v498
  %v752 = vpop.f32.mrb[0].mxu0
  %v753 = vadd.f32 0.0, %v752
  %v754 = vpop.f32.mrb[0].mxu0
  %v755 = vpop.f32.mrb[0].mxu0
  %v756 = vadd.f32 0.0, %v755
  %v757 = vpop.f32.mrb[0].mxu0
  %758 = vmatprep.mubr.bf16.mxu0 0
  %759 = vmatmul.mubr.bf16.gmra.mrb[0].mxu0 %v499
  %v760 = vpop.f32.mrb[0].mxu0
  %v761 = vadd.f32 0.0, %v760
  %v762 = vpop.f32.mrb[0].mxu0
  %v763 = vpop.f32.mrb[0].mxu0
  %v764 = vadd.f32 0.0, %v763
  %v765 = vpop.f32.mrb[0].mxu0
  %766 = vmatprep.mubr.bf16.mxu0 0
  %767 = vmatmul.mubr.bf16.gmra.mrb[0].mxu0 %v500
  %v768 = vpop.f32.mrb[0].mxu0
  %v769 = vadd.f32 0.0, %v768
  %v770 = vpop.f32.mrb[0].mxu0
  %v771 = vpop.f32.mrb[0].mxu0
  %v772 = vadd.f32 0.0, %v771
  %v773 = vpop.f32.mrb[0].mxu0
  %774 = vmatprep.mubr.bf16.mxu0 0
  %775 = vmatmul.mubr.bf16.gmra.mrb[0].mxu0 %v501
  %v776 = vpop.f32.mrb[0].mxu0
  %v777 = vadd.f32 0.0, %v776
  %v778 = vpop.f32.mrb[0].mxu0
  %v779 = vpop.f32.mrb[0].mxu0
  %v780 = vadd.f32 0.0, %v779
  %v781 = vpop.f32.mrb[0].mxu0
  %782 = vmatprep.mubr.bf16.mxu0 0
  %783 = vmatmul.mubr.bf16.gmra.mrb[0].mxu0 %v502
  %v784 = vpop.f32.mrb[0].mxu0
  %v785 = vadd.f32 0.0, %v784
  %v786 = vpop.f32.mrb[0].mxu0
  %v787 = vpop.f32.mrb[0].mxu0
  %v788 = vadd.f32 0.0, %v787
  %v789 = vpop.f32.mrb[0].mxu0
  %790 = vmatprep.mubr.bf16.mxu0 0
  %791 = vmatmul.mubr.bf16.gmra.mrb[0].mxu0 %v503
  %v792 = vpop.f32.mrb[0].mxu0
  %v793 = vadd.f32 0.0, %v792
  %v794 = vpop.f32.mrb[0].mxu0
  %v795 = vpop.f32.mrb[0].mxu0
  %v796 = vadd.f32 0.0, %v795
  %v797 = vpop.f32.mrb[0].mxu0
  %798 = vmatprep.mubr.bf16.mxu0 0
  %799 = vmatmul.mubr.bf16.gmra.mrb[0].mxu0 %v504
  %v800 = vpop.f32.mrb[0].mxu0
  %v801 = vadd.f32 0.0, %v800
  %v802 = vpop.f32.mrb[0].mxu0
  %v803 = vpop.f32.mrb[0].mxu0
  %v804 = vadd.f32 0.0, %v803
  %v805 = vpop.f32.mrb[0].mxu0
  %806 = vmatprep.mubr.bf16.mxu0 0
  %807 = vmatmul.mubr.bf16.gmra.mrb[0].mxu0 %v505
  %v808 = vpop.f32.mrb[0].mxu0
  %v809 = vadd.f32 0.0, %v808
  %v810 = vpop.f32.mrb[0].mxu0
  %v811 = vpop.f32.mrb[0].mxu0
  %v812 = vadd.f32 0.0, %v811
  %v813 = vpop.f32.mrb[0].mxu0
  %814 = vmatprep.mubr.bf16.mxu0 0
  %815 = vmatmul.mubr.bf16.gmra.mrb[0].mxu0 %v506
  %v816 = vpop.f32.mrb[0].mxu0
  %v817 = vadd.f32 0.0, %v816
  %v818 = vpop.f32.mrb[0].mxu0
  %v819 = vpop.f32.mrb[0].mxu0
  %v820 = vadd.f32 0.0, %v819
  %v821 = vpop.f32.mrb[0].mxu0
  %822 = vmatprep.mubr.bf16.mxu0 0
  %823 = vmatmul.mubr.bf16.gmra.mrb[0].mxu0 %v507
  %v824 = vpop.f32.mrb[0].mxu0
  %v825 = vadd.f32 0.0, %v824
  %v826 = vpop.f32.mrb[0].mxu0
  %v827 = vpop.f32.mrb[0].mxu0
  %v828 = vadd.f32 0.0, %v827
  %v829 = vpop.f32.mrb[0].mxu0
  %830 = vmatprep.mubr.bf16.mxu0 0
  %831 = vmatmul.mubr.bf16.gmra.mrb[0].mxu0 %v508
  %v832 = vpop.f32.mrb[0].mxu0
  %v833 = vadd.f32 0.0, %v832
  %v834 = vpop.f32.mrb[0].mxu0
  %v835 = vpop.f32.mrb[0].mxu0
  %v836 = vadd.f32 0.0, %v835
  %v837 = vpop.f32.mrb[0].mxu0
  %838 = vmatprep.mubr.bf16.mxu0 0
  %839 = vmatmul.mubr.bf16.gmra.mrb[0].mxu0 %v509
  %v840 = vpop.f32.mrb[0].mxu0
  %v841 = vadd.f32 0.0, %v840
  %v842 = vpop.f32.mrb[0].mxu0
  %v843 = vpop.f32.mrb[0].mxu0
  %v844 = vadd.f32 0.0, %v843
  %v845 = vpop.f32.mrb[0].mxu0
  %846 = vdwg.mxu0
  %847 = vset.pattern.permute.xlu0 1
  %848 = vperm.xlu0 %847, %v12
  %v849 = vpop.permute.xlu0 %848
  %850 = vset.pattern.permute.xlu0 1
  %851 = vperm.xlu0 %850, %v13
  %v852 = vpop.permute.xlu0 %851
  %853 = vset.pattern.permute.xlu0 1
  %854 = vperm.xlu0 %853, %v14
  %v855 = vpop.permute.xlu0 %854
  %856 = vset.pattern.permute.xlu0 1
  %857 = vperm.xlu0 %856, %v15
  %v858 = vpop.permute.xlu0 %857
  %859 = vset.pattern.permute.xlu0 1
  %860 = vperm.xlu0 %859, %v16
  %v861 = vpop.permute.xlu0 %860
  %862 = vset.pattern.permute.xlu0 1
  %863 = vperm.xlu0 %862, %v17
  %v864 = vpop.permute.xlu0 %863
  %865 = vset.pattern.permute.xlu0 1
  %866 = vperm.xlu0 %865, %v18
  %v867 = vpop.permute.xlu0 %866
  %868 = vset.pattern.permute.xlu0 1
  %869 = vperm.xlu0 %868, %v19
  %v870 = vpop.permute.xlu0 %869
  %871 = vset.pattern.permute.xlu0 1
  %872 = vperm.xlu0 %871, %v20
  %v873 = vpop.permute.xlu0 %872
  %874 = vset.pattern.permute.xlu0 1
  %875 = vperm.xlu0 %874, %v21
  %v876 = vpop.permute.xlu0 %875
  %877 = vset.pattern.permute.xlu0 1
  %878 = vperm.xlu0 %877, %v22
  %v879 = vpop.permute.xlu0 %878
  %880 = vset.pattern.permute.xlu0 1
  %881 = vperm.xlu0 %880, %v23
  %v882 = vpop.permute.xlu0 %881
  %883 = vset.pattern.permute.xlu0 1
  %884 = vperm.xlu0 %883, %v24
  %v885 = vpop.permute.xlu0 %884
  %886 = vset.pattern.permute.xlu0 1
  %887 = vperm.xlu0 %886, %v25
  %v888 = vpop.permute.xlu0 %887
  %889 = vset.pattern.permute.xlu0 1
  %890 = vperm.xlu0 %889, %v26
  %v891 = vpop.permute.xlu0 %890
  %892 = vset.pattern.permute.xlu0 1
  %893 = vperm.xlu0 %892, %v27
  %v894 = vpop.permute.xlu0 %893
  %895 = vset.pattern.permute.xlu0 1
  %896 = vperm.xlu0 %895, %v28
  %v897 = vpop.permute.xlu0 %896
  %898 = vset.pattern.permute.xlu0 1
  %899 = vperm.xlu0 %898, %v29
  %v900 = vpop.permute.xlu0 %899
  %901 = vset.pattern.permute.xlu0 1
  %902 = vperm.xlu0 %901, %v30
  %v903 = vpop.permute.xlu0 %902
  %904 = vset.pattern.permute.xlu0 1
  %905 = vperm.xlu0 %904, %v31
  %v906 = vpop.permute.xlu0 %905
  %907 = vset.pattern.permute.xlu0 1
  %908 = vperm.xlu0 %907, %v32
  %v909 = vpop.permute.xlu0 %908
  %910 = vset.pattern.permute.xlu0 1
  %911 = vperm.xlu0 %910, %v33
  %v912 = vpop.permute.xlu0 %911
  %913 = vset.pattern.permute.xlu0 1
  %914 = vperm.xlu0 %913, %v34
  %v915 = vpop.permute.xlu0 %914
  %916 = vset.pattern.permute.xlu0 1
  %917 = vperm.xlu0 %916, %v35
  %v918 = vpop.permute.xlu0 %917
  %919 = vset.pattern.permute.xlu0 1
  %920 = vperm.xlu0 %919, %v36
  %v921 = vpop.permute.xlu0 %920
  %922 = vset.pattern.permute.xlu0 1
  %923 = vperm.xlu0 %922, %v37
  %v924 = vpop.permute.xlu0 %923
  %925 = vset.pattern.permute.xlu0 1
  %926 = vperm.xlu0 %925, %v38
  %v927 = vpop.permute.xlu0 %926
  %928 = vset.pattern.permute.xlu0 1
  %929 = vperm.xlu0 %928, %v39
  %v930 = vpop.permute.xlu0 %929
  %931 = vset.pattern.permute.xlu0 1
  %932 = vperm.xlu0 %931, %v40
  %v933 = vpop.permute.xlu0 %932
  %934 = vset.pattern.permute.xlu0 1
  %935 = vperm.xlu0 %934, %v41
  %v936 = vpop.permute.xlu0 %935
  %937 = vset.pattern.permute.xlu0 1
  %938 = vperm.xlu0 %937, %v42
  %v939 = vpop.permute.xlu0 %938
  %940 = vset.pattern.permute.xlu0 1
  %941 = vperm.xlu0 %940, %v43
  %v942 = vpop.permute.xlu0 %941
  %943 = vset.pattern.permute.xlu0 1
  %944 = vperm.xlu0 %943, %v44
  %v945 = vpop.permute.xlu0 %944
  %946 = vset.pattern.permute.xlu0 1
  %947 = vperm.xlu0 %946, %v45
  %v948 = vpop.permute.xlu0 %947
  %949 = vset.pattern.permute.xlu0 1
  %950 = vperm.xlu0 %949, %v46
  %v951 = vpop.permute.xlu0 %950
  %952 = vset.pattern.permute.xlu0 1
  %953 = vperm.xlu0 %952, %v47
  %v954 = vpop.permute.xlu0 %953
  %955 = vset.pattern.permute.xlu0 1
  %956 = vperm.xlu0 %955, %v48
  %v957 = vpop.permute.xlu0 %956
  %958 = vset.pattern.permute.xlu0 1
  %959 = vperm.xlu0 %958, %v49
  %v960 = vpop.permute.xlu0 %959
  %961 = vset.pattern.permute.xlu0 1
  %962 = vperm.xlu0 %961, %v50
  %v963 = vpop.permute.xlu0 %962
  %964 = vset.pattern.permute.xlu0 1
  %965 = vperm.xlu0 %964, %v51
  %v966 = vpop.permute.xlu0 %965
  %967 = vset.pattern.permute.xlu0 1
  %968 = vperm.xlu0 %967, %v52
  %v969 = vpop.permute.xlu0 %968
  %970 = vset.pattern.permute.xlu0 1
  %971 = vperm.xlu0 %970, %v53
  %v972 = vpop.permute.xlu0 %971
  %973 = vset.pattern.permute.xlu0 1
  %974 = vperm.xlu0 %973, %v54
  %v975 = vpop.permute.xlu0 %974
  %976 = vset.pattern.permute.xlu0 1
  %977 = vperm.xlu0 %976, %v55
  %v978 = vpop.permute.xlu0 %977
  %979 = vset.pattern.permute.xlu0 1
  %980 = vperm.xlu0 %979, %v56
  %v981 = vpop.permute.xlu0 %980
  %982 = vset.pattern.permute.xlu0 1
  %983 = vperm.xlu0 %982, %v57
  %v984 = vpop.permute.xlu0 %983
  %985 = vset.pattern.permute.xlu0 1
  %986 = vperm.xlu0 %985, %v58
  %v987 = vpop.permute.xlu0 %986
  %988 = vset.pattern.permute.xlu0 1
  %989 = vperm.xlu0 %988, %v59
  %v990 = vpop.permute.xlu0 %989
  %991 = vset.pattern.permute.xlu0 1
  %992 = vperm.xlu0 %991, %v60
  %v993 = vpop.permute.xlu0 %992
  %994 = vset.pattern.permute.xlu0 1
  %995 = vperm.xlu0 %994, %v61
  %v996 = vpop.permute.xlu0 %995
  %997 = vset.pattern.permute.xlu0 1
  %998 = vperm.xlu0 %997, %v62
  %v999 = vpop.permute.xlu0 %998
  %1000 = vset.pattern.permute.xlu0 1
  %1001 = vperm.xlu0 %1000, %v63
  %v1002 = vpop.permute.xlu0 %1001
  %1003 = vset.pattern.permute.xlu0 1
  %1004 = vperm.xlu0 %1003, %v64
  %v1005 = vpop.permute.xlu0 %1004
  %1006 = vset.pattern.permute.xlu0 1
  %1007 = vperm.xlu0 %1006, %v65
  %v1008 = vpop.permute.xlu0 %1007
  %1009 = vset.pattern.permute.xlu0 1
  %1010 = vperm.xlu0 %1009, %v66
  %v1011 = vpop.permute.xlu0 %1010
  %1012 = vset.pattern.permute.xlu0 1
  %1013 = vperm.xlu0 %1012, %v67
  %v1014 = vpop.permute.xlu0 %1013
  %1015 = vset.pattern.permute.xlu0 1
  %1016 = vperm.xlu0 %1015, %v68
  %v1017 = vpop.permute.xlu0 %1016
  %1018 = vset.pattern.permute.xlu0 1
  %1019 = vperm.xlu0 %1018, %v69
  %v1020 = vpop.permute.xlu0 %1019
  %1021 = vset.pattern.permute.xlu0 1
  %1022 = vperm.xlu0 %1021, %v70
  %v1023 = vpop.permute.xlu0 %1022
  %1024 = vset.pattern.permute.xlu0 1
  %1025 = vperm.xlu0 %1024, %v71
  %v1026 = vpop.permute.xlu0 %1025
  %1027 = vset.pattern.permute.xlu0 1
  %1028 = vperm.xlu0 %1027, %v72
  %v1029 = vpop.permute.xlu0 %1028
  %1030 = vset.pattern.permute.xlu0 1
  %1031 = vperm.xlu0 %1030, %v73
  %v1032 = vpop.permute.xlu0 %1031
  %1033 = vset.pattern.permute.xlu0 1
  %1034 = vperm.xlu0 %1033, %v74
  %v1035 = vpop.permute.xlu0 %1034
  %1036 = vset.pattern.permute.xlu0 1
  %1037 = vperm.xlu0 %1036, %v75
  %v1038 = vpop.permute.xlu0 %1037
  %vm1039 = vcmp.eq.s32.totalorder %v849, %v93
  %vm1040 = vcmp.eq.s32.totalorder %v852, %v93
  %vm1041 = vcmp.eq.s32.totalorder %v855, %v93
  %vm1042 = vcmp.eq.s32.totalorder %v858, %v93
  %vm1043 = vcmp.eq.s32.totalorder %v861, %v93
  %vm1044 = vcmp.eq.s32.totalorder %v864, %v93
  %vm1045 = vcmp.eq.s32.totalorder %v867, %v93
  %vm1046 = vcmp.eq.s32.totalorder %v870, %v93
  %vm1047 = vcmp.eq.s32.totalorder %v873, %v93
  %vm1048 = vcmp.eq.s32.totalorder %v876, %v93
  %vm1049 = vcmp.eq.s32.totalorder %v879, %v93
  %vm1050 = vcmp.eq.s32.totalorder %v882, %v93
  %vm1051 = vcmp.eq.s32.totalorder %v885, %v93
  %vm1052 = vcmp.eq.s32.totalorder %v888, %v93
  %vm1053 = vcmp.eq.s32.totalorder %v891, %v93
  %vm1054 = vcmp.eq.s32.totalorder %v894, %v93
  %vm1055 = vcmp.eq.s32.totalorder %v897, %v93
  %vm1056 = vcmp.eq.s32.totalorder %v900, %v93
  %vm1057 = vcmp.eq.s32.totalorder %v903, %v93
  %vm1058 = vcmp.eq.s32.totalorder %v906, %v93
  %vm1059 = vcmp.eq.s32.totalorder %v909, %v93
  %vm1060 = vcmp.eq.s32.totalorder %v912, %v93
  %vm1061 = vcmp.eq.s32.totalorder %v915, %v93
  %vm1062 = vcmp.eq.s32.totalorder %v918, %v93
  %vm1063 = vcmp.eq.s32.totalorder %v921, %v93
  %vm1064 = vcmp.eq.s32.totalorder %v924, %v93
  %vm1065 = vcmp.eq.s32.totalorder %v927, %v93
  %vm1066 = vcmp.eq.s32.totalorder %v930, %v93
  %vm1067 = vcmp.eq.s32.totalorder %v933, %v93
  %vm1068 = vcmp.eq.s32.totalorder %v936, %v93
  %vm1069 = vcmp.eq.s32.totalorder %v939, %v93
  %vm1070 = vcmp.eq.s32.totalorder %v942, %v93
  %vm1071 = vcmp.eq.s32.totalorder %v945, %v93
  %vm1072 = vcmp.eq.s32.totalorder %v948, %v93
  %vm1073 = vcmp.eq.s32.totalorder %v951, %v93
  %vm1074 = vcmp.eq.s32.totalorder %v954, %v93
  %vm1075 = vcmp.eq.s32.totalorder %v957, %v93
  %vm1076 = vcmp.eq.s32.totalorder %v960, %v93
  %vm1077 = vcmp.eq.s32.totalorder %v963, %v93
  %vm1078 = vcmp.eq.s32.totalorder %v966, %v93
  %vm1079 = vcmp.eq.s32.totalorder %v969, %v93
  %vm1080 = vcmp.eq.s32.totalorder %v972, %v93
  %vm1081 = vcmp.eq.s32.totalorder %v975, %v93
  %vm1082 = vcmp.eq.s32.totalorder %v978, %v93
  %vm1083 = vcmp.eq.s32.totalorder %v981, %v93
  %vm1084 = vcmp.eq.s32.totalorder %v984, %v93
  %vm1085 = vcmp.eq.s32.totalorder %v987, %v93
  %vm1086 = vcmp.eq.s32.totalorder %v990, %v93
  %vm1087 = vcmp.eq.s32.totalorder %v993, %v93
  %vm1088 = vcmp.eq.s32.totalorder %v996, %v93
  %vm1089 = vcmp.eq.s32.totalorder %v999, %v93
  %vm1090 = vcmp.eq.s32.totalorder %v1002, %v93
  %vm1091 = vcmp.eq.s32.totalorder %v1005, %v93
  %vm1092 = vcmp.eq.s32.totalorder %v1008, %v93
  %vm1093 = vcmp.eq.s32.totalorder %v1011, %v93
  %vm1094 = vcmp.eq.s32.totalorder %v1014, %v93
  %vm1095 = vcmp.eq.s32.totalorder %v1017, %v93
  %vm1096 = vcmp.eq.s32.totalorder %v1020, %v93
  %vm1097 = vcmp.eq.s32.totalorder %v1023, %v93
  %vm1098 = vcmp.eq.s32.totalorder %v1026, %v93
  %vm1099 = vcmp.eq.s32.totalorder %v1029, %v93
  %vm1100 = vcmp.eq.s32.totalorder %v1032, %v93
  %vm1101 = vcmp.eq.s32.totalorder %v1035, %v93
  %vm1102 = vcmp.eq.s32.totalorder %v1038, %v93
  %v1103 = vsel %vm1039, 1, 0
  %v1104 = vsel %vm1040, 1, 0
  %v1105 = vsel %vm1041, 1, 0
  %v1106 = vsel %vm1042, 1, 0
  %v1107 = vsel %vm1043, 1, 0
  %v1108 = vsel %vm1044, 1, 0
  %v1109 = vsel %vm1045, 1, 0
  %v1110 = vsel %vm1046, 1, 0
  %v1111 = vsel %vm1047, 1, 0
  %v1112 = vsel %vm1048, 1, 0
  %v1113 = vsel %vm1049, 1, 0
  %v1114 = vsel %vm1050, 1, 0
  %v1115 = vsel %vm1051, 1, 0
  %v1116 = vsel %vm1052, 1, 0
  %v1117 = vsel %vm1053, 1, 0
  %v1118 = vsel %vm1054, 1, 0
  %v1119 = vsel %vm1055, 1, 0
  %v1120 = vsel %vm1056, 1, 0
  %v1121 = vsel %vm1057, 1, 0
  %v1122 = vsel %vm1058, 1, 0
  %v1123 = vsel %vm1059, 1, 0
  %v1124 = vsel %vm1060, 1, 0
  %v1125 = vsel %vm1061, 1, 0
  %v1126 = vsel %vm1062, 1, 0
  %v1127 = vsel %vm1063, 1, 0
  %v1128 = vsel %vm1064, 1, 0
  %v1129 = vsel %vm1065, 1, 0
  %v1130 = vsel %vm1066, 1, 0
  %v1131 = vsel %vm1067, 1, 0
  %v1132 = vsel %vm1068, 1, 0
  %v1133 = vsel %vm1069, 1, 0
  %v1134 = vsel %vm1070, 1, 0
  %v1135 = vsel %vm1071, 1, 0
  %v1136 = vsel %vm1072, 1, 0
  %v1137 = vsel %vm1073, 1, 0
  %v1138 = vsel %vm1074, 1, 0
  %v1139 = vsel %vm1075, 1, 0
  %v1140 = vsel %vm1076, 1, 0
  %v1141 = vsel %vm1077, 1, 0
  %v1142 = vsel %vm1078, 1, 0
  %v1143 = vsel %vm1079, 1, 0
  %v1144 = vsel %vm1080, 1, 0
  %v1145 = vsel %vm1081, 1, 0
  %v1146 = vsel %vm1082, 1, 0
  %v1147 = vsel %vm1083, 1, 0
  %v1148 = vsel %vm1084, 1, 0
  %v1149 = vsel %vm1085, 1, 0
  %v1150 = vsel %vm1086, 1, 0
  %v1151 = vsel %vm1087, 1, 0
  %v1152 = vsel %vm1088, 1, 0
  %v1153 = vsel %vm1089, 1, 0
  %v1154 = vsel %vm1090, 1, 0
  %v1155 = vsel %vm1091, 1, 0
  %v1156 = vsel %vm1092, 1, 0
  %v1157 = vsel %vm1093, 1, 0
  %v1158 = vsel %vm1094, 1, 0
  %v1159 = vsel %vm1095, 1, 0
  %v1160 = vsel %vm1096, 1, 0
  %v1161 = vsel %vm1097, 1, 0
  %v1162 = vsel %vm1098, 1, 0
  %v1163 = vsel %vm1099, 1, 0
  %v1164 = vsel %vm1100, 1, 0
  %v1165 = vsel %vm1101, 1, 0
  %v1166 = vsel %vm1102, 1, 0
  %v1167 = vcvt.s32.f32 %v1103
  %v1168 = vcvt.s32.f32 %v1104
  %v1169 = vcvt.s32.f32 %v1105
  %v1170 = vcvt.s32.f32 %v1106
  %v1171 = vcvt.s32.f32 %v1107
  %v1172 = vcvt.s32.f32 %v1108
  %v1173 = vcvt.s32.f32 %v1109
  %v1174 = vcvt.s32.f32 %v1110
  %v1175 = vcvt.s32.f32 %v1111
  %v1176 = vcvt.s32.f32 %v1112
  %v1177 = vcvt.s32.f32 %v1113
  %v1178 = vcvt.s32.f32 %v1114
  %v1179 = vcvt.s32.f32 %v1115
  %v1180 = vcvt.s32.f32 %v1116
  %v1181 = vcvt.s32.f32 %v1117
  %v1182 = vcvt.s32.f32 %v1118
  %v1183 = vcvt.s32.f32 %v1119
  %v1184 = vcvt.s32.f32 %v1120
  %v1185 = vcvt.s32.f32 %v1121
  %v1186 = vcvt.s32.f32 %v1122
  %v1187 = vcvt.s32.f32 %v1123
  %v1188 = vcvt.s32.f32 %v1124
  %v1189 = vcvt.s32.f32 %v1125
  %v1190 = vcvt.s32.f32 %v1126
  %v1191 = vcvt.s32.f32 %v1127
  %v1192 = vcvt.s32.f32 %v1128
  %v1193 = vcvt.s32.f32 %v1129
  %v1194 = vcvt.s32.f32 %v1130
  %v1195 = vcvt.s32.f32 %v1131
  %v1196 = vcvt.s32.f32 %v1132
  %v1197 = vcvt.s32.f32 %v1133
  %v1198 = vcvt.s32.f32 %v1134
  %v1199 = vcvt.s32.f32 %v1135
  %v1200 = vcvt.s32.f32 %v1136
  %v1201 = vcvt.s32.f32 %v1137
  %v1202 = vcvt.s32.f32 %v1138
  %v1203 = vcvt.s32.f32 %v1139
  %v1204 = vcvt.s32.f32 %v1140
  %v1205 = vcvt.s32.f32 %v1141
  %v1206 = vcvt.s32.f32 %v1142
  %v1207 = vcvt.s32.f32 %v1143
  %v1208 = vcvt.s32.f32 %v1144
  %v1209 = vcvt.s32.f32 %v1145
  %v1210 = vcvt.s32.f32 %v1146
  %v1211 = vcvt.s32.f32 %v1147
  %v1212 = vcvt.s32.f32 %v1148
  %v1213 = vcvt.s32.f32 %v1149
  %v1214 = vcvt.s32.f32 %v1150
  %v1215 = vcvt.s32.f32 %v1151
  %v1216 = vcvt.s32.f32 %v1152
  %v1217 = vcvt.s32.f32 %v1153
  %v1218 = vcvt.s32.f32 %v1154
  %v1219 = vcvt.s32.f32 %v1155
  %v1220 = vcvt.s32.f32 %v1156
  %v1221 = vcvt.s32.f32 %v1157
  %v1222 = vcvt.s32.f32 %v1158
  %v1223 = vcvt.s32.f32 %v1159
  %v1224 = vcvt.s32.f32 %v1160
  %v1225 = vcvt.s32.f32 %v1161
  %v1226 = vcvt.s32.f32 %v1162
  %v1227 = vcvt.s32.f32 %v1163
  %v1228 = vcvt.s32.f32 %v1164
  %v1229 = vcvt.s32.f32 %v1165
  %v1230 = vcvt.s32.f32 %v1166
  %v1231 = vpack.c.bf16 %v1168, %v1167
  %v1232 = vpack.c.bf16 %v1170, %v1169
  %v1233 = vpack.c.bf16 %v1172, %v1171
  %v1234 = vpack.c.bf16 %v1174, %v1173
  %v1235 = vpack.c.bf16 %v1176, %v1175
  %v1236 = vpack.c.bf16 %v1178, %v1177
  %v1237 = vpack.c.bf16 %v1180, %v1179
  %v1238 = vpack.c.bf16 %v1182, %v1181
  %v1239 = vpack.c.bf16 %v1184, %v1183
  %v1240 = vpack.c.bf16 %v1186, %v1185
  %v1241 = vpack.c.bf16 %v1188, %v1187
  %v1242 = vpack.c.bf16 %v1190, %v1189
  %v1243 = vpack.c.bf16 %v1192, %v1191
  %v1244 = vpack.c.bf16 %v1194, %v1193
  %v1245 = vpack.c.bf16 %v1196, %v1195
  %v1246 = vpack.c.bf16 %v1198, %v1197
  %v1247 = vpack.c.bf16 %v1200, %v1199
  %v1248 = vpack.c.bf16 %v1202, %v1201
  %v1249 = vpack.c.bf16 %v1204, %v1203
  %v1250 = vpack.c.bf16 %v1206, %v1205
  %v1251 = vpack.c.bf16 %v1208, %v1207
  %v1252 = vpack.c.bf16 %v1210, %v1209
  %v1253 = vpack.c.bf16 %v1212, %v1211
  %v1254 = vpack.c.bf16 %v1214, %v1213
  %v1255 = vpack.c.bf16 %v1216, %v1215
  %v1256 = vpack.c.bf16 %v1218, %v1217
  %v1257 = vpack.c.bf16 %v1220, %v1219
  %v1258 = vpack.c.bf16 %v1222, %v1221
  %v1259 = vpack.c.bf16 %v1224, %v1223
  %v1260 = vpack.c.bf16 %v1226, %v1225
  %v1261 = vpack.c.bf16 %v1228, %v1227
  %v1262 = vpack.c.bf16 %v1230, %v1229
  %1263 = vmatprep.subr.bf16.mxu0 0
  %1264 = vmatpush1.bf16.msra.mxu0 %v542
  %1265 = vmatprep.subr.bf16.mxu0 0
  %1266 = vmatpush1.bf16.msra.mxu0 %v543
  %1267 = vmatprep.subr.bf16.mxu0 0
  %1268 = vmatpush1.bf16.msra.mxu0 %v544
  %1269 = vmatprep.subr.bf16.mxu0 0
  %1270 = vmatpush1.bf16.msra.mxu0 %v545
  %1271 = vmatprep.subr.bf16.mxu0 0
  %1272 = vmatpush1.bf16.msra.mxu0 %v546
  %1273 = vmatprep.subr.bf16.mxu0 0
  %1274 = vmatpush1.bf16.msra.mxu0 %v547
  %1275 = vmatprep.subr.bf16.mxu0 0
  %1276 = vmatpush1.bf16.msra.mxu0 %v548
  %1277 = vmatprep.subr.bf16.mxu0 0
  %1278 = vmatpush1.bf16.msra.mxu0 %v549
  %1279 = vmatprep.subr.bf16.mxu0 0
  %1280 = vmatpush1.bf16.msra.mxu0 0
  %1281 = vmatprep.subr.bf16.mxu0 0
  %1282 = vmatpush1.bf16.msra.mxu0 0
  %1283 = vmatprep.subr.bf16.mxu0 0
  %1284 = vmatpush1.bf16.msra.mxu0 0
  %1285 = vmatprep.subr.bf16.mxu0 0
  %1286 = vmatpush1.bf16.msra.mxu0 0
  %1287 = vmatprep.subr.bf16.mxu0 0
  %1288 = vmatpush1.bf16.msra.mxu0 0
  %1289 = vmatprep.subr.bf16.mxu0 0
  %1290 = vmatpush1.bf16.msra.mxu0 0
  %1291 = vmatprep.subr.bf16.mxu0 0
  %1292 = vmatpush1.bf16.msra.mxu0 0
  %1293 = vmatprep.subr.bf16.mxu0 0
  %1294 = vmatpush1.bf16.msra.mxu0 0
  %1295 = vmatprep.mubr.bf16.mxu0 0
  %1296 = vmatmul.mubr.bf16.gmra.mrb[0].mxu0 %v1231
  %v1297 = vpop.f32.mrb[0].mxu0
  %v1298 = vadd.f32 0.0, %v1297
  %v1299 = vpop.f32.mrb[0].mxu0
  %v1300 = vpop.f32.mrb[0].mxu0
  %v1301 = vadd.f32 0.0, %v1300
  %v1302 = vpop.f32.mrb[0].mxu0
  %1303 = vmatprep.mubr.bf16.mxu0 0
  %1304 = vmatmul.mubr.bf16.gmra.mrb[0].mxu0 %v1232
  %v1305 = vpop.f32.mrb[0].mxu0
  %v1306 = vadd.f32 0.0, %v1305
  %v1307 = vpop.f32.mrb[0].mxu0
  %v1308 = vpop.f32.mrb[0].mxu0
  %v1309 = vadd.f32 0.0, %v1308
  %v1310 = vpop.f32.mrb[0].mxu0
  %1311 = vmatprep.mubr.bf16.mxu0 0
  %1312 = vmatmul.mubr.bf16.gmra.mrb[0].mxu0 %v1233
  %v1313 = vpop.f32.mrb[0].mxu0
  %v1314 = vadd.f32 0.0, %v1313
  %v1315 = vpop.f32.mrb[0].mxu0
  %v1316 = vpop.f32.mrb[0].mxu0
  %v1317 = vadd.f32 0.0, %v1316
  %v1318 = vpop.f32.mrb[0].mxu0
  %1319 = vmatprep.mubr.bf16.mxu0 0
  %1320 = vmatmul.mubr.bf16.gmra.mrb[0].mxu0 %v1234
  %v1321 = vpop.f32.mrb[0].mxu0
  %v1322 = vadd.f32 0.0, %v1321
  %v1323 = vpop.f32.mrb[0].mxu0
  %v1324 = vpop.f32.mrb[0].mxu0
  %v1325 = vadd.f32 0.0, %v1324
  %v1326 = vpop.f32.mrb[0].mxu0
  %1327 = vmatprep.mubr.bf16.mxu0 0
  %1328 = vmatmul.mubr.bf16.gmra.mrb[0].mxu0 %v1235
  %v1329 = vpop.f32.mrb[0].mxu0
  %v1330 = vadd.f32 0.0, %v1329
  %v1331 = vpop.f32.mrb[0].mxu0
  %v1332 = vpop.f32.mrb[0].mxu0
  %v1333 = vadd.f32 0.0, %v1332
  %v1334 = vpop.f32.mrb[0].mxu0
  %1335 = vmatprep.mubr.bf16.mxu0 0
  %1336 = vmatmul.mubr.bf16.gmra.mrb[0].mxu0 %v1236
  %v1337 = vpop.f32.mrb[0].mxu0
  %v1338 = vadd.f32 0.0, %v1337
  %v1339 = vpop.f32.mrb[0].mxu0
  %v1340 = vpop.f32.mrb[0].mxu0
  %v1341 = vadd.f32 0.0, %v1340
  %v1342 = vpop.f32.mrb[0].mxu0
  %1343 = vmatprep.mubr.bf16.mxu0 0
  %1344 = vmatmul.mubr.bf16.gmra.mrb[0].mxu0 %v1237
  %v1345 = vpop.f32.mrb[0].mxu0
  %v1346 = vadd.f32 0.0, %v1345
  %v1347 = vpop.f32.mrb[0].mxu0
  %v1348 = vpop.f32.mrb[0].mxu0
  %v1349 = vadd.f32 0.0, %v1348
  %v1350 = vpop.f32.mrb[0].mxu0
  %1351 = vmatprep.mubr.bf16.mxu0 0
  %1352 = vmatmul.mubr.bf16.gmra.mrb[0].mxu0 %v1238
  %v1353 = vpop.f32.mrb[0].mxu0
  %v1354 = vadd.f32 0.0, %v1353
  %v1355 = vpop.f32.mrb[0].mxu0
  %v1356 = vpop.f32.mrb[0].mxu0
  %v1357 = vadd.f32 0.0, %v1356
  %v1358 = vpop.f32.mrb[0].mxu0
  %1359 = vmatprep.mubr.bf16.mxu0 0
  %1360 = vmatmul.mubr.bf16.gmra.mrb[0].mxu0 %v1239
  %v1361 = vpop.f32.mrb[0].mxu0
  %v1362 = vadd.f32 0.0, %v1361
  %v1363 = vpop.f32.mrb[0].mxu0
  %v1364 = vpop.f32.mrb[0].mxu0
  %v1365 = vadd.f32 0.0, %v1364
  %v1366 = vpop.f32.mrb[0].mxu0
  %1367 = vmatprep.mubr.bf16.mxu0 0
  %1368 = vmatmul.mubr.bf16.gmra.mrb[0].mxu0 %v1240
  %v1369 = vpop.f32.mrb[0].mxu0
  %v1370 = vadd.f32 0.0, %v1369
  %v1371 = vpop.f32.mrb[0].mxu0
  %v1372 = vpop.f32.mrb[0].mxu0
  %v1373 = vadd.f32 0.0, %v1372
  %v1374 = vpop.f32.mrb[0].mxu0
  %1375 = vmatprep.mubr.bf16.mxu0 0
  %1376 = vmatmul.mubr.bf16.gmra.mrb[0].mxu0 %v1241
  %v1377 = vpop.f32.mrb[0].mxu0
  %v1378 = vadd.f32 0.0, %v1377
  %v1379 = vpop.f32.mrb[0].mxu0
  %v1380 = vpop.f32.mrb[0].mxu0
  %v1381 = vadd.f32 0.0, %v1380
  %v1382 = vpop.f32.mrb[0].mxu0
  %1383 = vmatprep.mubr.bf16.mxu0 0
  %1384 = vmatmul.mubr.bf16.gmra.mrb[0].mxu0 %v1242
  %v1385 = vpop.f32.mrb[0].mxu0
  %v1386 = vadd.f32 0.0, %v1385
  %v1387 = vpop.f32.mrb[0].mxu0
  %v1388 = vpop.f32.mrb[0].mxu0
  %v1389 = vadd.f32 0.0, %v1388
  %v1390 = vpop.f32.mrb[0].mxu0
  %1391 = vmatprep.mubr.bf16.mxu0 0
  %1392 = vmatmul.mubr.bf16.gmra.mrb[0].mxu0 %v1243
  %v1393 = vpop.f32.mrb[0].mxu0
  %v1394 = vadd.f32 0.0, %v1393
  %v1395 = vpop.f32.mrb[0].mxu0
  %v1396 = vpop.f32.mrb[0].mxu0
  %v1397 = vadd.f32 0.0, %v1396
  %v1398 = vpop.f32.mrb[0].mxu0
  %1399 = vmatprep.mubr.bf16.mxu0 0
  %1400 = vmatmul.mubr.bf16.gmra.mrb[0].mxu0 %v1244
  %v1401 = vpop.f32.mrb[0].mxu0
  %v1402 = vadd.f32 0.0, %v1401
  %v1403 = vpop.f32.mrb[0].mxu0
  %v1404 = vpop.f32.mrb[0].mxu0
  %v1405 = vadd.f32 0.0, %v1404
  %v1406 = vpop.f32.mrb[0].mxu0
  %1407 = vmatprep.mubr.bf16.mxu0 0
  %1408 = vmatmul.mubr.bf16.gmra.mrb[0].mxu0 %v1245
  %v1409 = vpop.f32.mrb[0].mxu0
  %v1410 = vadd.f32 0.0, %v1409
  %v1411 = vpop.f32.mrb[0].mxu0
  %v1412 = vpop.f32.mrb[0].mxu0
  %v1413 = vadd.f32 0.0, %v1412
  %v1414 = vpop.f32.mrb[0].mxu0
  %1415 = vmatprep.mubr.bf16.mxu0 0
  %1416 = vmatmul.mubr.bf16.gmra.mrb[0].mxu0 %v1246
  %v1417 = vpop.f32.mrb[0].mxu0
  %v1418 = vadd.f32 0.0, %v1417
  %v1419 = vpop.f32.mrb[0].mxu0
  %v1420 = vpop.f32.mrb[0].mxu0
  %v1421 = vadd.f32 0.0, %v1420
  %v1422 = vpop.f32.mrb[0].mxu0
  %1423 = vmatprep.mubr.bf16.mxu0 0
  %1424 = vmatmul.mubr.bf16.gmra.mrb[0].mxu0 %v1247
  %v1425 = vpop.f32.mrb[0].mxu0
  %v1426 = vadd.f32 0.0, %v1425
  %v1427 = vpop.f32.mrb[0].mxu0
  %v1428 = vpop.f32.mrb[0].mxu0
  %v1429 = vadd.f32 0.0, %v1428
  %v1430 = vpop.f32.mrb[0].mxu0
  %1431 = vmatprep.mubr.bf16.mxu0 0
  %1432 = vmatmul.mubr.bf16.gmra.mrb[0].mxu0 %v1248
  %v1433 = vpop.f32.mrb[0].mxu0
  %v1434 = vadd.f32 0.0, %v1433
  %v1435 = vpop.f32.mrb[0].mxu0
  %v1436 = vpop.f32.mrb[0].mxu0
  %v1437 = vadd.f32 0.0, %v1436
  %v1438 = vpop.f32.mrb[0].mxu0
  %1439 = vmatprep.mubr.bf16.mxu0 0
  %1440 = vmatmul.mubr.bf16.gmra.mrb[0].mxu0 %v1249
  %v1441 = vpop.f32.mrb[0].mxu0
  %v1442 = vadd.f32 0.0, %v1441
  %v1443 = vpop.f32.mrb[0].mxu0
  %v1444 = vpop.f32.mrb[0].mxu0
  %v1445 = vadd.f32 0.0, %v1444
  %v1446 = vpop.f32.mrb[0].mxu0
  %1447 = vmatprep.mubr.bf16.mxu0 0
  %1448 = vmatmul.mubr.bf16.gmra.mrb[0].mxu0 %v1250
  %v1449 = vpop.f32.mrb[0].mxu0
  %v1450 = vadd.f32 0.0, %v1449
  %v1451 = vpop.f32.mrb[0].mxu0
  %v1452 = vpop.f32.mrb[0].mxu0
  %v1453 = vadd.f32 0.0, %v1452
  %v1454 = vpop.f32.mrb[0].mxu0
  %1455 = vmatprep.mubr.bf16.mxu0 0
  %1456 = vmatmul.mubr.bf16.gmra.mrb[0].mxu0 %v1251
  %v1457 = vpop.f32.mrb[0].mxu0
  %v1458 = vadd.f32 0.0, %v1457
  %v1459 = vpop.f32.mrb[0].mxu0
  %v1460 = vpop.f32.mrb[0].mxu0
  %v1461 = vadd.f32 0.0, %v1460
  %v1462 = vpop.f32.mrb[0].mxu0
  %1463 = vmatprep.mubr.bf16.mxu0 0
  %1464 = vmatmul.mubr.bf16.gmra.mrb[0].mxu0 %v1252
  %v1465 = vpop.f32.mrb[0].mxu0
  %v1466 = vadd.f32 0.0, %v1465
  %v1467 = vpop.f32.mrb[0].mxu0
  %v1468 = vpop.f32.mrb[0].mxu0
  %v1469 = vadd.f32 0.0, %v1468
  %v1470 = vpop.f32.mrb[0].mxu0
  %1471 = vmatprep.mubr.bf16.mxu0 0
  %1472 = vmatmul.mubr.bf16.gmra.mrb[0].mxu0 %v1253
  %v1473 = vpop.f32.mrb[0].mxu0
  %v1474 = vadd.f32 0.0, %v1473
  %v1475 = vpop.f32.mrb[0].mxu0
  %v1476 = vpop.f32.mrb[0].mxu0
  %v1477 = vadd.f32 0.0, %v1476
  %v1478 = vpop.f32.mrb[0].mxu0
  %1479 = vmatprep.mubr.bf16.mxu0 0
  %1480 = vmatmul.mubr.bf16.gmra.mrb[0].mxu0 %v1254
  %v1481 = vpop.f32.mrb[0].mxu0
  %v1482 = vadd.f32 0.0, %v1481
  %v1483 = vpop.f32.mrb[0].mxu0
  %v1484 = vpop.f32.mrb[0].mxu0
  %v1485 = vadd.f32 0.0, %v1484
  %v1486 = vpop.f32.mrb[0].mxu0
  %1487 = vmatprep.mubr.bf16.mxu0 0
  %1488 = vmatmul.mubr.bf16.gmra.mrb[0].mxu0 %v1255
  %v1489 = vpop.f32.mrb[0].mxu0
  %v1490 = vadd.f32 0.0, %v1489
  %v1491 = vpop.f32.mrb[0].mxu0
  %v1492 = vpop.f32.mrb[0].mxu0
  %v1493 = vadd.f32 0.0, %v1492
  %v1494 = vpop.f32.mrb[0].mxu0
  %1495 = vmatprep.mubr.bf16.mxu0 0
  %1496 = vmatmul.mubr.bf16.gmra.mrb[0].mxu0 %v1256
  %v1497 = vpop.f32.mrb[0].mxu0
  %v1498 = vadd.f32 0.0, %v1497
  %v1499 = vpop.f32.mrb[0].mxu0
  %v1500 = vpop.f32.mrb[0].mxu0
  %v1501 = vadd.f32 0.0, %v1500
  %v1502 = vpop.f32.mrb[0].mxu0
  %1503 = vmatprep.mubr.bf16.mxu0 0
  %1504 = vmatmul.mubr.bf16.gmra.mrb[0].mxu0 %v1257
  %v1505 = vpop.f32.mrb[0].mxu0
  %v1506 = vadd.f32 0.0, %v1505
  %v1507 = vpop.f32.mrb[0].mxu0
  %v1508 = vpop.f32.mrb[0].mxu0
  %v1509 = vadd.f32 0.0, %v1508
  %v1510 = vpop.f32.mrb[0].mxu0
  %1511 = vmatprep.mubr.bf16.mxu0 0
  %1512 = vmatmul.mubr.bf16.gmra.mrb[0].mxu0 %v1258
  %v1513 = vpop.f32.mrb[0].mxu0
  %v1514 = vadd.f32 0.0, %v1513
  %v1515 = vpop.f32.mrb[0].mxu0
  %v1516 = vpop.f32.mrb[0].mxu0
  %v1517 = vadd.f32 0.0, %v1516
  %v1518 = vpop.f32.mrb[0].mxu0
  %1519 = vmatprep.mubr.bf16.mxu0 0
  %1520 = vmatmul.mubr.bf16.gmra.mrb[0].mxu0 %v1259
  %v1521 = vpop.f32.mrb[0].mxu0
  %v1522 = vadd.f32 0.0, %v1521
  %v1523 = vpop.f32.mrb[0].mxu0
  %v1524 = vpop.f32.mrb[0].mxu0
  %v1525 = vadd.f32 0.0, %v1524
  %v1526 = vpop.f32.mrb[0].mxu0
  %1527 = vmatprep.mubr.bf16.mxu0 0
  %1528 = vmatmul.mubr.bf16.gmra.mrb[0].mxu0 %v1260
  %v1529 = vpop.f32.mrb[0].mxu0
  %v1530 = vadd.f32 0.0, %v1529
  %v1531 = vpop.f32.mrb[0].mxu0
  %v1532 = vpop.f32.mrb[0].mxu0
  %v1533 = vadd.f32 0.0, %v1532
  %v1534 = vpop.f32.mrb[0].mxu0
  %1535 = vmatprep.mubr.bf16.mxu0 0
  %1536 = vmatmul.mubr.bf16.gmra.mrb[0].mxu0 %v1261
  %v1537 = vpop.f32.mrb[0].mxu0
  %v1538 = vadd.f32 0.0, %v1537
  %v1539 = vpop.f32.mrb[0].mxu0
  %v1540 = vpop.f32.mrb[0].mxu0
  %v1541 = vadd.f32 0.0, %v1540
  %v1542 = vpop.f32.mrb[0].mxu0
  %1543 = vmatprep.mubr.bf16.mxu0 0
  %1544 = vmatmul.mubr.bf16.gmra.mrb[0].mxu0 %v1262
  %v1545 = vpop.f32.mrb[0].mxu0
  %v1546 = vadd.f32 0.0, %v1545
  %v1547 = vpop.f32.mrb[0].mxu0
  %v1548 = vpop.f32.mrb[0].mxu0
  %v1549 = vadd.f32 0.0, %v1548
  %v1550 = vpop.f32.mrb[0].mxu0
  %1551 = vdwg.mxu0
  %1552 = vset.pattern.permute.xlu0 2
  %1553 = vperm.xlu0 %1552, %v12
  %v1554 = vpop.permute.xlu0 %1553
  %1555 = vset.pattern.permute.xlu0 2
  %1556 = vperm.xlu0 %1555, %v13
  %v1557 = vpop.permute.xlu0 %1556
  %1558 = vset.pattern.permute.xlu0 2
  %1559 = vperm.xlu0 %1558, %v14
  %v1560 = vpop.permute.xlu0 %1559
  %1561 = vset.pattern.permute.xlu0 2
  %1562 = vperm.xlu0 %1561, %v15
  %v1563 = vpop.permute.xlu0 %1562
  %1564 = vset.pattern.permute.xlu0 2
  %1565 = vperm.xlu0 %1564, %v16
  %v1566 = vpop.permute.xlu0 %1565
  %1567 = vset.pattern.permute.xlu0 2
  %1568 = vperm.xlu0 %1567, %v17
  %v1569 = vpop.permute.xlu0 %1568
  %1570 = vset.pattern.permute.xlu0 2
  %1571 = vperm.xlu0 %1570, %v18
  %v1572 = vpop.permute.xlu0 %1571
  %1573 = vset.pattern.permute.xlu0 2
  %1574 = vperm.xlu0 %1573, %v19
  %v1575 = vpop.permute.xlu0 %1574
  %1576 = vset.pattern.permute.xlu0 2
  %1577 = vperm.xlu0 %1576, %v20
  %v1578 = vpop.permute.xlu0 %1577
  %1579 = vset.pattern.permute.xlu0 2
  %1580 = vperm.xlu0 %1579, %v21
  %v1581 = vpop.permute.xlu0 %1580
  %1582 = vset.pattern.permute.xlu0 2
  %1583 = vperm.xlu0 %1582, %v22
  %v1584 = vpop.permute.xlu0 %1583
  %1585 = vset.pattern.permute.xlu0 2
  %1586 = vperm.xlu0 %1585, %v23
  %v1587 = vpop.permute.xlu0 %1586
  %1588 = vset.pattern.permute.xlu0 2
  %1589 = vperm.xlu0 %1588, %v24
  %v1590 = vpop.permute.xlu0 %1589
  %1591 = vset.pattern.permute.xlu0 2
  %1592 = vperm.xlu0 %1591, %v25
  %v1593 = vpop.permute.xlu0 %1592
  %1594 = vset.pattern.permute.xlu0 2
  %1595 = vperm.xlu0 %1594, %v26
  %v1596 = vpop.permute.xlu0 %1595
  %1597 = vset.pattern.permute.xlu0 2
  %1598 = vperm.xlu0 %1597, %v27
  %v1599 = vpop.permute.xlu0 %1598
  %1600 = vset.pattern.permute.xlu0 2
  %1601 = vperm.xlu0 %1600, %v28
  %v1602 = vpop.permute.xlu0 %1601
  %1603 = vset.pattern.permute.xlu0 2
  %1604 = vperm.xlu0 %1603, %v29
  %v1605 = vpop.permute.xlu0 %1604
  %1606 = vset.pattern.permute.xlu0 2
  %1607 = vperm.xlu0 %1606, %v30
  %v1608 = vpop.permute.xlu0 %1607
  %1609 = vset.pattern.permute.xlu0 2
  %1610 = vperm.xlu0 %1609, %v31
  %v1611 = vpop.permute.xlu0 %1610
  %1612 = vset.pattern.permute.xlu0 2
  %1613 = vperm.xlu0 %1612, %v32
  %v1614 = vpop.permute.xlu0 %1613
  %1615 = vset.pattern.permute.xlu0 2
  %1616 = vperm.xlu0 %1615, %v33
  %v1617 = vpop.permute.xlu0 %1616
  %1618 = vset.pattern.permute.xlu0 2
  %1619 = vperm.xlu0 %1618, %v34
  %v1620 = vpop.permute.xlu0 %1619
  %1621 = vset.pattern.permute.xlu0 2
  %1622 = vperm.xlu0 %1621, %v35
  %v1623 = vpop.permute.xlu0 %1622
  %1624 = vset.pattern.permute.xlu0 2
  %1625 = vperm.xlu0 %1624, %v36
  %v1626 = vpop.permute.xlu0 %1625
  %1627 = vset.pattern.permute.xlu0 2
  %1628 = vperm.xlu0 %1627, %v37
  %v1629 = vpop.permute.xlu0 %1628
  %1630 = vset.pattern.permute.xlu0 2
  %1631 = vperm.xlu0 %1630, %v38
  %v1632 = vpop.permute.xlu0 %1631
  %1633 = vset.pattern.permute.xlu0 2
  %1634 = vperm.xlu0 %1633, %v39
  %v1635 = vpop.permute.xlu0 %1634
  %1636 = vset.pattern.permute.xlu0 2
  %1637 = vperm.xlu0 %1636, %v40
  %v1638 = vpop.permute.xlu0 %1637
  %1639 = vset.pattern.permute.xlu0 2
  %1640 = vperm.xlu0 %1639, %v41
  %v1641 = vpop.permute.xlu0 %1640
  %1642 = vset.pattern.permute.xlu0 2
  %1643 = vperm.xlu0 %1642, %v42
  %v1644 = vpop.permute.xlu0 %1643
  %1645 = vset.pattern.permute.xlu0 2
  %1646 = vperm.xlu0 %1645, %v43
  %v1647 = vpop.permute.xlu0 %1646
  %1648 = vset.pattern.permute.xlu0 2
  %1649 = vperm.xlu0 %1648, %v44
  %v1650 = vpop.permute.xlu0 %1649
  %1651 = vset.pattern.permute.xlu0 2
  %1652 = vperm.xlu0 %1651, %v45
  %v1653 = vpop.permute.xlu0 %1652
  %1654 = vset.pattern.permute.xlu0 2
  %1655 = vperm.xlu0 %1654, %v46
  %v1656 = vpop.permute.xlu0 %1655
  %1657 = vset.pattern.permute.xlu0 2
  %1658 = vperm.xlu0 %1657, %v47
  %v1659 = vpop.permute.xlu0 %1658
  %1660 = vset.pattern.permute.xlu0 2
  %1661 = vperm.xlu0 %1660, %v48
  %v1662 = vpop.permute.xlu0 %1661
  %1663 = vset.pattern.permute.xlu0 2
  %1664 = vperm.xlu0 %1663, %v49
  %v1665 = vpop.permute.xlu0 %1664
  %1666 = vset.pattern.permute.xlu0 2
  %1667 = vperm.xlu0 %1666, %v50
  %v1668 = vpop.permute.xlu0 %1667
  %1669 = vset.pattern.permute.xlu0 2
  %1670 = vperm.xlu0 %1669, %v51
  %v1671 = vpop.permute.xlu0 %1670
  %1672 = vset.pattern.permute.xlu0 2
  %1673 = vperm.xlu0 %1672, %v52
  %v1674 = vpop.permute.xlu0 %1673
  %1675 = vset.pattern.permute.xlu0 2
  %1676 = vperm.xlu0 %1675, %v53
  %v1677 = vpop.permute.xlu0 %1676
  %1678 = vset.pattern.permute.xlu0 2
  %1679 = vperm.xlu0 %1678, %v54
  %v1680 = vpop.permute.xlu0 %1679
  %1681 = vset.pattern.permute.xlu0 2
  %1682 = vperm.xlu0 %1681, %v55
  %v1683 = vpop.permute.xlu0 %1682
  %1684 = vset.pattern.permute.xlu0 2
  %1685 = vperm.xlu0 %1684, %v56
  %v1686 = vpop.permute.xlu0 %1685
  %1687 = vset.pattern.permute.xlu0 2
  %1688 = vperm.xlu0 %1687, %v57
  %v1689 = vpop.permute.xlu0 %1688
  %1690 = vset.pattern.permute.xlu0 2
  %1691 = vperm.xlu0 %1690, %v58
  %v1692 = vpop.permute.xlu0 %1691
  %1693 = vset.pattern.permute.xlu0 2
  %1694 = vperm.xlu0 %1693, %v59
  %v1695 = vpop.permute.xlu0 %1694
  %1696 = vset.pattern.permute.xlu0 2
  %1697 = vperm.xlu0 %1696, %v60
  %v1698 = vpop.permute.xlu0 %1697
  %1699 = vset.pattern.permute.xlu0 2
  %1700 = vperm.xlu0 %1699, %v61
  %v1701 = vpop.permute.xlu0 %1700
  %1702 = vset.pattern.permute.xlu0 2
  %1703 = vperm.xlu0 %1702, %v62
  %v1704 = vpop.permute.xlu0 %1703
  %1705 = vset.pattern.permute.xlu0 2
  %1706 = vperm.xlu0 %1705, %v63
  %v1707 = vpop.permute.xlu0 %1706
  %1708 = vset.pattern.permute.xlu0 2
  %1709 = vperm.xlu0 %1708, %v64
  %v1710 = vpop.permute.xlu0 %1709
  %1711 = vset.pattern.permute.xlu0 2
  %1712 = vperm.xlu0 %1711, %v65
  %v1713 = vpop.permute.xlu0 %1712
  %1714 = vset.pattern.permute.xlu0 2
  %1715 = vperm.xlu0 %1714, %v66
  %v1716 = vpop.permute.xlu0 %1715
  %1717 = vset.pattern.permute.xlu0 2
  %1718 = vperm.xlu0 %1717, %v67
  %v1719 = vpop.permute.xlu0 %1718
  %1720 = vset.pattern.permute.xlu0 2
  %1721 = vperm.xlu0 %1720, %v68
  %v1722 = vpop.permute.xlu0 %1721
  %1723 = vset.pattern.permute.xlu0 2
  %1724 = vperm.xlu0 %1723, %v69
  %v1725 = vpop.permute.xlu0 %1724
  %1726 = vset.pattern.permute.xlu0 2
  %1727 = vperm.xlu0 %1726, %v70
  %v1728 = vpop.permute.xlu0 %1727
  %1729 = vset.pattern.permute.xlu0 2
  %1730 = vperm.xlu0 %1729, %v71
  %v1731 = vpop.permute.xlu0 %1730
  %1732 = vset.pattern.permute.xlu0 2
  %1733 = vperm.xlu0 %1732, %v72
  %v1734 = vpop.permute.xlu0 %1733
  %1735 = vset.pattern.permute.xlu0 2
  %1736 = vperm.xlu0 %1735, %v73
  %v1737 = vpop.permute.xlu0 %1736
  %1738 = vset.pattern.permute.xlu0 2
  %1739 = vperm.xlu0 %1738, %v74
  %v1740 = vpop.permute.xlu0 %1739
  %1741 = vset.pattern.permute.xlu0 2
  %1742 = vperm.xlu0 %1741, %v75
  %v1743 = vpop.permute.xlu0 %1742
  %vm1744 = vcmp.eq.s32.totalorder %v1554, %v93
  %vm1745 = vcmp.eq.s32.totalorder %v1557, %v93
  %vm1746 = vcmp.eq.s32.totalorder %v1560, %v93
  %vm1747 = vcmp.eq.s32.totalorder %v1563, %v93
  %vm1748 = vcmp.eq.s32.totalorder %v1566, %v93
  %vm1749 = vcmp.eq.s32.totalorder %v1569, %v93
  %vm1750 = vcmp.eq.s32.totalorder %v1572, %v93
  %vm1751 = vcmp.eq.s32.totalorder %v1575, %v93
  %vm1752 = vcmp.eq.s32.totalorder %v1578, %v93
  %vm1753 = vcmp.eq.s32.totalorder %v1581, %v93
  %vm1754 = vcmp.eq.s32.totalorder %v1584, %v93
  %vm1755 = vcmp.eq.s32.totalorder %v1587, %v93
  %vm1756 = vcmp.eq.s32.totalorder %v1590, %v93
  %vm1757 = vcmp.eq.s32.totalorder %v1593, %v93
  %vm1758 = vcmp.eq.s32.totalorder %v1596, %v93
  %vm1759 = vcmp.eq.s32.totalorder %v1599, %v93
  %vm1760 = vcmp.eq.s32.totalorder %v1602, %v93
  %vm1761 = vcmp.eq.s32.totalorder %v1605, %v93
  %vm1762 = vcmp.eq.s32.totalorder %v1608, %v93
  %vm1763 = vcmp.eq.s32.totalorder %v1611, %v93
  %vm1764 = vcmp.eq.s32.totalorder %v1614, %v93
  %vm1765 = vcmp.eq.s32.totalorder %v1617, %v93
  %vm1766 = vcmp.eq.s32.totalorder %v1620, %v93
  %vm1767 = vcmp.eq.s32.totalorder %v1623, %v93
  %vm1768 = vcmp.eq.s32.totalorder %v1626, %v93
  %vm1769 = vcmp.eq.s32.totalorder %v1629, %v93
  %vm1770 = vcmp.eq.s32.totalorder %v1632, %v93
  %vm1771 = vcmp.eq.s32.totalorder %v1635, %v93
  %vm1772 = vcmp.eq.s32.totalorder %v1638, %v93
  %vm1773 = vcmp.eq.s32.totalorder %v1641, %v93
  %vm1774 = vcmp.eq.s32.totalorder %v1644, %v93
  %vm1775 = vcmp.eq.s32.totalorder %v1647, %v93
  %vm1776 = vcmp.eq.s32.totalorder %v1650, %v93
  %vm1777 = vcmp.eq.s32.totalorder %v1653, %v93
  %vm1778 = vcmp.eq.s32.totalorder %v1656, %v93
  %vm1779 = vcmp.eq.s32.totalorder %v1659, %v93
  %vm1780 = vcmp.eq.s32.totalorder %v1662, %v93
  %vm1781 = vcmp.eq.s32.totalorder %v1665, %v93
  %vm1782 = vcmp.eq.s32.totalorder %v1668, %v93
  %vm1783 = vcmp.eq.s32.totalorder %v1671, %v93
  %vm1784 = vcmp.eq.s32.totalorder %v1674, %v93
  %vm1785 = vcmp.eq.s32.totalorder %v1677, %v93
  %vm1786 = vcmp.eq.s32.totalorder %v1680, %v93
  %vm1787 = vcmp.eq.s32.totalorder %v1683, %v93
  %vm1788 = vcmp.eq.s32.totalorder %v1686, %v93
  %vm1789 = vcmp.eq.s32.totalorder %v1689, %v93
  %vm1790 = vcmp.eq.s32.totalorder %v1692, %v93
  %vm1791 = vcmp.eq.s32.totalorder %v1695, %v93
  %vm1792 = vcmp.eq.s32.totalorder %v1698, %v93
  %vm1793 = vcmp.eq.s32.totalorder %v1701, %v93
  %vm1794 = vcmp.eq.s32.totalorder %v1704, %v93
  %vm1795 = vcmp.eq.s32.totalorder %v1707, %v93
  %vm1796 = vcmp.eq.s32.totalorder %v1710, %v93
  %vm1797 = vcmp.eq.s32.totalorder %v1713, %v93
  %vm1798 = vcmp.eq.s32.totalorder %v1716, %v93
  %vm1799 = vcmp.eq.s32.totalorder %v1719, %v93
  %vm1800 = vcmp.eq.s32.totalorder %v1722, %v93
  %vm1801 = vcmp.eq.s32.totalorder %v1725, %v93
  %vm1802 = vcmp.eq.s32.totalorder %v1728, %v93
  %vm1803 = vcmp.eq.s32.totalorder %v1731, %v93
  %vm1804 = vcmp.eq.s32.totalorder %v1734, %v93
  %vm1805 = vcmp.eq.s32.totalorder %v1737, %v93
  %vm1806 = vcmp.eq.s32.totalorder %v1740, %v93
  %vm1807 = vcmp.eq.s32.totalorder %v1743, %v93
  %v1808 = vsel %vm1744, 1, 0
  %v1809 = vsel %vm1745, 1, 0
  %v1810 = vsel %vm1746, 1, 0
  %v1811 = vsel %vm1747, 1, 0
  %v1812 = vsel %vm1748, 1, 0
  %v1813 = vsel %vm1749, 1, 0
  %v1814 = vsel %vm1750, 1, 0
  %v1815 = vsel %vm1751, 1, 0
  %v1816 = vsel %vm1752, 1, 0
  %v1817 = vsel %vm1753, 1, 0
  %v1818 = vsel %vm1754, 1, 0
  %v1819 = vsel %vm1755, 1, 0
  %v1820 = vsel %vm1756, 1, 0
  %v1821 = vsel %vm1757, 1, 0
  %v1822 = vsel %vm1758, 1, 0
  %v1823 = vsel %vm1759, 1, 0
  %v1824 = vsel %vm1760, 1, 0
  %v1825 = vsel %vm1761, 1, 0
  %v1826 = vsel %vm1762, 1, 0
  %v1827 = vsel %vm1763, 1, 0
  %v1828 = vsel %vm1764, 1, 0
  %v1829 = vsel %vm1765, 1, 0
  %v1830 = vsel %vm1766, 1, 0
  %v1831 = vsel %vm1767, 1, 0
  %v1832 = vsel %vm1768, 1, 0
  %v1833 = vsel %vm1769, 1, 0
  %v1834 = vsel %vm1770, 1, 0
  %v1835 = vsel %vm1771, 1, 0
  %v1836 = vsel %vm1772, 1, 0
  %v1837 = vsel %vm1773, 1, 0
  %v1838 = vsel %vm1774, 1, 0
  %v1839 = vsel %vm1775, 1, 0
  %v1840 = vsel %vm1776, 1, 0
  %v1841 = vsel %vm1777, 1, 0
  %v1842 = vsel %vm1778, 1, 0
  %v1843 = vsel %vm1779, 1, 0
  %v1844 = vsel %vm1780, 1, 0
  %v1845 = vsel %vm1781, 1, 0
  %v1846 = vsel %vm1782, 1, 0
  %v1847 = vsel %vm1783, 1, 0
  %v1848 = vsel %vm1784, 1, 0
  %v1849 = vsel %vm1785, 1, 0
  %v1850 = vsel %vm1786, 1, 0
  %v1851 = vsel %vm1787, 1, 0
  %v1852 = vsel %vm1788, 1, 0
  %v1853 = vsel %vm1789, 1, 0
  %v1854 = vsel %vm1790, 1, 0
  %v1855 = vsel %vm1791, 1, 0
  %v1856 = vsel %vm1792, 1, 0
  %v1857 = vsel %vm1793, 1, 0
  %v1858 = vsel %vm1794, 1, 0
  %v1859 = vsel %vm1795, 1, 0
  %v1860 = vsel %vm1796, 1, 0
  %v1861 = vsel %vm1797, 1, 0
  %v1862 = vsel %vm1798, 1, 0
  %v1863 = vsel %vm1799, 1, 0
  %v1864 = vsel %vm1800, 1, 0
  %v1865 = vsel %vm1801, 1, 0
  %v1866 = vsel %vm1802, 1, 0
  %v1867 = vsel %vm1803, 1, 0
  %v1868 = vsel %vm1804, 1, 0
  %v1869 = vsel %vm1805, 1, 0
  %v1870 = vsel %vm1806, 1, 0
  %v1871 = vsel %vm1807, 1, 0
  %v1872 = vcvt.s32.f32 %v1808
  %v1873 = vcvt.s32.f32 %v1809
  %v1874 = vcvt.s32.f32 %v1810
  %v1875 = vcvt.s32.f32 %v1811
  %v1876 = vcvt.s32.f32 %v1812
  %v1877 = vcvt.s32.f32 %v1813
  %v1878 = vcvt.s32.f32 %v1814
  %v1879 = vcvt.s32.f32 %v1815
  %v1880 = vcvt.s32.f32 %v1816
  %v1881 = vcvt.s32.f32 %v1817
  %v1882 = vcvt.s32.f32 %v1818
  %v1883 = vcvt.s32.f32 %v1819
  %v1884 = vcvt.s32.f32 %v1820
  %v1885 = vcvt.s32.f32 %v1821
  %v1886 = vcvt.s32.f32 %v1822
  %v1887 = vcvt.s32.f32 %v1823
  %v1888 = vcvt.s32.f32 %v1824
  %v1889 = vcvt.s32.f32 %v1825
  %v1890 = vcvt.s32.f32 %v1826
  %v1891 = vcvt.s32.f32 %v1827
  %v1892 = vcvt.s32.f32 %v1828
  %v1893 = vcvt.s32.f32 %v1829
  %v1894 = vcvt.s32.f32 %v1830
  %v1895 = vcvt.s32.f32 %v1831
  %v1896 = vcvt.s32.f32 %v1832
  %v1897 = vcvt.s32.f32 %v1833
  %v1898 = vcvt.s32.f32 %v1834
  %v1899 = vcvt.s32.f32 %v1835
  %v1900 = vcvt.s32.f32 %v1836
  %v1901 = vcvt.s32.f32 %v1837
  %v1902 = vcvt.s32.f32 %v1838
  %v1903 = vcvt.s32.f32 %v1839
  %v1904 = vcvt.s32.f32 %v1840
  %v1905 = vcvt.s32.f32 %v1841
  %v1906 = vcvt.s32.f32 %v1842
  %v1907 = vcvt.s32.f32 %v1843
  %v1908 = vcvt.s32.f32 %v1844
  %v1909 = vcvt.s32.f32 %v1845
  %v1910 = vcvt.s32.f32 %v1846
  %v1911 = vcvt.s32.f32 %v1847
  %v1912 = vcvt.s32.f32 %v1848
  %v1913 = vcvt.s32.f32 %v1849
  %v1914 = vcvt.s32.f32 %v1850
  %v1915 = vcvt.s32.f32 %v1851
  %v1916 = vcvt.s32.f32 %v1852
  %v1917 = vcvt.s32.f32 %v1853
  %v1918 = vcvt.s32.f32 %v1854
  %v1919 = vcvt.s32.f32 %v1855
  %v1920 = vcvt.s32.f32 %v1856
  %v1921 = vcvt.s32.f32 %v1857
  %v1922 = vcvt.s32.f32 %v1858
  %v1923 = vcvt.s32.f32 %v1859
  %v1924 = vcvt.s32.f32 %v1860
  %v1925 = vcvt.s32.f32 %v1861
  %v1926 = vcvt.s32.f32 %v1862
  %v1927 = vcvt.s32.f32 %v1863
  %v1928 = vcvt.s32.f32 %v1864
  %v1929 = vcvt.s32.f32 %v1865
  %v1930 = vcvt.s32.f32 %v1866
  %v1931 = vcvt.s32.f32 %v1867
  %v1932 = vcvt.s32.f32 %v1868
  %v1933 = vcvt.s32.f32 %v1869
  %v1934 = vcvt.s32.f32 %v1870
  %v1935 = vcvt.s32.f32 %v1871
  %v1936 = vpack.c.bf16 %v1873, %v1872
  %v1937 = vpack.c.bf16 %v1875, %v1874
  %v1938 = vpack.c.bf16 %v1877, %v1876
  %v1939 = vpack.c.bf16 %v1879, %v1878
  %v1940 = vpack.c.bf16 %v1881, %v1880
  %v1941 = vpack.c.bf16 %v1883, %v1882
  %v1942 = vpack.c.bf16 %v1885, %v1884
  %v1943 = vpack.c.bf16 %v1887, %v1886
  %v1944 = vpack.c.bf16 %v1889, %v1888
  %v1945 = vpack.c.bf16 %v1891, %v1890
  %v1946 = vpack.c.bf16 %v1893, %v1892
  %v1947 = vpack.c.bf16 %v1895, %v1894
  %v1948 = vpack.c.bf16 %v1897, %v1896
  %v1949 = vpack.c.bf16 %v1899, %v1898
  %v1950 = vpack.c.bf16 %v1901, %v1900
  %v1951 = vpack.c.bf16 %v1903, %v1902
  %v1952 = vpack.c.bf16 %v1905, %v1904
  %v1953 = vpack.c.bf16 %v1907, %v1906
  %v1954 = vpack.c.bf16 %v1909, %v1908
  %v1955 = vpack.c.bf16 %v1911, %v1910
  %v1956 = vpack.c.bf16 %v1913, %v1912
  %v1957 = vpack.c.bf16 %v1915, %v1914
  %v1958 = vpack.c.bf16 %v1917, %v1916
  %v1959 = vpack.c.bf16 %v1919, %v1918
  %v1960 = vpack.c.bf16 %v1921, %v1920
  %v1961 = vpack.c.bf16 %v1923, %v1922
  %v1962 = vpack.c.bf16 %v1925, %v1924
  %v1963 = vpack.c.bf16 %v1927, %v1926
  %v1964 = vpack.c.bf16 %v1929, %v1928
  %v1965 = vpack.c.bf16 %v1931, %v1930
  %v1966 = vpack.c.bf16 %v1933, %v1932
  %v1967 = vpack.c.bf16 %v1935, %v1934
  %1968 = vmatprep.subr.bf16.mxu0 0
  %1969 = vmatpush1.bf16.msra.mxu0 %v542
  %1970 = vmatprep.subr.bf16.mxu0 0
  %1971 = vmatpush1.bf16.msra.mxu0 %v543
  %1972 = vmatprep.subr.bf16.mxu0 0
  %1973 = vmatpush1.bf16.msra.mxu0 %v544
  %1974 = vmatprep.subr.bf16.mxu0 0
  %1975 = vmatpush1.bf16.msra.mxu0 %v545
  %1976 = vmatprep.subr.bf16.mxu0 0
  %1977 = vmatpush1.bf16.msra.mxu0 %v546
  %1978 = vmatprep.subr.bf16.mxu0 0
  %1979 = vmatpush1.bf16.msra.mxu0 %v547
  %1980 = vmatprep.subr.bf16.mxu0 0
  %1981 = vmatpush1.bf16.msra.mxu0 %v548
  %1982 = vmatprep.subr.bf16.mxu0 0
  %1983 = vmatpush1.bf16.msra.mxu0 %v549
  %1984 = vmatprep.subr.bf16.mxu0 0
  %1985 = vmatpush1.bf16.msra.mxu0 0
  %1986 = vmatprep.subr.bf16.mxu0 0
  %1987 = vmatpush1.bf16.msra.mxu0 0
  %1988 = vmatprep.subr.bf16.mxu0 0
  %1989 = vmatpush1.bf16.msra.mxu0 0
  %1990 = vmatprep.subr.bf16.mxu0 0
  %1991 = vmatpush1.bf16.msra.mxu0 0
  %1992 = vmatprep.subr.bf16.mxu0 0
  %1993 = vmatpush1.bf16.msra.mxu0 0
  %1994 = vmatprep.subr.bf16.mxu0 0
  %1995 = vmatpush1.bf16.msra.mxu0 0
  %1996 = vmatprep.subr.bf16.mxu0 0
  %1997 = vmatpush1.bf16.msra.mxu0 0
  %1998 = vmatprep.subr.bf16.mxu0 0
  %1999 = vmatpush1.bf16.msra.mxu0 0
  %2000 = vmatprep.mubr.bf16.mxu0 0
  %2001 = vmatmul.mubr.bf16.gmra.mrb[0].mxu0 %v1936
  %v2002 = vpop.f32.mrb[0].mxu0
  %v2003 = vadd.f32 0.0, %v2002
  %v2004 = vpop.f32.mrb[0].mxu0
  %v2005 = vpop.f32.mrb[0].mxu0
  %v2006 = vadd.f32 0.0, %v2005
  %v2007 = vpop.f32.mrb[0].mxu0
  %2008 = vmatprep.mubr.bf16.mxu0 0
  %2009 = vmatmul.mubr.bf16.gmra.mrb[0].mxu0 %v1937
  %v2010 = vpop.f32.mrb[0].mxu0
  %v2011 = vadd.f32 0.0, %v2010
  %v2012 = vpop.f32.mrb[0].mxu0
  %v2013 = vpop.f32.mrb[0].mxu0
  %v2014 = vadd.f32 0.0, %v2013
  %v2015 = vpop.f32.mrb[0].mxu0
  %2016 = vmatprep.mubr.bf16.mxu0 0
  %2017 = vmatmul.mubr.bf16.gmra.mrb[0].mxu0 %v1938
  %v2018 = vpop.f32.mrb[0].mxu0
  %v2019 = vadd.f32 0.0, %v2018
  %v2020 = vpop.f32.mrb[0].mxu0
  %v2021 = vpop.f32.mrb[0].mxu0
  %v2022 = vadd.f32 0.0, %v2021
  %v2023 = vpop.f32.mrb[0].mxu0
  %2024 = vmatprep.mubr.bf16.mxu0 0
  %2025 = vmatmul.mubr.bf16.gmra.mrb[0].mxu0 %v1939
  %v2026 = vpop.f32.mrb[0].mxu0
  %v2027 = vadd.f32 0.0, %v2026
  %v2028 = vpop.f32.mrb[0].mxu0
  %v2029 = vpop.f32.mrb[0].mxu0
  %v2030 = vadd.f32 0.0, %v2029
  %v2031 = vpop.f32.mrb[0].mxu0
  %2032 = vmatprep.mubr.bf16.mxu0 0
  %2033 = vmatmul.mubr.bf16.gmra.mrb[0].mxu0 %v1940
  %v2034 = vpop.f32.mrb[0].mxu0
  %v2035 = vadd.f32 0.0, %v2034
  %v2036 = vpop.f32.mrb[0].mxu0
  %v2037 = vpop.f32.mrb[0].mxu0
  %v2038 = vadd.f32 0.0, %v2037
  %v2039 = vpop.f32.mrb[0].mxu0
  %2040 = vmatprep.mubr.bf16.mxu0 0
  %2041 = vmatmul.mubr.bf16.gmra.mrb[0].mxu0 %v1941
  %v2042 = vpop.f32.mrb[0].mxu0
  %v2043 = vadd.f32 0.0, %v2042
  %v2044 = vpop.f32.mrb[0].mxu0
  %v2045 = vpop.f32.mrb[0].mxu0
  %v2046 = vadd.f32 0.0, %v2045
  %v2047 = vpop.f32.mrb[0].mxu0
  %2048 = vmatprep.mubr.bf16.mxu0 0
  %2049 = vmatmul.mubr.bf16.gmra.mrb[0].mxu0 %v1942
  %v2050 = vpop.f32.mrb[0].mxu0
  %v2051 = vadd.f32 0.0, %v2050
  %v2052 = vpop.f32.mrb[0].mxu0
  %v2053 = vpop.f32.mrb[0].mxu0
  %v2054 = vadd.f32 0.0, %v2053
  %v2055 = vpop.f32.mrb[0].mxu0
  %2056 = vmatprep.mubr.bf16.mxu0 0
  %2057 = vmatmul.mubr.bf16.gmra.mrb[0].mxu0 %v1943
  %v2058 = vpop.f32.mrb[0].mxu0
  %v2059 = vadd.f32 0.0, %v2058
  %v2060 = vpop.f32.mrb[0].mxu0
  %v2061 = vpop.f32.mrb[0].mxu0
  %v2062 = vadd.f32 0.0, %v2061
  %v2063 = vpop.f32.mrb[0].mxu0
  %2064 = vmatprep.mubr.bf16.mxu0 0
  %2065 = vmatmul.mubr.bf16.gmra.mrb[0].mxu0 %v1944
  %v2066 = vpop.f32.mrb[0].mxu0
  %v2067 = vadd.f32 0.0, %v2066
  %v2068 = vpop.f32.mrb[0].mxu0
  %v2069 = vpop.f32.mrb[0].mxu0
  %v2070 = vadd.f32 0.0, %v2069
  %v2071 = vpop.f32.mrb[0].mxu0
  %2072 = vmatprep.mubr.bf16.mxu0 0
  %2073 = vmatmul.mubr.bf16.gmra.mrb[0].mxu0 %v1945
  %v2074 = vpop.f32.mrb[0].mxu0
  %v2075 = vadd.f32 0.0, %v2074
  %v2076 = vpop.f32.mrb[0].mxu0
  %v2077 = vpop.f32.mrb[0].mxu0
  %v2078 = vadd.f32 0.0, %v2077
  %v2079 = vpop.f32.mrb[0].mxu0
  %2080 = vmatprep.mubr.bf16.mxu0 0
  %2081 = vmatmul.mubr.bf16.gmra.mrb[0].mxu0 %v1946
  %v2082 = vpop.f32.mrb[0].mxu0
  %v2083 = vadd.f32 0.0, %v2082
  %v2084 = vpop.f32.mrb[0].mxu0
  %v2085 = vpop.f32.mrb[0].mxu0
  %v2086 = vadd.f32 0.0, %v2085
  %v2087 = vpop.f32.mrb[0].mxu0
  %2088 = vmatprep.mubr.bf16.mxu0 0
  %2089 = vmatmul.mubr.bf16.gmra.mrb[0].mxu0 %v1947
  %v2090 = vpop.f32.mrb[0].mxu0
  %v2091 = vadd.f32 0.0, %v2090
  %v2092 = vpop.f32.mrb[0].mxu0
  %v2093 = vpop.f32.mrb[0].mxu0
  %v2094 = vadd.f32 0.0, %v2093
  %v2095 = vpop.f32.mrb[0].mxu0
  %2096 = vmatprep.mubr.bf16.mxu0 0
  %2097 = vmatmul.mubr.bf16.gmra.mrb[0].mxu0 %v1948
  %v2098 = vpop.f32.mrb[0].mxu0
  %v2099 = vadd.f32 0.0, %v2098
  %v2100 = vpop.f32.mrb[0].mxu0
  %v2101 = vpop.f32.mrb[0].mxu0
  %v2102 = vadd.f32 0.0, %v2101
  %v2103 = vpop.f32.mrb[0].mxu0
  %2104 = vmatprep.mubr.bf16.mxu0 0
  %2105 = vmatmul.mubr.bf16.gmra.mrb[0].mxu0 %v1949
  %v2106 = vpop.f32.mrb[0].mxu0
  %v2107 = vadd.f32 0.0, %v2106
  %v2108 = vpop.f32.mrb[0].mxu0
  %v2109 = vpop.f32.mrb[0].mxu0
  %v2110 = vadd.f32 0.0, %v2109
  %v2111 = vpop.f32.mrb[0].mxu0
  %2112 = vmatprep.mubr.bf16.mxu0 0
  %2113 = vmatmul.mubr.bf16.gmra.mrb[0].mxu0 %v1950
  %v2114 = vpop.f32.mrb[0].mxu0
  %v2115 = vadd.f32 0.0, %v2114
  %v2116 = vpop.f32.mrb[0].mxu0
  %v2117 = vpop.f32.mrb[0].mxu0
  %v2118 = vadd.f32 0.0, %v2117
  %v2119 = vpop.f32.mrb[0].mxu0
  %2120 = vmatprep.mubr.bf16.mxu0 0
  %2121 = vmatmul.mubr.bf16.gmra.mrb[0].mxu0 %v1951
  %v2122 = vpop.f32.mrb[0].mxu0
  %v2123 = vadd.f32 0.0, %v2122
  %v2124 = vpop.f32.mrb[0].mxu0
  %v2125 = vpop.f32.mrb[0].mxu0
  %v2126 = vadd.f32 0.0, %v2125
  %v2127 = vpop.f32.mrb[0].mxu0
  %2128 = vmatprep.mubr.bf16.mxu0 0
  %2129 = vmatmul.mubr.bf16.gmra.mrb[0].mxu0 %v1952
  %v2130 = vpop.f32.mrb[0].mxu0
  %v2131 = vadd.f32 0.0, %v2130
  %v2132 = vpop.f32.mrb[0].mxu0
  %v2133 = vpop.f32.mrb[0].mxu0
  %v2134 = vadd.f32 0.0, %v2133
  %v2135 = vpop.f32.mrb[0].mxu0
  %2136 = vmatprep.mubr.bf16.mxu0 0
  %2137 = vmatmul.mubr.bf16.gmra.mrb[0].mxu0 %v1953
  %v2138 = vpop.f32.mrb[0].mxu0
  %v2139 = vadd.f32 0.0, %v2138
  %v2140 = vpop.f32.mrb[0].mxu0
  %v2141 = vpop.f32.mrb[0].mxu0
  %v2142 = vadd.f32 0.0, %v2141
  %v2143 = vpop.f32.mrb[0].mxu0
  %2144 = vmatprep.mubr.bf16.mxu0 0
  %2145 = vmatmul.mubr.bf16.gmra.mrb[0].mxu0 %v1954
  %v2146 = vpop.f32.mrb[0].mxu0
  %v2147 = vadd.f32 0.0, %v2146
  %v2148 = vpop.f32.mrb[0].mxu0
  %v2149 = vpop.f32.mrb[0].mxu0
  %v2150 = vadd.f32 0.0, %v2149
  %v2151 = vpop.f32.mrb[0].mxu0
  %2152 = vmatprep.mubr.bf16.mxu0 0
  %2153 = vmatmul.mubr.bf16.gmra.mrb[0].mxu0 %v1955
  %v2154 = vpop.f32.mrb[0].mxu0
  %v2155 = vadd.f32 0.0, %v2154
  %v2156 = vpop.f32.mrb[0].mxu0
  %v2157 = vpop.f32.mrb[0].mxu0
  %v2158 = vadd.f32 0.0, %v2157
  %v2159 = vpop.f32.mrb[0].mxu0
  %2160 = vmatprep.mubr.bf16.mxu0 0
  %2161 = vmatmul.mubr.bf16.gmra.mrb[0].mxu0 %v1956
  %v2162 = vpop.f32.mrb[0].mxu0
  %v2163 = vadd.f32 0.0, %v2162
  %v2164 = vpop.f32.mrb[0].mxu0
  %v2165 = vpop.f32.mrb[0].mxu0
  %v2166 = vadd.f32 0.0, %v2165
  %v2167 = vpop.f32.mrb[0].mxu0
  %2168 = vmatprep.mubr.bf16.mxu0 0
  %2169 = vmatmul.mubr.bf16.gmra.mrb[0].mxu0 %v1957
  %v2170 = vpop.f32.mrb[0].mxu0
  %v2171 = vadd.f32 0.0, %v2170
  %v2172 = vpop.f32.mrb[0].mxu0
  %v2173 = vpop.f32.mrb[0].mxu0
  %v2174 = vadd.f32 0.0, %v2173
  %v2175 = vpop.f32.mrb[0].mxu0
  %2176 = vmatprep.mubr.bf16.mxu0 0
  %2177 = vmatmul.mubr.bf16.gmra.mrb[0].mxu0 %v1958
  %v2178 = vpop.f32.mrb[0].mxu0
  %v2179 = vadd.f32 0.0, %v2178
  %v2180 = vpop.f32.mrb[0].mxu0
  %v2181 = vpop.f32.mrb[0].mxu0
  %v2182 = vadd.f32 0.0, %v2181
  %v2183 = vpop.f32.mrb[0].mxu0
  %2184 = vmatprep.mubr.bf16.mxu0 0
  %2185 = vmatmul.mubr.bf16.gmra.mrb[0].mxu0 %v1959
  %v2186 = vpop.f32.mrb[0].mxu0
  %v2187 = vadd.f32 0.0, %v2186
  %v2188 = vpop.f32.mrb[0].mxu0
  %v2189 = vpop.f32.mrb[0].mxu0
  %v2190 = vadd.f32 0.0, %v2189
  %v2191 = vpop.f32.mrb[0].mxu0
  %2192 = vmatprep.mubr.bf16.mxu0 0
  %2193 = vmatmul.mubr.bf16.gmra.mrb[0].mxu0 %v1960
  %v2194 = vpop.f32.mrb[0].mxu0
  %v2195 = vadd.f32 0.0, %v2194
  %v2196 = vpop.f32.mrb[0].mxu0
  %v2197 = vpop.f32.mrb[0].mxu0
  %v2198 = vadd.f32 0.0, %v2197
  %v2199 = vpop.f32.mrb[0].mxu0
  %2200 = vmatprep.mubr.bf16.mxu0 0
  %2201 = vmatmul.mubr.bf16.gmra.mrb[0].mxu0 %v1961
  %v2202 = vpop.f32.mrb[0].mxu0
  %v2203 = vadd.f32 0.0, %v2202
  %v2204 = vpop.f32.mrb[0].mxu0
  %v2205 = vpop.f32.mrb[0].mxu0
  %v2206 = vadd.f32 0.0, %v2205
  %v2207 = vpop.f32.mrb[0].mxu0
  %2208 = vmatprep.mubr.bf16.mxu0 0
  %2209 = vmatmul.mubr.bf16.gmra.mrb[0].mxu0 %v1962
  %v2210 = vpop.f32.mrb[0].mxu0
  %v2211 = vadd.f32 0.0, %v2210
  %v2212 = vpop.f32.mrb[0].mxu0
  %v2213 = vpop.f32.mrb[0].mxu0
  %v2214 = vadd.f32 0.0, %v2213
  %v2215 = vpop.f32.mrb[0].mxu0
  %2216 = vmatprep.mubr.bf16.mxu0 0
  %2217 = vmatmul.mubr.bf16.gmra.mrb[0].mxu0 %v1963
  %v2218 = vpop.f32.mrb[0].mxu0
  %v2219 = vadd.f32 0.0, %v2218
  %v2220 = vpop.f32.mrb[0].mxu0
  %v2221 = vpop.f32.mrb[0].mxu0
  %v2222 = vadd.f32 0.0, %v2221
  %v2223 = vpop.f32.mrb[0].mxu0
  %2224 = vmatprep.mubr.bf16.mxu0 0
  %2225 = vmatmul.mubr.bf16.gmra.mrb[0].mxu0 %v1964
  %v2226 = vpop.f32.mrb[0].mxu0
  %v2227 = vadd.f32 0.0, %v2226
  %v2228 = vpop.f32.mrb[0].mxu0
  %v2229 = vpop.f32.mrb[0].mxu0
  %v2230 = vadd.f32 0.0, %v2229
  %v2231 = vpop.f32.mrb[0].mxu0
  %2232 = vmatprep.mubr.bf16.mxu0 0
  %2233 = vmatmul.mubr.bf16.gmra.mrb[0].mxu0 %v1965
  %v2234 = vpop.f32.mrb[0].mxu0
  %v2235 = vadd.f32 0.0, %v2234
  %v2236 = vpop.f32.mrb[0].mxu0
  %v2237 = vpop.f32.mrb[0].mxu0
  %v2238 = vadd.f32 0.0, %v2237
  %v2239 = vpop.f32.mrb[0].mxu0
  %2240 = vmatprep.mubr.bf16.mxu0 0
  %2241 = vmatmul.mubr.bf16.gmra.mrb[0].mxu0 %v1966
  %v2242 = vpop.f32.mrb[0].mxu0
  %v2243 = vadd.f32 0.0, %v2242
  %v2244 = vpop.f32.mrb[0].mxu0
  %v2245 = vpop.f32.mrb[0].mxu0
  %v2246 = vadd.f32 0.0, %v2245
  %v2247 = vpop.f32.mrb[0].mxu0
  %2248 = vmatprep.mubr.bf16.mxu0 0
  %2249 = vmatmul.mubr.bf16.gmra.mrb[0].mxu0 %v1967
  %v2250 = vpop.f32.mrb[0].mxu0
  %v2251 = vadd.f32 0.0, %v2250
  %v2252 = vpop.f32.mrb[0].mxu0
  %v2253 = vpop.f32.mrb[0].mxu0
  %v2254 = vadd.f32 0.0, %v2253
  %v2255 = vpop.f32.mrb[0].mxu0
  %2256 = vdwg.mxu0
  %2257 = vset.pattern.permute.xlu0 3
  %2258 = vperm.xlu0 %2257, %v12
  %v2259 = vpop.permute.xlu0 %2258
  %2260 = vset.pattern.permute.xlu0 3
  %2261 = vperm.xlu0 %2260, %v13
  %v2262 = vpop.permute.xlu0 %2261
  %2263 = vset.pattern.permute.xlu0 3
  %2264 = vperm.xlu0 %2263, %v14
  %v2265 = vpop.permute.xlu0 %2264
  %2266 = vset.pattern.permute.xlu0 3
  %2267 = vperm.xlu0 %2266, %v15
  %v2268 = vpop.permute.xlu0 %2267
  %2269 = vset.pattern.permute.xlu0 3
  %2270 = vperm.xlu0 %2269, %v16
  %v2271 = vpop.permute.xlu0 %2270
  %2272 = vset.pattern.permute.xlu0 3
  %2273 = vperm.xlu0 %2272, %v17
  %v2274 = vpop.permute.xlu0 %2273
  %2275 = vset.pattern.permute.xlu0 3
  %2276 = vperm.xlu0 %2275, %v18
  %v2277 = vpop.permute.xlu0 %2276
  %2278 = vset.pattern.permute.xlu0 3
  %2279 = vperm.xlu0 %2278, %v19
  %v2280 = vpop.permute.xlu0 %2279
  %2281 = vset.pattern.permute.xlu0 3
  %2282 = vperm.xlu0 %2281, %v20
  %v2283 = vpop.permute.xlu0 %2282
  %2284 = vset.pattern.permute.xlu0 3
  %2285 = vperm.xlu0 %2284, %v21
  %v2286 = vpop.permute.xlu0 %2285
  %2287 = vset.pattern.permute.xlu0 3
  %2288 = vperm.xlu0 %2287, %v22
  %v2289 = vpop.permute.xlu0 %2288
  %2290 = vset.pattern.permute.xlu0 3
  %2291 = vperm.xlu0 %2290, %v23
  %v2292 = vpop.permute.xlu0 %2291
  %2293 = vset.pattern.permute.xlu0 3
  %2294 = vperm.xlu0 %2293, %v24
  %v2295 = vpop.permute.xlu0 %2294
  %2296 = vset.pattern.permute.xlu0 3
  %2297 = vperm.xlu0 %2296, %v25
  %v2298 = vpop.permute.xlu0 %2297
  %2299 = vset.pattern.permute.xlu0 3
  %2300 = vperm.xlu0 %2299, %v26
  %v2301 = vpop.permute.xlu0 %2300
  %2302 = vset.pattern.permute.xlu0 3
  %2303 = vperm.xlu0 %2302, %v27
  %v2304 = vpop.permute.xlu0 %2303
  %2305 = vset.pattern.permute.xlu0 3
  %2306 = vperm.xlu0 %2305, %v28
  %v2307 = vpop.permute.xlu0 %2306
  %2308 = vset.pattern.permute.xlu0 3
  %2309 = vperm.xlu0 %2308, %v29
  %v2310 = vpop.permute.xlu0 %2309
  %2311 = vset.pattern.permute.xlu0 3
  %2312 = vperm.xlu0 %2311, %v30
  %v2313 = vpop.permute.xlu0 %2312
  %2314 = vset.pattern.permute.xlu0 3
  %2315 = vperm.xlu0 %2314, %v31
  %v2316 = vpop.permute.xlu0 %2315
  %2317 = vset.pattern.permute.xlu0 3
  %2318 = vperm.xlu0 %2317, %v32
  %v2319 = vpop.permute.xlu0 %2318
  %2320 = vset.pattern.permute.xlu0 3
  %2321 = vperm.xlu0 %2320, %v33
  %v2322 = vpop.permute.xlu0 %2321
  %2323 = vset.pattern.permute.xlu0 3
  %2324 = vperm.xlu0 %2323, %v34
  %v2325 = vpop.permute.xlu0 %2324
  %2326 = vset.pattern.permute.xlu0 3
  %2327 = vperm.xlu0 %2326, %v35
  %v2328 = vpop.permute.xlu0 %2327
  %2329 = vset.pattern.permute.xlu0 3
  %2330 = vperm.xlu0 %2329, %v36
  %v2331 = vpop.permute.xlu0 %2330
  %2332 = vset.pattern.permute.xlu0 3
  %2333 = vperm.xlu0 %2332, %v37
  %v2334 = vpop.permute.xlu0 %2333
  %2335 = vset.pattern.permute.xlu0 3
  %2336 = vperm.xlu0 %2335, %v38
  %v2337 = vpop.permute.xlu0 %2336
  %2338 = vset.pattern.permute.xlu0 3
  %2339 = vperm.xlu0 %2338, %v39
  %v2340 = vpop.permute.xlu0 %2339
  %2341 = vset.pattern.permute.xlu0 3
  %2342 = vperm.xlu0 %2341, %v40
  %v2343 = vpop.permute.xlu0 %2342
  %2344 = vset.pattern.permute.xlu0 3
  %2345 = vperm.xlu0 %2344, %v41
  %v2346 = vpop.permute.xlu0 %2345
  %2347 = vset.pattern.permute.xlu0 3
  %2348 = vperm.xlu0 %2347, %v42
  %v2349 = vpop.permute.xlu0 %2348
  %2350 = vset.pattern.permute.xlu0 3
  %2351 = vperm.xlu0 %2350, %v43
  %v2352 = vpop.permute.xlu0 %2351
  %2353 = vset.pattern.permute.xlu0 3
  %2354 = vperm.xlu0 %2353, %v44
  %v2355 = vpop.permute.xlu0 %2354
  %2356 = vset.pattern.permute.xlu0 3
  %2357 = vperm.xlu0 %2356, %v45
  %v2358 = vpop.permute.xlu0 %2357
  %2359 = vset.pattern.permute.xlu0 3
  %2360 = vperm.xlu0 %2359, %v46
  %v2361 = vpop.permute.xlu0 %2360
  %2362 = vset.pattern.permute.xlu0 3
  %2363 = vperm.xlu0 %2362, %v47
  %v2364 = vpop.permute.xlu0 %2363
  %2365 = vset.pattern.permute.xlu0 3
  %2366 = vperm.xlu0 %2365, %v48
  %v2367 = vpop.permute.xlu0 %2366
  %2368 = vset.pattern.permute.xlu0 3
  %2369 = vperm.xlu0 %2368, %v49
  %v2370 = vpop.permute.xlu0 %2369
  %2371 = vset.pattern.permute.xlu0 3
  %2372 = vperm.xlu0 %2371, %v50
  %v2373 = vpop.permute.xlu0 %2372
  %2374 = vset.pattern.permute.xlu0 3
  %2375 = vperm.xlu0 %2374, %v51
  %v2376 = vpop.permute.xlu0 %2375
  %2377 = vset.pattern.permute.xlu0 3
  %2378 = vperm.xlu0 %2377, %v52
  %v2379 = vpop.permute.xlu0 %2378
  %2380 = vset.pattern.permute.xlu0 3
  %2381 = vperm.xlu0 %2380, %v53
  %v2382 = vpop.permute.xlu0 %2381
  %2383 = vset.pattern.permute.xlu0 3
  %2384 = vperm.xlu0 %2383, %v54
  %v2385 = vpop.permute.xlu0 %2384
  %2386 = vset.pattern.permute.xlu0 3
  %2387 = vperm.xlu0 %2386, %v55
  %v2388 = vpop.permute.xlu0 %2387
  %2389 = vset.pattern.permute.xlu0 3
  %2390 = vperm.xlu0 %2389, %v56
  %v2391 = vpop.permute.xlu0 %2390
  %2392 = vset.pattern.permute.xlu0 3
  %2393 = vperm.xlu0 %2392, %v57
  %v2394 = vpop.permute.xlu0 %2393
  %2395 = vset.pattern.permute.xlu0 3
  %2396 = vperm.xlu0 %2395, %v58
  %v2397 = vpop.permute.xlu0 %2396
  %2398 = vset.pattern.permute.xlu0 3
  %2399 = vperm.xlu0 %2398, %v59
  %v2400 = vpop.permute.xlu0 %2399
  %2401 = vset.pattern.permute.xlu0 3
  %2402 = vperm.xlu0 %2401, %v60
  %v2403 = vpop.permute.xlu0 %2402
  %2404 = vset.pattern.permute.xlu0 3
  %2405 = vperm.xlu0 %2404, %v61
  %v2406 = vpop.permute.xlu0 %2405
  %2407 = vset.pattern.permute.xlu0 3
  %2408 = vperm.xlu0 %2407, %v62
  %v2409 = vpop.permute.xlu0 %2408
  %2410 = vset.pattern.permute.xlu0 3
  %2411 = vperm.xlu0 %2410, %v63
  %v2412 = vpop.permute.xlu0 %2411
  %2413 = vset.pattern.permute.xlu0 3
  %2414 = vperm.xlu0 %2413, %v64
  %v2415 = vpop.permute.xlu0 %2414
  %2416 = vset.pattern.permute.xlu0 3
  %2417 = vperm.xlu0 %2416, %v65
  %v2418 = vpop.permute.xlu0 %2417
  %2419 = vset.pattern.permute.xlu0 3
  %2420 = vperm.xlu0 %2419, %v66
  %v2421 = vpop.permute.xlu0 %2420
  %2422 = vset.pattern.permute.xlu0 3
  %2423 = vperm.xlu0 %2422, %v67
  %v2424 = vpop.permute.xlu0 %2423
  %2425 = vset.pattern.permute.xlu0 3
  %2426 = vperm.xlu0 %2425, %v68
  %v2427 = vpop.permute.xlu0 %2426
  %2428 = vset.pattern.permute.xlu0 3
  %2429 = vperm.xlu0 %2428, %v69
  %v2430 = vpop.permute.xlu0 %2429
  %2431 = vset.pattern.permute.xlu0 3
  %2432 = vperm.xlu0 %2431, %v70
  %v2433 = vpop.permute.xlu0 %2432
  %2434 = vset.pattern.permute.xlu0 3
  %2435 = vperm.xlu0 %2434, %v71
  %v2436 = vpop.permute.xlu0 %2435
  %2437 = vset.pattern.permute.xlu0 3
  %2438 = vperm.xlu0 %2437, %v72
  %v2439 = vpop.permute.xlu0 %2438
  %2440 = vset.pattern.permute.xlu0 3
  %2441 = vperm.xlu0 %2440, %v73
  %v2442 = vpop.permute.xlu0 %2441
  %2443 = vset.pattern.permute.xlu0 3
  %2444 = vperm.xlu0 %2443, %v74
  %v2445 = vpop.permute.xlu0 %2444
  %2446 = vset.pattern.permute.xlu0 3
  %2447 = vperm.xlu0 %2446, %v75
  %v2448 = vpop.permute.xlu0 %2447
  %vm2449 = vcmp.eq.s32.totalorder %v2259, %v93
  %vm2450 = vcmp.eq.s32.totalorder %v2262, %v93
  %vm2451 = vcmp.eq.s32.totalorder %v2265, %v93
  %vm2452 = vcmp.eq.s32.totalorder %v2268, %v93
  %vm2453 = vcmp.eq.s32.totalorder %v2271, %v93
  %vm2454 = vcmp.eq.s32.totalorder %v2274, %v93
  %vm2455 = vcmp.eq.s32.totalorder %v2277, %v93
  %vm2456 = vcmp.eq.s32.totalorder %v2280, %v93
  %vm2457 = vcmp.eq.s32.totalorder %v2283, %v93
  %vm2458 = vcmp.eq.s32.totalorder %v2286, %v93
  %vm2459 = vcmp.eq.s32.totalorder %v2289, %v93
  %vm2460 = vcmp.eq.s32.totalorder %v2292, %v93
  %vm2461 = vcmp.eq.s32.totalorder %v2295, %v93
  %vm2462 = vcmp.eq.s32.totalorder %v2298, %v93
  %vm2463 = vcmp.eq.s32.totalorder %v2301, %v93
  %vm2464 = vcmp.eq.s32.totalorder %v2304, %v93
  %vm2465 = vcmp.eq.s32.totalorder %v2307, %v93
  %vm2466 = vcmp.eq.s32.totalorder %v2310, %v93
  %vm2467 = vcmp.eq.s32.totalorder %v2313, %v93
  %vm2468 = vcmp.eq.s32.totalorder %v2316, %v93
  %vm2469 = vcmp.eq.s32.totalorder %v2319, %v93
  %vm2470 = vcmp.eq.s32.totalorder %v2322, %v93
  %vm2471 = vcmp.eq.s32.totalorder %v2325, %v93
  %vm2472 = vcmp.eq.s32.totalorder %v2328, %v93
  %vm2473 = vcmp.eq.s32.totalorder %v2331, %v93
  %vm2474 = vcmp.eq.s32.totalorder %v2334, %v93
  %vm2475 = vcmp.eq.s32.totalorder %v2337, %v93
  %vm2476 = vcmp.eq.s32.totalorder %v2340, %v93
  %vm2477 = vcmp.eq.s32.totalorder %v2343, %v93
  %vm2478 = vcmp.eq.s32.totalorder %v2346, %v93
  %vm2479 = vcmp.eq.s32.totalorder %v2349, %v93
  %vm2480 = vcmp.eq.s32.totalorder %v2352, %v93
  %vm2481 = vcmp.eq.s32.totalorder %v2355, %v93
  %vm2482 = vcmp.eq.s32.totalorder %v2358, %v93
  %vm2483 = vcmp.eq.s32.totalorder %v2361, %v93
  %vm2484 = vcmp.eq.s32.totalorder %v2364, %v93
  %vm2485 = vcmp.eq.s32.totalorder %v2367, %v93
  %vm2486 = vcmp.eq.s32.totalorder %v2370, %v93
  %vm2487 = vcmp.eq.s32.totalorder %v2373, %v93
  %vm2488 = vcmp.eq.s32.totalorder %v2376, %v93
  %vm2489 = vcmp.eq.s32.totalorder %v2379, %v93
  %vm2490 = vcmp.eq.s32.totalorder %v2382, %v93
  %vm2491 = vcmp.eq.s32.totalorder %v2385, %v93
  %vm2492 = vcmp.eq.s32.totalorder %v2388, %v93
  %vm2493 = vcmp.eq.s32.totalorder %v2391, %v93
  %vm2494 = vcmp.eq.s32.totalorder %v2394, %v93
  %vm2495 = vcmp.eq.s32.totalorder %v2397, %v93
  %vm2496 = vcmp.eq.s32.totalorder %v2400, %v93
  %vm2497 = vcmp.eq.s32.totalorder %v2403, %v93
  %vm2498 = vcmp.eq.s32.totalorder %v2406, %v93
  %vm2499 = vcmp.eq.s32.totalorder %v2409, %v93
  %vm2500 = vcmp.eq.s32.totalorder %v2412, %v93
  %vm2501 = vcmp.eq.s32.totalorder %v2415, %v93
  %vm2502 = vcmp.eq.s32.totalorder %v2418, %v93
  %vm2503 = vcmp.eq.s32.totalorder %v2421, %v93
  %vm2504 = vcmp.eq.s32.totalorder %v2424, %v93
  %vm2505 = vcmp.eq.s32.totalorder %v2427, %v93
  %vm2506 = vcmp.eq.s32.totalorder %v2430, %v93
  %vm2507 = vcmp.eq.s32.totalorder %v2433, %v93
  %vm2508 = vcmp.eq.s32.totalorder %v2436, %v93
  %vm2509 = vcmp.eq.s32.totalorder %v2439, %v93
  %vm2510 = vcmp.eq.s32.totalorder %v2442, %v93
  %vm2511 = vcmp.eq.s32.totalorder %v2445, %v93
  %vm2512 = vcmp.eq.s32.totalorder %v2448, %v93
  %v2513 = vsel %vm2449, 1, 0
  %v2514 = vsel %vm2450, 1, 0
  %v2515 = vsel %vm2451, 1, 0
  %v2516 = vsel %vm2452, 1, 0
  %v2517 = vsel %vm2453, 1, 0
  %v2518 = vsel %vm2454, 1, 0
  %v2519 = vsel %vm2455, 1, 0
  %v2520 = vsel %vm2456, 1, 0
  %v2521 = vsel %vm2457, 1, 0
  %v2522 = vsel %vm2458, 1, 0
  %v2523 = vsel %vm2459, 1, 0
  %v2524 = vsel %vm2460, 1, 0
  %v2525 = vsel %vm2461, 1, 0
  %v2526 = vsel %vm2462, 1, 0
  %v2527 = vsel %vm2463, 1, 0
  %v2528 = vsel %vm2464, 1, 0
  %v2529 = vsel %vm2465, 1, 0
  %v2530 = vsel %vm2466, 1, 0
  %v2531 = vsel %vm2467, 1, 0
  %v2532 = vsel %vm2468, 1, 0
  %v2533 = vsel %vm2469, 1, 0
  %v2534 = vsel %vm2470, 1, 0
  %v2535 = vsel %vm2471, 1, 0
  %v2536 = vsel %vm2472, 1, 0
  %v2537 = vsel %vm2473, 1, 0
  %v2538 = vsel %vm2474, 1, 0
  %v2539 = vsel %vm2475, 1, 0
  %v2540 = vsel %vm2476, 1, 0
  %v2541 = vsel %vm2477, 1, 0
  %v2542 = vsel %vm2478, 1, 0
  %v2543 = vsel %vm2479, 1, 0
  %v2544 = vsel %vm2480, 1, 0
  %v2545 = vsel %vm2481, 1, 0
  %v2546 = vsel %vm2482, 1, 0
  %v2547 = vsel %vm2483, 1, 0
  %v2548 = vsel %vm2484, 1, 0
  %v2549 = vsel %vm2485, 1, 0
  %v2550 = vsel %vm2486, 1, 0
  %v2551 = vsel %vm2487, 1, 0
  %v2552 = vsel %vm2488, 1, 0
  %v2553 = vsel %vm2489, 1, 0
  %v2554 = vsel %vm2490, 1, 0
  %v2555 = vsel %vm2491, 1, 0
  %v2556 = vsel %vm2492, 1, 0
  %v2557 = vsel %vm2493, 1, 0
  %v2558 = vsel %vm2494, 1, 0
  %v2559 = vsel %vm2495, 1, 0
  %v2560 = vsel %vm2496, 1, 0
  %v2561 = vsel %vm2497, 1, 0
  %v2562 = vsel %vm2498, 1, 0
  %v2563 = vsel %vm2499, 1, 0
  %v2564 = vsel %vm2500, 1, 0
  %v2565 = vsel %vm2501, 1, 0
  %v2566 = vsel %vm2502, 1, 0
  %v2567 = vsel %vm2503, 1, 0
  %v2568 = vsel %vm2504, 1, 0
  %v2569 = vsel %vm2505, 1, 0
  %v2570 = vsel %vm2506, 1, 0
  %v2571 = vsel %vm2507, 1, 0
  %v2572 = vsel %vm2508, 1, 0
  %v2573 = vsel %vm2509, 1, 0
  %v2574 = vsel %vm2510, 1, 0
  %v2575 = vsel %vm2511, 1, 0
  %v2576 = vsel %vm2512, 1, 0
  %v2577 = vcvt.s32.f32 %v2513
  %v2578 = vcvt.s32.f32 %v2514
  %v2579 = vcvt.s32.f32 %v2515
  %v2580 = vcvt.s32.f32 %v2516
  %v2581 = vcvt.s32.f32 %v2517
  %v2582 = vcvt.s32.f32 %v2518
  %v2583 = vcvt.s32.f32 %v2519
  %v2584 = vcvt.s32.f32 %v2520
  %v2585 = vcvt.s32.f32 %v2521
  %v2586 = vcvt.s32.f32 %v2522
  %v2587 = vcvt.s32.f32 %v2523
  %v2588 = vcvt.s32.f32 %v2524
  %v2589 = vcvt.s32.f32 %v2525
  %v2590 = vcvt.s32.f32 %v2526
  %v2591 = vcvt.s32.f32 %v2527
  %v2592 = vcvt.s32.f32 %v2528
  %v2593 = vcvt.s32.f32 %v2529
  %v2594 = vcvt.s32.f32 %v2530
  %v2595 = vcvt.s32.f32 %v2531
  %v2596 = vcvt.s32.f32 %v2532
  %v2597 = vcvt.s32.f32 %v2533
  %v2598 = vcvt.s32.f32 %v2534
  %v2599 = vcvt.s32.f32 %v2535
  %v2600 = vcvt.s32.f32 %v2536
  %v2601 = vcvt.s32.f32 %v2537
  %v2602 = vcvt.s32.f32 %v2538
  %v2603 = vcvt.s32.f32 %v2539
  %v2604 = vcvt.s32.f32 %v2540
  %v2605 = vcvt.s32.f32 %v2541
  %v2606 = vcvt.s32.f32 %v2542
  %v2607 = vcvt.s32.f32 %v2543
  %v2608 = vcvt.s32.f32 %v2544
  %v2609 = vcvt.s32.f32 %v2545
  %v2610 = vcvt.s32.f32 %v2546
  %v2611 = vcvt.s32.f32 %v2547
  %v2612 = vcvt.s32.f32 %v2548
  %v2613 = vcvt.s32.f32 %v2549
  %v2614 = vcvt.s32.f32 %v2550
  %v2615 = vcvt.s32.f32 %v2551
  %v2616 = vcvt.s32.f32 %v2552
  %v2617 = vcvt.s32.f32 %v2553
  %v2618 = vcvt.s32.f32 %v2554
  %v2619 = vcvt.s32.f32 %v2555
  %v2620 = vcvt.s32.f32 %v2556
  %v2621 = vcvt.s32.f32 %v2557
  %v2622 = vcvt.s32.f32 %v2558
  %v2623 = vcvt.s32.f32 %v2559
  %v2624 = vcvt.s32.f32 %v2560
  %v2625 = vcvt.s32.f32 %v2561
  %v2626 = vcvt.s32.f32 %v2562
  %v2627 = vcvt.s32.f32 %v2563
  %v2628 = vcvt.s32.f32 %v2564
  %v2629 = vcvt.s32.f32 %v2565
  %v2630 = vcvt.s32.f32 %v2566
  %v2631 = vcvt.s32.f32 %v2567
  %v2632 = vcvt.s32.f32 %v2568
  %v2633 = vcvt.s32.f32 %v2569
  %v2634 = vcvt.s32.f32 %v2570
  %v2635 = vcvt.s32.f32 %v2571
  %v2636 = vcvt.s32.f32 %v2572
  %v2637 = vcvt.s32.f32 %v2573
  %v2638 = vcvt.s32.f32 %v2574
  %v2639 = vcvt.s32.f32 %v2575
  %v2640 = vcvt.s32.f32 %v2576
  %v2641 = vpack.c.bf16 %v2578, %v2577
  %v2642 = vpack.c.bf16 %v2580, %v2579
  %v2643 = vpack.c.bf16 %v2582, %v2581
  %v2644 = vpack.c.bf16 %v2584, %v2583
  %v2645 = vpack.c.bf16 %v2586, %v2585
  %v2646 = vpack.c.bf16 %v2588, %v2587
  %v2647 = vpack.c.bf16 %v2590, %v2589
  %v2648 = vpack.c.bf16 %v2592, %v2591
  %v2649 = vpack.c.bf16 %v2594, %v2593
  %v2650 = vpack.c.bf16 %v2596, %v2595
  %v2651 = vpack.c.bf16 %v2598, %v2597
  %v2652 = vpack.c.bf16 %v2600, %v2599
  %v2653 = vpack.c.bf16 %v2602, %v2601
  %v2654 = vpack.c.bf16 %v2604, %v2603
  %v2655 = vpack.c.bf16 %v2606, %v2605
  %v2656 = vpack.c.bf16 %v2608, %v2607
  %v2657 = vpack.c.bf16 %v2610, %v2609
  %v2658 = vpack.c.bf16 %v2612, %v2611
  %v2659 = vpack.c.bf16 %v2614, %v2613
  %v2660 = vpack.c.bf16 %v2616, %v2615
  %v2661 = vpack.c.bf16 %v2618, %v2617
  %v2662 = vpack.c.bf16 %v2620, %v2619
  %v2663 = vpack.c.bf16 %v2622, %v2621
  %v2664 = vpack.c.bf16 %v2624, %v2623
  %v2665 = vpack.c.bf16 %v2626, %v2625
  %v2666 = vpack.c.bf16 %v2628, %v2627
  %v2667 = vpack.c.bf16 %v2630, %v2629
  %v2668 = vpack.c.bf16 %v2632, %v2631
  %v2669 = vpack.c.bf16 %v2634, %v2633
  %v2670 = vpack.c.bf16 %v2636, %v2635
  %v2671 = vpack.c.bf16 %v2638, %v2637
  %v2672 = vpack.c.bf16 %v2640, %v2639
  %2673 = vmatprep.subr.bf16.mxu0 0
  %2674 = vmatpush1.bf16.msra.mxu0 %v542
  %2675 = vmatprep.subr.bf16.mxu0 0
  %2676 = vmatpush1.bf16.msra.mxu0 %v543
  %2677 = vmatprep.subr.bf16.mxu0 0
  %2678 = vmatpush1.bf16.msra.mxu0 %v544
  %2679 = vmatprep.subr.bf16.mxu0 0
  %2680 = vmatpush1.bf16.msra.mxu0 %v545
  %2681 = vmatprep.subr.bf16.mxu0 0
  %2682 = vmatpush1.bf16.msra.mxu0 %v546
  %2683 = vmatprep.subr.bf16.mxu0 0
  %2684 = vmatpush1.bf16.msra.mxu0 %v547
  %2685 = vmatprep.subr.bf16.mxu0 0
  %2686 = vmatpush1.bf16.msra.mxu0 %v548
  %2687 = vmatprep.subr.bf16.mxu0 0
  %2688 = vmatpush1.bf16.msra.mxu0 %v549
  %2689 = vmatprep.subr.bf16.mxu0 0
  %2690 = vmatpush1.bf16.msra.mxu0 0
  %2691 = vmatprep.subr.bf16.mxu0 0
  %2692 = vmatpush1.bf16.msra.mxu0 0
  %2693 = vmatprep.subr.bf16.mxu0 0
  %2694 = vmatpush1.bf16.msra.mxu0 0
  %2695 = vmatprep.subr.bf16.mxu0 0
  %2696 = vmatpush1.bf16.msra.mxu0 0
  %2697 = vmatprep.subr.bf16.mxu0 0
  %2698 = vmatpush1.bf16.msra.mxu0 0
  %2699 = vmatprep.subr.bf16.mxu0 0
  %2700 = vmatpush1.bf16.msra.mxu0 0
  %2701 = vmatprep.subr.bf16.mxu0 0
  %2702 = vmatpush1.bf16.msra.mxu0 0
  %2703 = vmatprep.subr.bf16.mxu0 0
  %2704 = vmatpush1.bf16.msra.mxu0 0
  %2705 = vmatprep.mubr.bf16.mxu0 0
  %2706 = vmatmul.mubr.bf16.gmra.mrb[0].mxu0 %v2641
  %v2707 = vpop.f32.mrb[0].mxu0
  %v2708 = vadd.f32 0.0, %v2707
  %v2709 = vpop.f32.mrb[0].mxu0
  %v2710 = vpop.f32.mrb[0].mxu0
  %v2711 = vadd.f32 0.0, %v2710
  %v2712 = vpop.f32.mrb[0].mxu0
  %2713 = vmatprep.mubr.bf16.mxu0 0
  %2714 = vmatmul.mubr.bf16.gmra.mrb[0].mxu0 %v2642
  %v2715 = vpop.f32.mrb[0].mxu0
  %v2716 = vadd.f32 0.0, %v2715
  %v2717 = vpop.f32.mrb[0].mxu0
  %v2718 = vpop.f32.mrb[0].mxu0
  %v2719 = vadd.f32 0.0, %v2718
  %v2720 = vpop.f32.mrb[0].mxu0
  %2721 = vmatprep.mubr.bf16.mxu0 0
  %2722 = vmatmul.mubr.bf16.gmra.mrb[0].mxu0 %v2643
  %v2723 = vpop.f32.mrb[0].mxu0
  %v2724 = vadd.f32 0.0, %v2723
  %v2725 = vpop.f32.mrb[0].mxu0
  %v2726 = vpop.f32.mrb[0].mxu0
  %v2727 = vadd.f32 0.0, %v2726
  %v2728 = vpop.f32.mrb[0].mxu0
  %2729 = vmatprep.mubr.bf16.mxu0 0
  %2730 = vmatmul.mubr.bf16.gmra.mrb[0].mxu0 %v2644
  %v2731 = vpop.f32.mrb[0].mxu0
  %v2732 = vadd.f32 0.0, %v2731
  %v2733 = vpop.f32.mrb[0].mxu0
  %v2734 = vpop.f32.mrb[0].mxu0
  %v2735 = vadd.f32 0.0, %v2734
  %v2736 = vpop.f32.mrb[0].mxu0
  %2737 = vmatprep.mubr.bf16.mxu0 0
  %2738 = vmatmul.mubr.bf16.gmra.mrb[0].mxu0 %v2645
  %v2739 = vpop.f32.mrb[0].mxu0
  %v2740 = vadd.f32 0.0, %v2739
  %v2741 = vpop.f32.mrb[0].mxu0
  %v2742 = vpop.f32.mrb[0].mxu0
  %v2743 = vadd.f32 0.0, %v2742
  %v2744 = vpop.f32.mrb[0].mxu0
  %2745 = vmatprep.mubr.bf16.mxu0 0
  %2746 = vmatmul.mubr.bf16.gmra.mrb[0].mxu0 %v2646
  %v2747 = vpop.f32.mrb[0].mxu0
  %v2748 = vadd.f32 0.0, %v2747
  %v2749 = vpop.f32.mrb[0].mxu0
  %v2750 = vpop.f32.mrb[0].mxu0
  %v2751 = vadd.f32 0.0, %v2750
  %v2752 = vpop.f32.mrb[0].mxu0
  %2753 = vmatprep.mubr.bf16.mxu0 0
  %2754 = vmatmul.mubr.bf16.gmra.mrb[0].mxu0 %v2647
  %v2755 = vpop.f32.mrb[0].mxu0
  %v2756 = vadd.f32 0.0, %v2755
  %v2757 = vpop.f32.mrb[0].mxu0
  %v2758 = vpop.f32.mrb[0].mxu0
  %v2759 = vadd.f32 0.0, %v2758
  %v2760 = vpop.f32.mrb[0].mxu0
  %2761 = vmatprep.mubr.bf16.mxu0 0
  %2762 = vmatmul.mubr.bf16.gmra.mrb[0].mxu0 %v2648
  %v2763 = vpop.f32.mrb[0].mxu0
  %v2764 = vadd.f32 0.0, %v2763
  %v2765 = vpop.f32.mrb[0].mxu0
  %v2766 = vpop.f32.mrb[0].mxu0
  %v2767 = vadd.f32 0.0, %v2766
  %v2768 = vpop.f32.mrb[0].mxu0
  %2769 = vmatprep.mubr.bf16.mxu0 0
  %2770 = vmatmul.mubr.bf16.gmra.mrb[0].mxu0 %v2649
  %v2771 = vpop.f32.mrb[0].mxu0
  %v2772 = vadd.f32 0.0, %v2771
  %v2773 = vpop.f32.mrb[0].mxu0
  %v2774 = vpop.f32.mrb[0].mxu0
  %v2775 = vadd.f32 0.0, %v2774
  %v2776 = vpop.f32.mrb[0].mxu0
  %2777 = vmatprep.mubr.bf16.mxu0 0
  %2778 = vmatmul.mubr.bf16.gmra.mrb[0].mxu0 %v2650
  %v2779 = vpop.f32.mrb[0].mxu0
  %v2780 = vadd.f32 0.0, %v2779
  %v2781 = vpop.f32.mrb[0].mxu0
  %v2782 = vpop.f32.mrb[0].mxu0
  %v2783 = vadd.f32 0.0, %v2782
  %v2784 = vpop.f32.mrb[0].mxu0
  %2785 = vmatprep.mubr.bf16.mxu0 0
  %2786 = vmatmul.mubr.bf16.gmra.mrb[0].mxu0 %v2651
  %v2787 = vpop.f32.mrb[0].mxu0
  %v2788 = vadd.f32 0.0, %v2787
  %v2789 = vpop.f32.mrb[0].mxu0
  %v2790 = vpop.f32.mrb[0].mxu0
  %v2791 = vadd.f32 0.0, %v2790
  %v2792 = vpop.f32.mrb[0].mxu0
  %2793 = vmatprep.mubr.bf16.mxu0 0
  %2794 = vmatmul.mubr.bf16.gmra.mrb[0].mxu0 %v2652
  %v2795 = vpop.f32.mrb[0].mxu0
  %v2796 = vadd.f32 0.0, %v2795
  %v2797 = vpop.f32.mrb[0].mxu0
  %v2798 = vpop.f32.mrb[0].mxu0
  %v2799 = vadd.f32 0.0, %v2798
  %v2800 = vpop.f32.mrb[0].mxu0
  %2801 = vmatprep.mubr.bf16.mxu0 0
  %2802 = vmatmul.mubr.bf16.gmra.mrb[0].mxu0 %v2653
  %v2803 = vpop.f32.mrb[0].mxu0
  %v2804 = vadd.f32 0.0, %v2803
  %v2805 = vpop.f32.mrb[0].mxu0
  %v2806 = vpop.f32.mrb[0].mxu0
  %v2807 = vadd.f32 0.0, %v2806
  %v2808 = vpop.f32.mrb[0].mxu0
  %2809 = vmatprep.mubr.bf16.mxu0 0
  %2810 = vmatmul.mubr.bf16.gmra.mrb[0].mxu0 %v2654
  %v2811 = vpop.f32.mrb[0].mxu0
  %v2812 = vadd.f32 0.0, %v2811
  %v2813 = vpop.f32.mrb[0].mxu0
  %v2814 = vpop.f32.mrb[0].mxu0
  %v2815 = vadd.f32 0.0, %v2814
  %v2816 = vpop.f32.mrb[0].mxu0
  %2817 = vmatprep.mubr.bf16.mxu0 0
  %2818 = vmatmul.mubr.bf16.gmra.mrb[0].mxu0 %v2655
  %v2819 = vpop.f32.mrb[0].mxu0
  %v2820 = vadd.f32 0.0, %v2819
  %v2821 = vpop.f32.mrb[0].mxu0
  %v2822 = vpop.f32.mrb[0].mxu0
  %v2823 = vadd.f32 0.0, %v2822
  %v2824 = vpop.f32.mrb[0].mxu0
  %2825 = vmatprep.mubr.bf16.mxu0 0
  %2826 = vmatmul.mubr.bf16.gmra.mrb[0].mxu0 %v2656
  %v2827 = vpop.f32.mrb[0].mxu0
  %v2828 = vadd.f32 0.0, %v2827
  %v2829 = vpop.f32.mrb[0].mxu0
  %v2830 = vpop.f32.mrb[0].mxu0
  %v2831 = vadd.f32 0.0, %v2830
  %v2832 = vpop.f32.mrb[0].mxu0
  %2833 = vmatprep.mubr.bf16.mxu0 0
  %2834 = vmatmul.mubr.bf16.gmra.mrb[0].mxu0 %v2657
  %v2835 = vpop.f32.mrb[0].mxu0
  %v2836 = vadd.f32 0.0, %v2835
  %v2837 = vpop.f32.mrb[0].mxu0
  %v2838 = vpop.f32.mrb[0].mxu0
  %v2839 = vadd.f32 0.0, %v2838
  %v2840 = vpop.f32.mrb[0].mxu0
  %2841 = vmatprep.mubr.bf16.mxu0 0
  %2842 = vmatmul.mubr.bf16.gmra.mrb[0].mxu0 %v2658
  %v2843 = vpop.f32.mrb[0].mxu0
  %v2844 = vadd.f32 0.0, %v2843
  %v2845 = vpop.f32.mrb[0].mxu0
  %v2846 = vpop.f32.mrb[0].mxu0
  %v2847 = vadd.f32 0.0, %v2846
  %v2848 = vpop.f32.mrb[0].mxu0
  %2849 = vmatprep.mubr.bf16.mxu0 0
  %2850 = vmatmul.mubr.bf16.gmra.mrb[0].mxu0 %v2659
  %v2851 = vpop.f32.mrb[0].mxu0
  %v2852 = vadd.f32 0.0, %v2851
  %v2853 = vpop.f32.mrb[0].mxu0
  %v2854 = vpop.f32.mrb[0].mxu0
  %v2855 = vadd.f32 0.0, %v2854
  %v2856 = vpop.f32.mrb[0].mxu0
  %2857 = vmatprep.mubr.bf16.mxu0 0
  %2858 = vmatmul.mubr.bf16.gmra.mrb[0].mxu0 %v2660
  %v2859 = vpop.f32.mrb[0].mxu0
  %v2860 = vadd.f32 0.0, %v2859
  %v2861 = vpop.f32.mrb[0].mxu0
  %v2862 = vpop.f32.mrb[0].mxu0
  %v2863 = vadd.f32 0.0, %v2862
  %v2864 = vpop.f32.mrb[0].mxu0
  %2865 = vmatprep.mubr.bf16.mxu0 0
  %2866 = vmatmul.mubr.bf16.gmra.mrb[0].mxu0 %v2661
  %v2867 = vpop.f32.mrb[0].mxu0
  %v2868 = vadd.f32 0.0, %v2867
  %v2869 = vpop.f32.mrb[0].mxu0
  %v2870 = vpop.f32.mrb[0].mxu0
  %v2871 = vadd.f32 0.0, %v2870
  %v2872 = vpop.f32.mrb[0].mxu0
  %2873 = vmatprep.mubr.bf16.mxu0 0
  %2874 = vmatmul.mubr.bf16.gmra.mrb[0].mxu0 %v2662
  %v2875 = vpop.f32.mrb[0].mxu0
  %v2876 = vadd.f32 0.0, %v2875
  %v2877 = vpop.f32.mrb[0].mxu0
  %v2878 = vpop.f32.mrb[0].mxu0
  %v2879 = vadd.f32 0.0, %v2878
  %v2880 = vpop.f32.mrb[0].mxu0
  %2881 = vmatprep.mubr.bf16.mxu0 0
  %2882 = vmatmul.mubr.bf16.gmra.mrb[0].mxu0 %v2663
  %v2883 = vpop.f32.mrb[0].mxu0
  %v2884 = vadd.f32 0.0, %v2883
  %v2885 = vpop.f32.mrb[0].mxu0
  %v2886 = vpop.f32.mrb[0].mxu0
  %v2887 = vadd.f32 0.0, %v2886
  %v2888 = vpop.f32.mrb[0].mxu0
  %2889 = vmatprep.mubr.bf16.mxu0 0
  %2890 = vmatmul.mubr.bf16.gmra.mrb[0].mxu0 %v2664
  %v2891 = vpop.f32.mrb[0].mxu0
  %v2892 = vadd.f32 0.0, %v2891
  %v2893 = vpop.f32.mrb[0].mxu0
  %v2894 = vpop.f32.mrb[0].mxu0
  %v2895 = vadd.f32 0.0, %v2894
  %v2896 = vpop.f32.mrb[0].mxu0
  %2897 = vmatprep.mubr.bf16.mxu0 0
  %2898 = vmatmul.mubr.bf16.gmra.mrb[0].mxu0 %v2665
  %v2899 = vpop.f32.mrb[0].mxu0
  %v2900 = vadd.f32 0.0, %v2899
  %v2901 = vpop.f32.mrb[0].mxu0
  %v2902 = vpop.f32.mrb[0].mxu0
  %v2903 = vadd.f32 0.0, %v2902
  %v2904 = vpop.f32.mrb[0].mxu0
  %2905 = vmatprep.mubr.bf16.mxu0 0
  %2906 = vmatmul.mubr.bf16.gmra.mrb[0].mxu0 %v2666
  %v2907 = vpop.f32.mrb[0].mxu0
  %v2908 = vadd.f32 0.0, %v2907
  %v2909 = vpop.f32.mrb[0].mxu0
  %v2910 = vpop.f32.mrb[0].mxu0
  %v2911 = vadd.f32 0.0, %v2910
  %v2912 = vpop.f32.mrb[0].mxu0
  %2913 = vmatprep.mubr.bf16.mxu0 0
  %2914 = vmatmul.mubr.bf16.gmra.mrb[0].mxu0 %v2667
  %v2915 = vpop.f32.mrb[0].mxu0
  %v2916 = vadd.f32 0.0, %v2915
  %v2917 = vpop.f32.mrb[0].mxu0
  %v2918 = vpop.f32.mrb[0].mxu0
  %v2919 = vadd.f32 0.0, %v2918
  %v2920 = vpop.f32.mrb[0].mxu0
  %2921 = vmatprep.mubr.bf16.mxu0 0
  %2922 = vmatmul.mubr.bf16.gmra.mrb[0].mxu0 %v2668
  %v2923 = vpop.f32.mrb[0].mxu0
  %v2924 = vadd.f32 0.0, %v2923
  %v2925 = vpop.f32.mrb[0].mxu0
  %v2926 = vpop.f32.mrb[0].mxu0
  %v2927 = vadd.f32 0.0, %v2926
  %v2928 = vpop.f32.mrb[0].mxu0
  %2929 = vmatprep.mubr.bf16.mxu0 0
  %2930 = vmatmul.mubr.bf16.gmra.mrb[0].mxu0 %v2669
  %v2931 = vpop.f32.mrb[0].mxu0
  %v2932 = vadd.f32 0.0, %v2931
  %v2933 = vpop.f32.mrb[0].mxu0
  %v2934 = vpop.f32.mrb[0].mxu0
  %v2935 = vadd.f32 0.0, %v2934
  %v2936 = vpop.f32.mrb[0].mxu0
  %2937 = vmatprep.mubr.bf16.mxu0 0
  %2938 = vmatmul.mubr.bf16.gmra.mrb[0].mxu0 %v2670
  %v2939 = vpop.f32.mrb[0].mxu0
  %v2940 = vadd.f32 0.0, %v2939
  %v2941 = vpop.f32.mrb[0].mxu0
  %v2942 = vpop.f32.mrb[0].mxu0
  %v2943 = vadd.f32 0.0, %v2942
  %v2944 = vpop.f32.mrb[0].mxu0
  %2945 = vmatprep.mubr.bf16.mxu0 0
  %2946 = vmatmul.mubr.bf16.gmra.mrb[0].mxu0 %v2671
  %v2947 = vpop.f32.mrb[0].mxu0
  %v2948 = vadd.f32 0.0, %v2947
  %v2949 = vpop.f32.mrb[0].mxu0
  %v2950 = vpop.f32.mrb[0].mxu0
  %v2951 = vadd.f32 0.0, %v2950
  %v2952 = vpop.f32.mrb[0].mxu0
  %2953 = vmatprep.mubr.bf16.mxu0 0
  %2954 = vmatmul.mubr.bf16.gmra.mrb[0].mxu0 %v2672
  %v2955 = vpop.f32.mrb[0].mxu0
  %v2956 = vadd.f32 0.0, %v2955
  %v2957 = vpop.f32.mrb[0].mxu0
  %v2958 = vpop.f32.mrb[0].mxu0
  %v2959 = vadd.f32 0.0, %v2958
  %v2960 = vpop.f32.mrb[0].mxu0
  %2961 = vdwg.mxu0
  %3026 = vrot.lane.b32.xlu0 %v1298, 32
  %v3027 = vpop.permute.xlu0 %3026
  %3028 = vrot.lane.b32.xlu0 %v1301, 32
  %v3029 = vpop.permute.xlu0 %3028
  %3030 = vrot.lane.b32.xlu0 %v1306, 32
  %v3031 = vpop.permute.xlu0 %3030
  %3032 = vrot.lane.b32.xlu0 %v1309, 32
  %v3033 = vpop.permute.xlu0 %3032
  %3034 = vrot.lane.b32.xlu0 %v1314, 32
  %v3035 = vpop.permute.xlu0 %3034
  %3036 = vrot.lane.b32.xlu0 %v1317, 32
  %v3037 = vpop.permute.xlu0 %3036
  %3038 = vrot.lane.b32.xlu0 %v1322, 32
  %v3039 = vpop.permute.xlu0 %3038
  %3040 = vrot.lane.b32.xlu0 %v1325, 32
  %v3041 = vpop.permute.xlu0 %3040
  %3042 = vrot.lane.b32.xlu0 %v1330, 32
  %v3043 = vpop.permute.xlu0 %3042
  %3044 = vrot.lane.b32.xlu0 %v1333, 32
  %v3045 = vpop.permute.xlu0 %3044
  %3046 = vrot.lane.b32.xlu0 %v1338, 32
  %v3047 = vpop.permute.xlu0 %3046
  %3048 = vrot.lane.b32.xlu0 %v1341, 32
  %v3049 = vpop.permute.xlu0 %3048
  %3050 = vrot.lane.b32.xlu0 %v1346, 32
  %v3051 = vpop.permute.xlu0 %3050
  %3052 = vrot.lane.b32.xlu0 %v1349, 32
  %v3053 = vpop.permute.xlu0 %3052
  %3054 = vrot.lane.b32.xlu0 %v1354, 32
  %v3055 = vpop.permute.xlu0 %3054
  %3056 = vrot.lane.b32.xlu0 %v1357, 32
  %v3057 = vpop.permute.xlu0 %3056
  %3058 = vrot.lane.b32.xlu0 %v1362, 32
  %v3059 = vpop.permute.xlu0 %3058
  %3060 = vrot.lane.b32.xlu0 %v1365, 32
  %v3061 = vpop.permute.xlu0 %3060
  %3062 = vrot.lane.b32.xlu0 %v1370, 32
  %v3063 = vpop.permute.xlu0 %3062
  %3064 = vrot.lane.b32.xlu0 %v1373, 32
  %v3065 = vpop.permute.xlu0 %3064
  %3066 = vrot.lane.b32.xlu0 %v1378, 32
  %v3067 = vpop.permute.xlu0 %3066
  %3068 = vrot.lane.b32.xlu0 %v1381, 32
  %v3069 = vpop.permute.xlu0 %3068
  %3070 = vrot.lane.b32.xlu0 %v1386, 32
  %v3071 = vpop.permute.xlu0 %3070
  %3072 = vrot.lane.b32.xlu0 %v1389, 32
  %v3073 = vpop.permute.xlu0 %3072
  %3074 = vrot.lane.b32.xlu0 %v1394, 32
  %v3075 = vpop.permute.xlu0 %3074
  %3076 = vrot.lane.b32.xlu0 %v1397, 32
  %v3077 = vpop.permute.xlu0 %3076
  %3078 = vrot.lane.b32.xlu0 %v1402, 32
  %v3079 = vpop.permute.xlu0 %3078
  %3080 = vrot.lane.b32.xlu0 %v1405, 32
  %v3081 = vpop.permute.xlu0 %3080
  %3082 = vrot.lane.b32.xlu0 %v1410, 32
  %v3083 = vpop.permute.xlu0 %3082
  %3084 = vrot.lane.b32.xlu0 %v1413, 32
  %v3085 = vpop.permute.xlu0 %3084
  %3086 = vrot.lane.b32.xlu0 %v1418, 32
  %v3087 = vpop.permute.xlu0 %3086
  %3088 = vrot.lane.b32.xlu0 %v1421, 32
  %v3089 = vpop.permute.xlu0 %3088
  %3090 = vrot.lane.b32.xlu0 %v1426, 32
  %v3091 = vpop.permute.xlu0 %3090
  %3092 = vrot.lane.b32.xlu0 %v1429, 32
  %v3093 = vpop.permute.xlu0 %3092
  %3094 = vrot.lane.b32.xlu0 %v1434, 32
  %v3095 = vpop.permute.xlu0 %3094
  %3096 = vrot.lane.b32.xlu0 %v1437, 32
  %v3097 = vpop.permute.xlu0 %3096
  %3098 = vrot.lane.b32.xlu0 %v1442, 32
  %v3099 = vpop.permute.xlu0 %3098
  %3100 = vrot.lane.b32.xlu0 %v1445, 32
  %v3101 = vpop.permute.xlu0 %3100
  %3102 = vrot.lane.b32.xlu0 %v1450, 32
  %v3103 = vpop.permute.xlu0 %3102
  %3104 = vrot.lane.b32.xlu0 %v1453, 32
  %v3105 = vpop.permute.xlu0 %3104
  %3106 = vrot.lane.b32.xlu0 %v1458, 32
  %v3107 = vpop.permute.xlu0 %3106
  %3108 = vrot.lane.b32.xlu0 %v1461, 32
  %v3109 = vpop.permute.xlu0 %3108
  %3110 = vrot.lane.b32.xlu0 %v1466, 32
  %v3111 = vpop.permute.xlu0 %3110
  %3112 = vrot.lane.b32.xlu0 %v1469, 32
  %v3113 = vpop.permute.xlu0 %3112
  %3114 = vrot.lane.b32.xlu0 %v1474, 32
  %v3115 = vpop.permute.xlu0 %3114
  %3116 = vrot.lane.b32.xlu0 %v1477, 32
  %v3117 = vpop.permute.xlu0 %3116
  %3118 = vrot.lane.b32.xlu0 %v1482, 32
  %v3119 = vpop.permute.xlu0 %3118
  %3120 = vrot.lane.b32.xlu0 %v1485, 32
  %v3121 = vpop.permute.xlu0 %3120
  %3122 = vrot.lane.b32.xlu0 %v1490, 32
  %v3123 = vpop.permute.xlu0 %3122
  %3124 = vrot.lane.b32.xlu0 %v1493, 32
  %v3125 = vpop.permute.xlu0 %3124
  %3126 = vrot.lane.b32.xlu0 %v1498, 32
  %v3127 = vpop.permute.xlu0 %3126
  %3128 = vrot.lane.b32.xlu0 %v1501, 32
  %v3129 = vpop.permute.xlu0 %3128
  %3130 = vrot.lane.b32.xlu0 %v1506, 32
  %v3131 = vpop.permute.xlu0 %3130
  %3132 = vrot.lane.b32.xlu0 %v1509, 32
  %v3133 = vpop.permute.xlu0 %3132
  %3134 = vrot.lane.b32.xlu0 %v1514, 32
  %v3135 = vpop.permute.xlu0 %3134
  %3136 = vrot.lane.b32.xlu0 %v1517, 32
  %v3137 = vpop.permute.xlu0 %3136
  %3138 = vrot.lane.b32.xlu0 %v1522, 32
  %v3139 = vpop.permute.xlu0 %3138
  %3140 = vrot.lane.b32.xlu0 %v1525, 32
  %v3141 = vpop.permute.xlu0 %3140
  %3142 = vrot.lane.b32.xlu0 %v1530, 32
  %v3143 = vpop.permute.xlu0 %3142
  %3144 = vrot.lane.b32.xlu0 %v1533, 32
  %v3145 = vpop.permute.xlu0 %3144
  %3146 = vrot.lane.b32.xlu0 %v1538, 32
  %v3147 = vpop.permute.xlu0 %3146
  %3148 = vrot.lane.b32.xlu0 %v1541, 32
  %v3149 = vpop.permute.xlu0 %3148
  %3150 = vrot.lane.b32.xlu0 %v1546, 32
  %v3151 = vpop.permute.xlu0 %3150
  %3152 = vrot.lane.b32.xlu0 %v1549, 32
  %v3153 = vpop.permute.xlu0 %3152
  %3282 = vrot.lane.b32.xlu0 %v2003, 64
  %v3283 = vpop.permute.xlu0 %3282
  %3284 = vrot.lane.b32.xlu0 %v2006, 64
  %v3285 = vpop.permute.xlu0 %3284
  %3286 = vrot.lane.b32.xlu0 %v2011, 64
  %v3287 = vpop.permute.xlu0 %3286
  %3288 = vrot.lane.b32.xlu0 %v2014, 64
  %v3289 = vpop.permute.xlu0 %3288
  %3290 = vrot.lane.b32.xlu0 %v2019, 64
  %v3291 = vpop.permute.xlu0 %3290
  %3292 = vrot.lane.b32.xlu0 %v2022, 64
  %v3293 = vpop.permute.xlu0 %3292
  %3294 = vrot.lane.b32.xlu0 %v2027, 64
  %v3295 = vpop.permute.xlu0 %3294
  %3296 = vrot.lane.b32.xlu0 %v2030, 64
  %v3297 = vpop.permute.xlu0 %3296
  %3298 = vrot.lane.b32.xlu0 %v2035, 64
  %v3299 = vpop.permute.xlu0 %3298
  %3300 = vrot.lane.b32.xlu0 %v2038, 64
  %v3301 = vpop.permute.xlu0 %3300
  %3302 = vrot.lane.b32.xlu0 %v2043, 64
  %v3303 = vpop.permute.xlu0 %3302
  %3304 = vrot.lane.b32.xlu0 %v2046, 64
  %v3305 = vpop.permute.xlu0 %3304
  %3306 = vrot.lane.b32.xlu0 %v2051, 64
  %v3307 = vpop.permute.xlu0 %3306
  %3308 = vrot.lane.b32.xlu0 %v2054, 64
  %v3309 = vpop.permute.xlu0 %3308
  %3310 = vrot.lane.b32.xlu0 %v2059, 64
  %v3311 = vpop.permute.xlu0 %3310
  %3312 = vrot.lane.b32.xlu0 %v2062, 64
  %v3313 = vpop.permute.xlu0 %3312
  %3314 = vrot.lane.b32.xlu0 %v2067, 64
  %v3315 = vpop.permute.xlu0 %3314
  %3316 = vrot.lane.b32.xlu0 %v2070, 64
  %v3317 = vpop.permute.xlu0 %3316
  %3318 = vrot.lane.b32.xlu0 %v2075, 64
  %v3319 = vpop.permute.xlu0 %3318
  %3320 = vrot.lane.b32.xlu0 %v2078, 64
  %v3321 = vpop.permute.xlu0 %3320
  %3322 = vrot.lane.b32.xlu0 %v2083, 64
  %v3323 = vpop.permute.xlu0 %3322
  %3324 = vrot.lane.b32.xlu0 %v2086, 64
  %v3325 = vpop.permute.xlu0 %3324
  %3326 = vrot.lane.b32.xlu0 %v2091, 64
  %v3327 = vpop.permute.xlu0 %3326
  %3328 = vrot.lane.b32.xlu0 %v2094, 64
  %v3329 = vpop.permute.xlu0 %3328
  %3330 = vrot.lane.b32.xlu0 %v2099, 64
  %v3331 = vpop.permute.xlu0 %3330
  %3332 = vrot.lane.b32.xlu0 %v2102, 64
  %v3333 = vpop.permute.xlu0 %3332
  %3334 = vrot.lane.b32.xlu0 %v2107, 64
  %v3335 = vpop.permute.xlu0 %3334
  %3336 = vrot.lane.b32.xlu0 %v2110, 64
  %v3337 = vpop.permute.xlu0 %3336
  %3338 = vrot.lane.b32.xlu0 %v2115, 64
  %v3339 = vpop.permute.xlu0 %3338
  %3340 = vrot.lane.b32.xlu0 %v2118, 64
  %v3341 = vpop.permute.xlu0 %3340
  %3342 = vrot.lane.b32.xlu0 %v2123, 64
  %v3343 = vpop.permute.xlu0 %3342
  %3344 = vrot.lane.b32.xlu0 %v2126, 64
  %v3345 = vpop.permute.xlu0 %3344
  %3346 = vrot.lane.b32.xlu0 %v2131, 64
  %v3347 = vpop.permute.xlu0 %3346
  %3348 = vrot.lane.b32.xlu0 %v2134, 64
  %v3349 = vpop.permute.xlu0 %3348
  %3350 = vrot.lane.b32.xlu0 %v2139, 64
  %v3351 = vpop.permute.xlu0 %3350
  %3352 = vrot.lane.b32.xlu0 %v2142, 64
  %v3353 = vpop.permute.xlu0 %3352
  %3354 = vrot.lane.b32.xlu0 %v2147, 64
  %v3355 = vpop.permute.xlu0 %3354
  %3356 = vrot.lane.b32.xlu0 %v2150, 64
  %v3357 = vpop.permute.xlu0 %3356
  %3358 = vrot.lane.b32.xlu0 %v2155, 64
  %v3359 = vpop.permute.xlu0 %3358
  %3360 = vrot.lane.b32.xlu0 %v2158, 64
  %v3361 = vpop.permute.xlu0 %3360
  %3362 = vrot.lane.b32.xlu0 %v2163, 64
  %v3363 = vpop.permute.xlu0 %3362
  %3364 = vrot.lane.b32.xlu0 %v2166, 64
  %v3365 = vpop.permute.xlu0 %3364
  %3366 = vrot.lane.b32.xlu0 %v2171, 64
  %v3367 = vpop.permute.xlu0 %3366
  %3368 = vrot.lane.b32.xlu0 %v2174, 64
  %v3369 = vpop.permute.xlu0 %3368
  %3370 = vrot.lane.b32.xlu0 %v2179, 64
  %v3371 = vpop.permute.xlu0 %3370
  %3372 = vrot.lane.b32.xlu0 %v2182, 64
  %v3373 = vpop.permute.xlu0 %3372
  %3374 = vrot.lane.b32.xlu0 %v2187, 64
  %v3375 = vpop.permute.xlu0 %3374
  %3376 = vrot.lane.b32.xlu0 %v2190, 64
  %v3377 = vpop.permute.xlu0 %3376
  %3378 = vrot.lane.b32.xlu0 %v2195, 64
  %v3379 = vpop.permute.xlu0 %3378
  %3380 = vrot.lane.b32.xlu0 %v2198, 64
  %v3381 = vpop.permute.xlu0 %3380
  %3382 = vrot.lane.b32.xlu0 %v2203, 64
  %v3383 = vpop.permute.xlu0 %3382
  %3384 = vrot.lane.b32.xlu0 %v2206, 64
  %v3385 = vpop.permute.xlu0 %3384
  %3386 = vrot.lane.b32.xlu0 %v2211, 64
  %v3387 = vpop.permute.xlu0 %3386
  %3388 = vrot.lane.b32.xlu0 %v2214, 64
  %v3389 = vpop.permute.xlu0 %3388
  %3390 = vrot.lane.b32.xlu0 %v2219, 64
  %v3391 = vpop.permute.xlu0 %3390
  %3392 = vrot.lane.b32.xlu0 %v2222, 64
  %v3393 = vpop.permute.xlu0 %3392
  %3394 = vrot.lane.b32.xlu0 %v2227, 64
  %v3395 = vpop.permute.xlu0 %3394
  %3396 = vrot.lane.b32.xlu0 %v2230, 64
  %v3397 = vpop.permute.xlu0 %3396
  %3398 = vrot.lane.b32.xlu0 %v2235, 64
  %v3399 = vpop.permute.xlu0 %3398
  %3400 = vrot.lane.b32.xlu0 %v2238, 64
  %v3401 = vpop.permute.xlu0 %3400
  %3402 = vrot.lane.b32.xlu0 %v2243, 64
  %v3403 = vpop.permute.xlu0 %3402
  %3404 = vrot.lane.b32.xlu0 %v2246, 64
  %v3405 = vpop.permute.xlu0 %3404
  %3406 = vrot.lane.b32.xlu0 %v2251, 64
  %v3407 = vpop.permute.xlu0 %3406
  %3408 = vrot.lane.b32.xlu0 %v2254, 64
  %v3409 = vpop.permute.xlu0 %3408
  %3538 = vrot.lane.b32.xlu0 %v2708, 96
  %v3539 = vpop.permute.xlu0 %3538
  %3540 = vrot.lane.b32.xlu0 %v2711, 96
  %v3541 = vpop.permute.xlu0 %3540
  %3542 = vrot.lane.b32.xlu0 %v2716, 96
  %v3543 = vpop.permute.xlu0 %3542
  %3544 = vrot.lane.b32.xlu0 %v2719, 96
  %v3545 = vpop.permute.xlu0 %3544
  %3546 = vrot.lane.b32.xlu0 %v2724, 96
  %v3547 = vpop.permute.xlu0 %3546
  %3548 = vrot.lane.b32.xlu0 %v2727, 96
  %v3549 = vpop.permute.xlu0 %3548
  %3550 = vrot.lane.b32.xlu0 %v2732, 96
  %v3551 = vpop.permute.xlu0 %3550
  %3552 = vrot.lane.b32.xlu0 %v2735, 96
  %v3553 = vpop.permute.xlu0 %3552
  %3554 = vrot.lane.b32.xlu0 %v2740, 96
  %v3555 = vpop.permute.xlu0 %3554
  %3556 = vrot.lane.b32.xlu0 %v2743, 96
  %v3557 = vpop.permute.xlu0 %3556
  %3558 = vrot.lane.b32.xlu0 %v2748, 96
  %v3559 = vpop.permute.xlu0 %3558
  %3560 = vrot.lane.b32.xlu0 %v2751, 96
  %v3561 = vpop.permute.xlu0 %3560
  %3562 = vrot.lane.b32.xlu0 %v2756, 96
  %v3563 = vpop.permute.xlu0 %3562
  %3564 = vrot.lane.b32.xlu0 %v2759, 96
  %v3565 = vpop.permute.xlu0 %3564
  %3566 = vrot.lane.b32.xlu0 %v2764, 96
  %v3567 = vpop.permute.xlu0 %3566
  %3568 = vrot.lane.b32.xlu0 %v2767, 96
  %v3569 = vpop.permute.xlu0 %3568
  %3570 = vrot.lane.b32.xlu0 %v2772, 96
  %v3571 = vpop.permute.xlu0 %3570
  %3572 = vrot.lane.b32.xlu0 %v2775, 96
  %v3573 = vpop.permute.xlu0 %3572
  %3574 = vrot.lane.b32.xlu0 %v2780, 96
  %v3575 = vpop.permute.xlu0 %3574
  %3576 = vrot.lane.b32.xlu0 %v2783, 96
  %v3577 = vpop.permute.xlu0 %3576
  %3578 = vrot.lane.b32.xlu0 %v2788, 96
  %v3579 = vpop.permute.xlu0 %3578
  %3580 = vrot.lane.b32.xlu0 %v2791, 96
  %v3581 = vpop.permute.xlu0 %3580
  %3582 = vrot.lane.b32.xlu0 %v2796, 96
  %v3583 = vpop.permute.xlu0 %3582
  %3584 = vrot.lane.b32.xlu0 %v2799, 96
  %v3585 = vpop.permute.xlu0 %3584
  %3586 = vrot.lane.b32.xlu0 %v2804, 96
  %v3587 = vpop.permute.xlu0 %3586
  %3588 = vrot.lane.b32.xlu0 %v2807, 96
  %v3589 = vpop.permute.xlu0 %3588
  %3590 = vrot.lane.b32.xlu0 %v2812, 96
  %v3591 = vpop.permute.xlu0 %3590
  %3592 = vrot.lane.b32.xlu0 %v2815, 96
  %v3593 = vpop.permute.xlu0 %3592
  %3594 = vrot.lane.b32.xlu0 %v2820, 96
  %v3595 = vpop.permute.xlu0 %3594
  %3596 = vrot.lane.b32.xlu0 %v2823, 96
  %v3597 = vpop.permute.xlu0 %3596
  %3598 = vrot.lane.b32.xlu0 %v2828, 96
  %v3599 = vpop.permute.xlu0 %3598
  %3600 = vrot.lane.b32.xlu0 %v2831, 96
  %v3601 = vpop.permute.xlu0 %3600
  %3602 = vrot.lane.b32.xlu0 %v2836, 96
  %v3603 = vpop.permute.xlu0 %3602
  %3604 = vrot.lane.b32.xlu0 %v2839, 96
  %v3605 = vpop.permute.xlu0 %3604
  %3606 = vrot.lane.b32.xlu0 %v2844, 96
  %v3607 = vpop.permute.xlu0 %3606
  %3608 = vrot.lane.b32.xlu0 %v2847, 96
  %v3609 = vpop.permute.xlu0 %3608
  %3610 = vrot.lane.b32.xlu0 %v2852, 96
  %v3611 = vpop.permute.xlu0 %3610
  %3612 = vrot.lane.b32.xlu0 %v2855, 96
  %v3613 = vpop.permute.xlu0 %3612
  %3614 = vrot.lane.b32.xlu0 %v2860, 96
  %v3615 = vpop.permute.xlu0 %3614
  %3616 = vrot.lane.b32.xlu0 %v2863, 96
  %v3617 = vpop.permute.xlu0 %3616
  %3618 = vrot.lane.b32.xlu0 %v2868, 96
  %v3619 = vpop.permute.xlu0 %3618
  %3620 = vrot.lane.b32.xlu0 %v2871, 96
  %v3621 = vpop.permute.xlu0 %3620
  %3622 = vrot.lane.b32.xlu0 %v2876, 96
  %v3623 = vpop.permute.xlu0 %3622
  %3624 = vrot.lane.b32.xlu0 %v2879, 96
  %v3625 = vpop.permute.xlu0 %3624
  %3626 = vrot.lane.b32.xlu0 %v2884, 96
  %v3627 = vpop.permute.xlu0 %3626
  %3628 = vrot.lane.b32.xlu0 %v2887, 96
  %v3629 = vpop.permute.xlu0 %3628
  %3630 = vrot.lane.b32.xlu0 %v2892, 96
  %v3631 = vpop.permute.xlu0 %3630
  %3632 = vrot.lane.b32.xlu0 %v2895, 96
  %v3633 = vpop.permute.xlu0 %3632
  %3634 = vrot.lane.b32.xlu0 %v2900, 96
  %v3635 = vpop.permute.xlu0 %3634
  %3636 = vrot.lane.b32.xlu0 %v2903, 96
  %v3637 = vpop.permute.xlu0 %3636
  %3638 = vrot.lane.b32.xlu0 %v2908, 96
  %v3639 = vpop.permute.xlu0 %3638
  %3640 = vrot.lane.b32.xlu0 %v2911, 96
  %v3641 = vpop.permute.xlu0 %3640
  %3642 = vrot.lane.b32.xlu0 %v2916, 96
  %v3643 = vpop.permute.xlu0 %3642
  %3644 = vrot.lane.b32.xlu0 %v2919, 96
  %v3645 = vpop.permute.xlu0 %3644
  %3646 = vrot.lane.b32.xlu0 %v2924, 96
  %v3647 = vpop.permute.xlu0 %3646
  %3648 = vrot.lane.b32.xlu0 %v2927, 96
  %v3649 = vpop.permute.xlu0 %3648
  %3650 = vrot.lane.b32.xlu0 %v2932, 96
  %v3651 = vpop.permute.xlu0 %3650
  %3652 = vrot.lane.b32.xlu0 %v2935, 96
  %v3653 = vpop.permute.xlu0 %3652
  %3654 = vrot.lane.b32.xlu0 %v2940, 96
  %v3655 = vpop.permute.xlu0 %3654
  %3656 = vrot.lane.b32.xlu0 %v2943, 96
  %v3657 = vpop.permute.xlu0 %3656
  %3658 = vrot.lane.b32.xlu0 %v2948, 96
  %v3659 = vpop.permute.xlu0 %3658
  %3660 = vrot.lane.b32.xlu0 %v2951, 96
  %v3661 = vpop.permute.xlu0 %3660
  %3662 = vrot.lane.b32.xlu0 %v2956, 96
  %v3663 = vpop.permute.xlu0 %3662
  %3664 = vrot.lane.b32.xlu0 %v2959, 96
  %v3665 = vpop.permute.xlu0 %3664
  %vm3730 = vcmask 261120
  %v3731 = vsel %vm3730, %v593, %v3027
  %v3732 = vsel %vm3730, %v596, %v3029
  %v3733 = vsel %vm3730, %v601, %v3031
  %v3734 = vsel %vm3730, %v604, %v3033
  %v3735 = vsel %vm3730, %v609, %v3035
  %v3736 = vsel %vm3730, %v612, %v3037
  %v3737 = vsel %vm3730, %v617, %v3039
  %v3738 = vsel %vm3730, %v620, %v3041
  %v3739 = vsel %vm3730, %v625, %v3043
  %v3740 = vsel %vm3730, %v628, %v3045
  %v3741 = vsel %vm3730, %v633, %v3047
  %v3742 = vsel %vm3730, %v636, %v3049
  %v3743 = vsel %vm3730, %v641, %v3051
  %v3744 = vsel %vm3730, %v644, %v3053
  %v3745 = vsel %vm3730, %v649, %v3055
  %v3746 = vsel %vm3730, %v652, %v3057
  %v3747 = vsel %vm3730, %v657, %v3059
  %v3748 = vsel %vm3730, %v660, %v3061
  %v3749 = vsel %vm3730, %v665, %v3063
  %v3750 = vsel %vm3730, %v668, %v3065
  %v3751 = vsel %vm3730, %v673, %v3067
  %v3752 = vsel %vm3730, %v676, %v3069
  %v3753 = vsel %vm3730, %v681, %v3071
  %v3754 = vsel %vm3730, %v684, %v3073
  %v3755 = vsel %vm3730, %v689, %v3075
  %v3756 = vsel %vm3730, %v692, %v3077
  %v3757 = vsel %vm3730, %v697, %v3079
  %v3758 = vsel %vm3730, %v700, %v3081
  %v3759 = vsel %vm3730, %v705, %v3083
  %v3760 = vsel %vm3730, %v708, %v3085
  %v3761 = vsel %vm3730, %v713, %v3087
  %v3762 = vsel %vm3730, %v716, %v3089
  %v3763 = vsel %vm3730, %v721, %v3091
  %v3764 = vsel %vm3730, %v724, %v3093
  %v3765 = vsel %vm3730, %v729, %v3095
  %v3766 = vsel %vm3730, %v732, %v3097
  %v3767 = vsel %vm3730, %v737, %v3099
  %v3768 = vsel %vm3730, %v740, %v3101
  %v3769 = vsel %vm3730, %v745, %v3103
  %v3770 = vsel %vm3730, %v748, %v3105
  %v3771 = vsel %vm3730, %v753, %v3107
  %v3772 = vsel %vm3730, %v756, %v3109
  %v3773 = vsel %vm3730, %v761, %v3111
  %v3774 = vsel %vm3730, %v764, %v3113
  %v3775 = vsel %vm3730, %v769, %v3115
  %v3776 = vsel %vm3730, %v772, %v3117
  %v3777 = vsel %vm3730, %v777, %v3119
  %v3778 = vsel %vm3730, %v780, %v3121
  %v3779 = vsel %vm3730, %v785, %v3123
  %v3780 = vsel %vm3730, %v788, %v3125
  %v3781 = vsel %vm3730, %v793, %v3127
  %v3782 = vsel %vm3730, %v796, %v3129
  %v3783 = vsel %vm3730, %v801, %v3131
  %v3784 = vsel %vm3730, %v804, %v3133
  %v3785 = vsel %vm3730, %v809, %v3135
  %v3786 = vsel %vm3730, %v812, %v3137
  %v3787 = vsel %vm3730, %v817, %v3139
  %v3788 = vsel %vm3730, %v820, %v3141
  %v3789 = vsel %vm3730, %v825, %v3143
  %v3790 = vsel %vm3730, %v828, %v3145
  %v3791 = vsel %vm3730, %v833, %v3147
  %v3792 = vsel %vm3730, %v836, %v3149
  %v3793 = vsel %vm3730, %v841, %v3151
  %v3794 = vsel %vm3730, %v844, %v3153
  %vm3795 = vcmask 523264
  %v3796 = vsel %vm3795, %v3731, %v3283
  %v3797 = vsel %vm3795, %v3732, %v3285
  %v3798 = vsel %vm3795, %v3733, %v3287
  %v3799 = vsel %vm3795, %v3734, %v3289
  %v3800 = vsel %vm3795, %v3735, %v3291
  %v3801 = vsel %vm3795, %v3736, %v3293
  %v3802 = vsel %vm3795, %v3737, %v3295
  %v3803 = vsel %vm3795, %v3738, %v3297
  %v3804 = vsel %vm3795, %v3739, %v3299
  %v3805 = vsel %vm3795, %v3740, %v3301
  %v3806 = vsel %vm3795, %v3741, %v3303
  %v3807 = vsel %vm3795, %v3742, %v3305
  %v3808 = vsel %vm3795, %v3743, %v3307
  %v3809 = vsel %vm3795, %v3744, %v3309
  %v3810 = vsel %vm3795, %v3745, %v3311
  %v3811 = vsel %vm3795, %v3746, %v3313
  %v3812 = vsel %vm3795, %v3747, %v3315
  %v3813 = vsel %vm3795, %v3748, %v3317
  %v3814 = vsel %vm3795, %v3749, %v3319
  %v3815 = vsel %vm3795, %v3750, %v3321
  %v3816 = vsel %vm3795, %v3751, %v3323
  %v3817 = vsel %vm3795, %v3752, %v3325
  %v3818 = vsel %vm3795, %v3753, %v3327
  %v3819 = vsel %vm3795, %v3754, %v3329
  %v3820 = vsel %vm3795, %v3755, %v3331
  %v3821 = vsel %vm3795, %v3756, %v3333
  %v3822 = vsel %vm3795, %v3757, %v3335
  %v3823 = vsel %vm3795, %v3758, %v3337
  %v3824 = vsel %vm3795, %v3759, %v3339
  %v3825 = vsel %vm3795, %v3760, %v3341
  %v3826 = vsel %vm3795, %v3761, %v3343
  %v3827 = vsel %vm3795, %v3762, %v3345
  %v3828 = vsel %vm3795, %v3763, %v3347
  %v3829 = vsel %vm3795, %v3764, %v3349
  %v3830 = vsel %vm3795, %v3765, %v3351
  %v3831 = vsel %vm3795, %v3766, %v3353
  %v3832 = vsel %vm3795, %v3767, %v3355
  %v3833 = vsel %vm3795, %v3768, %v3357
  %v3834 = vsel %vm3795, %v3769, %v3359
  %v3835 = vsel %vm3795, %v3770, %v3361
  %v3836 = vsel %vm3795, %v3771, %v3363
  %v3837 = vsel %vm3795, %v3772, %v3365
  %v3838 = vsel %vm3795, %v3773, %v3367
  %v3839 = vsel %vm3795, %v3774, %v3369
  %v3840 = vsel %vm3795, %v3775, %v3371
  %v3841 = vsel %vm3795, %v3776, %v3373
  %v3842 = vsel %vm3795, %v3777, %v3375
  %v3843 = vsel %vm3795, %v3778, %v3377
  %v3844 = vsel %vm3795, %v3779, %v3379
  %v3845 = vsel %vm3795, %v3780, %v3381
  %v3846 = vsel %vm3795, %v3781, %v3383
  %v3847 = vsel %vm3795, %v3782, %v3385
  %v3848 = vsel %vm3795, %v3783, %v3387
  %v3849 = vsel %vm3795, %v3784, %v3389
  %v3850 = vsel %vm3795, %v3785, %v3391
  %v3851 = vsel %vm3795, %v3786, %v3393
  %v3852 = vsel %vm3795, %v3787, %v3395
  %v3853 = vsel %vm3795, %v3788, %v3397
  %v3854 = vsel %vm3795, %v3789, %v3399
  %v3855 = vsel %vm3795, %v3790, %v3401
  %v3856 = vsel %vm3795, %v3791, %v3403
  %v3857 = vsel %vm3795, %v3792, %v3405
  %v3858 = vsel %vm3795, %v3793, %v3407
  %v3859 = vsel %vm3795, %v3794, %v3409
  %vm3860 = vcmask 785408
  %v3861 = vsel %vm3860, %v3796, %v3539
  %v3862 = vsel %vm3860, %v3797, %v3541
  %v3863 = vsel %vm3860, %v3798, %v3543
  %v3864 = vsel %vm3860, %v3799, %v3545
  %v3865 = vsel %vm3860, %v3800, %v3547
  %v3866 = vsel %vm3860, %v3801, %v3549
  %v3867 = vsel %vm3860, %v3802, %v3551
  %v3868 = vsel %vm3860, %v3803, %v3553
  %v3869 = vsel %vm3860, %v3804, %v3555
  %v3870 = vsel %vm3860, %v3805, %v3557
  %v3871 = vsel %vm3860, %v3806, %v3559
  %v3872 = vsel %vm3860, %v3807, %v3561
  %v3873 = vsel %vm3860, %v3808, %v3563
  %v3874 = vsel %vm3860, %v3809, %v3565
  %v3875 = vsel %vm3860, %v3810, %v3567
  %v3876 = vsel %vm3860, %v3811, %v3569
  %v3877 = vsel %vm3860, %v3812, %v3571
  %v3878 = vsel %vm3860, %v3813, %v3573
  %v3879 = vsel %vm3860, %v3814, %v3575
  %v3880 = vsel %vm3860, %v3815, %v3577
  %v3881 = vsel %vm3860, %v3816, %v3579
  %v3882 = vsel %vm3860, %v3817, %v3581
  %v3883 = vsel %vm3860, %v3818, %v3583
  %v3884 = vsel %vm3860, %v3819, %v3585
  %v3885 = vsel %vm3860, %v3820, %v3587
  %v3886 = vsel %vm3860, %v3821, %v3589
  %v3887 = vsel %vm3860, %v3822, %v3591
  %v3888 = vsel %vm3860, %v3823, %v3593
  %v3889 = vsel %vm3860, %v3824, %v3595
  %v3890 = vsel %vm3860, %v3825, %v3597
  %v3891 = vsel %vm3860, %v3826, %v3599
  %v3892 = vsel %vm3860, %v3827, %v3601
  %v3893 = vsel %vm3860, %v3828, %v3603
  %v3894 = vsel %vm3860, %v3829, %v3605
  %v3895 = vsel %vm3860, %v3830, %v3607
  %v3896 = vsel %vm3860, %v3831, %v3609
  %v3897 = vsel %vm3860, %v3832, %v3611
  %v3898 = vsel %vm3860, %v3833, %v3613
  %v3899 = vsel %vm3860, %v3834, %v3615
  %v3900 = vsel %vm3860, %v3835, %v3617
  %v3901 = vsel %vm3860, %v3836, %v3619
  %v3902 = vsel %vm3860, %v3837, %v3621
  %v3903 = vsel %vm3860, %v3838, %v3623
  %v3904 = vsel %vm3860, %v3839, %v3625
  %v3905 = vsel %vm3860, %v3840, %v3627
  %v3906 = vsel %vm3860, %v3841, %v3629
  %v3907 = vsel %vm3860, %v3842, %v3631
  %v3908 = vsel %vm3860, %v3843, %v3633
  %v3909 = vsel %vm3860, %v3844, %v3635
  %v3910 = vsel %vm3860, %v3845, %v3637
  %v3911 = vsel %vm3860, %v3846, %v3639
  %v3912 = vsel %vm3860, %v3847, %v3641
  %v3913 = vsel %vm3860, %v3848, %v3643
  %v3914 = vsel %vm3860, %v3849, %v3645
  %v3915 = vsel %vm3860, %v3850, %v3647
  %v3916 = vsel %vm3860, %v3851, %v3649
  %v3917 = vsel %vm3860, %v3852, %v3651
  %v3918 = vsel %vm3860, %v3853, %v3653
  %v3919 = vsel %vm3860, %v3854, %v3655
  %v3920 = vsel %vm3860, %v3855, %v3657
  %v3921 = vsel %vm3860, %v3856, %v3659
  %v3922 = vsel %vm3860, %v3857, %v3661
  %v3923 = vsel %vm3860, %v3858, %v3663
  %v3924 = vsel %vm3860, %v3859, %v3665
  %v3925 = vpack.c.bf16 %v3862, %v3861
  %v3926 = vpack.c.bf16 %v3864, %v3863
  %v3927 = vpack.c.bf16 %v3866, %v3865
  %v3928 = vpack.c.bf16 %v3868, %v3867
  %v3929 = vpack.c.bf16 %v3870, %v3869
  %v3930 = vpack.c.bf16 %v3872, %v3871
  %v3931 = vpack.c.bf16 %v3874, %v3873
  %v3932 = vpack.c.bf16 %v3876, %v3875
  %v3933 = vpack.c.bf16 %v3878, %v3877
  %v3934 = vpack.c.bf16 %v3880, %v3879
  %v3935 = vpack.c.bf16 %v3882, %v3881
  %v3936 = vpack.c.bf16 %v3884, %v3883
  %v3937 = vpack.c.bf16 %v3886, %v3885
  %v3938 = vpack.c.bf16 %v3888, %v3887
  %v3939 = vpack.c.bf16 %v3890, %v3889
  %v3940 = vpack.c.bf16 %v3892, %v3891
  %v3941 = vpack.c.bf16 %v3894, %v3893
  %v3942 = vpack.c.bf16 %v3896, %v3895
  %v3943 = vpack.c.bf16 %v3898, %v3897
  %v3944 = vpack.c.bf16 %v3900, %v3899
  %v3945 = vpack.c.bf16 %v3902, %v3901
  %v3946 = vpack.c.bf16 %v3904, %v3903
  %v3947 = vpack.c.bf16 %v3906, %v3905
  %v3948 = vpack.c.bf16 %v3908, %v3907
  %v3949 = vpack.c.bf16 %v3910, %v3909
  %v3950 = vpack.c.bf16 %v3912, %v3911
  %v3951 = vpack.c.bf16 %v3914, %v3913
  %v3952 = vpack.c.bf16 %v3916, %v3915
  %v3953 = vpack.c.bf16 %v3918, %v3917
  %v3954 = vpack.c.bf16 %v3920, %v3919
  %v3955 = vpack.c.bf16 %v3922, %v3921
  %v3956 = vpack.c.bf16 %v3924, %v3923
  %v3989 = vunpack.c.l.b16 %v3925
  %v3990 = vunpack.c.h.b16 %v3925
  %v3991 = vunpack.c.l.b16 %v3926
  %v3992 = vunpack.c.h.b16 %v3926
  %v3993 = vunpack.c.l.b16 %v3927
  %v3994 = vunpack.c.h.b16 %v3927
  %v3995 = vunpack.c.l.b16 %v3928
  %v3996 = vunpack.c.h.b16 %v3928
  %v3997 = vunpack.c.l.b16 %v3929
  %v3998 = vunpack.c.h.b16 %v3929
  %v3999 = vunpack.c.l.b16 %v3930
  %v4000 = vunpack.c.h.b16 %v3930
  %v4001 = vunpack.c.l.b16 %v3931
  %v4002 = vunpack.c.h.b16 %v3931
  %v4003 = vunpack.c.l.b16 %v3932
  %v4004 = vunpack.c.h.b16 %v3932
  %v4005 = vunpack.c.l.b16 %v3933
  %v4006 = vunpack.c.h.b16 %v3933
  %v4007 = vunpack.c.l.b16 %v3934
  %v4008 = vunpack.c.h.b16 %v3934
  %v4009 = vunpack.c.l.b16 %v3935
  %v4010 = vunpack.c.h.b16 %v3935
  %v4011 = vunpack.c.l.b16 %v3936
  %v4012 = vunpack.c.h.b16 %v3936
  %v4013 = vunpack.c.l.b16 %v3937
  %v4014 = vunpack.c.h.b16 %v3937
  %v4015 = vunpack.c.l.b16 %v3938
  %v4016 = vunpack.c.h.b16 %v3938
  %v4017 = vunpack.c.l.b16 %v3939
  %v4018 = vunpack.c.h.b16 %v3939
  %v4019 = vunpack.c.l.b16 %v3940
  %v4020 = vunpack.c.h.b16 %v3940
  %v4021 = vunpack.c.l.b16 %v3941
  %v4022 = vunpack.c.h.b16 %v3941
  %v4023 = vunpack.c.l.b16 %v3942
  %v4024 = vunpack.c.h.b16 %v3942
  %v4025 = vunpack.c.l.b16 %v3943
  %v4026 = vunpack.c.h.b16 %v3943
  %v4027 = vunpack.c.l.b16 %v3944
  %v4028 = vunpack.c.h.b16 %v3944
  %v4029 = vunpack.c.l.b16 %v3945
  %v4030 = vunpack.c.h.b16 %v3945
  %v4031 = vunpack.c.l.b16 %v3946
  %v4032 = vunpack.c.h.b16 %v3946
  %v4033 = vunpack.c.l.b16 %v3947
  %v4034 = vunpack.c.h.b16 %v3947
  %v4035 = vunpack.c.l.b16 %v3948
  %v4036 = vunpack.c.h.b16 %v3948
  %v4037 = vunpack.c.l.b16 %v3949
  %v4038 = vunpack.c.h.b16 %v3949
  %v4039 = vunpack.c.l.b16 %v3950
  %v4040 = vunpack.c.h.b16 %v3950
  %v4041 = vunpack.c.l.b16 %v3951
  %v4042 = vunpack.c.h.b16 %v3951
  %v4043 = vunpack.c.l.b16 %v3952
  %v4044 = vunpack.c.h.b16 %v3952
  %v4045 = vunpack.c.l.b16 %v3953
  %v4046 = vunpack.c.h.b16 %v3953
  %v4047 = vunpack.c.l.b16 %v3954
  %v4048 = vunpack.c.h.b16 %v3954
  %v4049 = vunpack.c.l.b16 %v3955
  %v4050 = vunpack.c.h.b16 %v3955
  %v4051 = vunpack.c.l.b16 %v3956
  %v4052 = vunpack.c.h.b16 %v3956
  %v4053 = vpack.c.b16 %v3989, %v3989
  %v4054 = vpack.c.b16 %v3990, %v3990
  %v4055 = vpack.c.b16 %v3991, %v3991
  %v4056 = vpack.c.b16 %v3992, %v3992
  %v4057 = vpack.c.b16 %v3993, %v3993
  %v4058 = vpack.c.b16 %v3994, %v3994
  %v4059 = vpack.c.b16 %v3995, %v3995
  %v4060 = vpack.c.b16 %v3996, %v3996
  %v4061 = vpack.c.b16 %v3997, %v3997
  %v4062 = vpack.c.b16 %v3998, %v3998
  %v4063 = vpack.c.b16 %v3999, %v3999
  %v4064 = vpack.c.b16 %v4000, %v4000
  %v4065 = vpack.c.b16 %v4001, %v4001
  %v4066 = vpack.c.b16 %v4002, %v4002
  %v4067 = vpack.c.b16 %v4003, %v4003
  %v4068 = vpack.c.b16 %v4004, %v4004
  %v4069 = vpack.c.b16 %v4005, %v4005
  %v4070 = vpack.c.b16 %v4006, %v4006
  %v4071 = vpack.c.b16 %v4007, %v4007
  %v4072 = vpack.c.b16 %v4008, %v4008
  %v4073 = vpack.c.b16 %v4009, %v4009
  %v4074 = vpack.c.b16 %v4010, %v4010
  %v4075 = vpack.c.b16 %v4011, %v4011
  %v4076 = vpack.c.b16 %v4012, %v4012
  %v4077 = vpack.c.b16 %v4013, %v4013
  %v4078 = vpack.c.b16 %v4014, %v4014
  %v4079 = vpack.c.b16 %v4015, %v4015
  %v4080 = vpack.c.b16 %v4016, %v4016
  %v4081 = vpack.c.b16 %v4017, %v4017
  %v4082 = vpack.c.b16 %v4018, %v4018
  %v4083 = vpack.c.b16 %v4019, %v4019
  %v4084 = vpack.c.b16 %v4020, %v4020
  %v4085 = vpack.c.b16 %v4021, %v4021
  %v4086 = vpack.c.b16 %v4022, %v4022
  %v4087 = vpack.c.b16 %v4023, %v4023
  %v4088 = vpack.c.b16 %v4024, %v4024
  %v4089 = vpack.c.b16 %v4025, %v4025
  %v4090 = vpack.c.b16 %v4026, %v4026
  %v4091 = vpack.c.b16 %v4027, %v4027
  %v4092 = vpack.c.b16 %v4028, %v4028
  %v4093 = vpack.c.b16 %v4029, %v4029
  %v4094 = vpack.c.b16 %v4030, %v4030
  %v4095 = vpack.c.b16 %v4031, %v4031
  %v4096 = vpack.c.b16 %v4032, %v4032
  %v4097 = vpack.c.b16 %v4033, %v4033
  %v4098 = vpack.c.b16 %v4034, %v4034
  %v4099 = vpack.c.b16 %v4035, %v4035
  %v4100 = vpack.c.b16 %v4036, %v4036
  %v4101 = vpack.c.b16 %v4037, %v4037
  %v4102 = vpack.c.b16 %v4038, %v4038
  %v4103 = vpack.c.b16 %v4039, %v4039
  %v4104 = vpack.c.b16 %v4040, %v4040
  %v4105 = vpack.c.b16 %v4041, %v4041
  %v4106 = vpack.c.b16 %v4042, %v4042
  %v4107 = vpack.c.b16 %v4043, %v4043
  %v4108 = vpack.c.b16 %v4044, %v4044
  %v4109 = vpack.c.b16 %v4045, %v4045
  %v4110 = vpack.c.b16 %v4046, %v4046
  %v4111 = vpack.c.b16 %v4047, %v4047
  %v4112 = vpack.c.b16 %v4048, %v4048
  %v4113 = vpack.c.b16 %v4049, %v4049
  %v4114 = vpack.c.b16 %v4050, %v4050
  %v4115 = vpack.c.b16 %v4051, %v4051
  %v4116 = vpack.c.b16 %v4052, %v4052
  %4181 = vst [vmem:[%s2] sm:$0xf] %v4053
  %4182 = vst [vmem:[%s2 + $0x4] sm:$0xf] %v4054
  %4183 = vst [vmem:[%s2 + $0x8] sm:$0xf] %v4055
  %4184 = vst [vmem:[%s2 + $0xc] sm:$0xf] %v4056
  %4185 = vst [vmem:[%s2 + $0x10] sm:$0xf] %v4057
  %4186 = vst [vmem:[%s2 + $0x14] sm:$0xf] %v4058
  %4187 = vst [vmem:[%s2 + $0x18] sm:$0xf] %v4059
  %4188 = vst [vmem:[%s2 + $0x1c] sm:$0xf] %v4060
  %4189 = vst [vmem:[%s2 + $0x20] sm:$0xf] %v4061
  %4190 = vst [vmem:[%s2 + $0x24] sm:$0xf] %v4062
  %4191 = vst [vmem:[%s2 + $0x28] sm:$0xf] %v4063
  %4192 = vst [vmem:[%s2 + $0x2c] sm:$0xf] %v4064
  %4193 = vst [vmem:[%s2 + $0x30] sm:$0xf] %v4065
  %4194 = vst [vmem:[%s2 + $0x34] sm:$0xf] %v4066
  %4195 = vst [vmem:[%s2 + $0x38] sm:$0xf] %v4067
  %4196 = vst [vmem:[%s2 + $0x3c] sm:$0xf] %v4068
  %4197 = vst [vmem:[%s2 + $0x40] sm:$0xf] %v4069
  %4198 = vst [vmem:[%s2 + $0x44] sm:$0xf] %v4070
  %4199 = vst [vmem:[%s2 + $0x48] sm:$0xf] %v4071
  %4200 = vst [vmem:[%s2 + $0x4c] sm:$0xf] %v4072
  %4201 = vst [vmem:[%s2 + $0x50] sm:$0xf] %v4073
  %4202 = vst [vmem:[%s2 + $0x54] sm:$0xf] %v4074
  %4203 = vst [vmem:[%s2 + $0x58] sm:$0xf] %v4075
  %4204 = vst [vmem:[%s2 + $0x5c] sm:$0xf] %v4076
  %4205 = vst [vmem:[%s2 + $0x60] sm:$0xf] %v4077
  %4206 = vst [vmem:[%s2 + $0x64] sm:$0xf] %v4078
  %4207 = vst [vmem:[%s2 + $0x68] sm:$0xf] %v4079
  %4208 = vst [vmem:[%s2 + $0x6c] sm:$0xf] %v4080
  %4209 = vst [vmem:[%s2 + $0x70] sm:$0xf] %v4081
  %4210 = vst [vmem:[%s2 + $0x74] sm:$0xf] %v4082
  %4211 = vst [vmem:[%s2 + $0x78] sm:$0xf] %v4083
  %4212 = vst [vmem:[%s2 + $0x7c] sm:$0xf] %v4084
  %4213 = vst [vmem:[%s2 + $0x80] sm:$0xf] %v4085
  %4214 = vst [vmem:[%s2 + $0x84] sm:$0xf] %v4086
  %4215 = vst [vmem:[%s2 + $0x88] sm:$0xf] %v4087
  %4216 = vst [vmem:[%s2 + $0x8c] sm:$0xf] %v4088
  %4217 = vst [vmem:[%s2 + $0x90] sm:$0xf] %v4089
  %4218 = vst [vmem:[%s2 + $0x94] sm:$0xf] %v4090
  %4219 = vst [vmem:[%s2 + $0x98] sm:$0xf] %v4091
  %4220 = vst [vmem:[%s2 + $0x9c] sm:$0xf] %v4092
  %4221 = vst [vmem:[%s2 + $0xa0] sm:$0xf] %v4093
  %4222 = vst [vmem:[%s2 + $0xa4] sm:$0xf] %v4094
  %4223 = vst [vmem:[%s2 + $0xa8] sm:$0xf] %v4095
  %4224 = vst [vmem:[%s2 + $0xac] sm:$0xf] %v4096
  %4225 = vst [vmem:[%s2 + $0xb0] sm:$0xf] %v4097
  %4226 = vst [vmem:[%s2 + $0xb4] sm:$0xf] %v4098
  %4227 = vst [vmem:[%s2 + $0xb8] sm:$0xf] %v4099
  %4228 = vst [vmem:[%s2 + $0xbc] sm:$0xf] %v4100
  %4229 = vst [vmem:[%s2 + $0xc0] sm:$0xf] %v4101
  %4230 = vst [vmem:[%s2 + $0xc4] sm:$0xf] %v4102
  %4231 = vst [vmem:[%s2 + $0xc8] sm:$0xf] %v4103
  %4232 = vst [vmem:[%s2 + $0xcc] sm:$0xf] %v4104
  %4233 = vst [vmem:[%s2 + $0xd0] sm:$0xf] %v4105
  %4234 = vst [vmem:[%s2 + $0xd4] sm:$0xf] %v4106
  %4235 = vst [vmem:[%s2 + $0xd8] sm:$0xf] %v4107
  %4236 = vst [vmem:[%s2 + $0xdc] sm:$0xf] %v4108
  %4237 = vst [vmem:[%s2 + $0xe0] sm:$0xf] %v4109
  %4238 = vst [vmem:[%s2 + $0xe4] sm:$0xf] %v4110
  %4239 = vst [vmem:[%s2 + $0xe8] sm:$0xf] %v4111
  %4240 = vst [vmem:[%s2 + $0xec] sm:$0xf] %v4112
  %4241 = vst [vmem:[%s2 + $0xf0] sm:$0xf] %v4113
  %4242 = vst [vmem:[%s2 + $0xf4] sm:$0xf] %v4114
  %4243 = vst [vmem:[%s2 + $0xf8] sm:$0xf] %v4115
  %4244 = vst [vmem:[%s2 + $0xfc] sm:$0xf] %v4116
  // Predicated region
  $region10: #{hstu_preprocess.1} parent=0 // pred_check
    _
  $region11: #{hstu_preprocess.1} parent=0 // pred_check_branch
    %4246 = sbr.rel (0) target = $region13
  $region12: #{hstu_preprocess.1} parent=0 // pred_region
    _
  $region13: #{hstu_preprocess.1} parent=0 // pred_fallthru
    _
  // Predicated region
  $region14: #{hstu_preprocess.1} parent=0 // pred_check
    _
  $region15: #{hstu_preprocess.1} parent=0 // pred_check_branch
    %4248 = sbr.rel (0) target = $region17
  $region16: #{hstu_preprocess.1} parent=0 // pred_region
    _
  $region17: #{hstu_preprocess.1} parent=0 // pred_fallthru
    _

</llo_original>
